<compile_context>
chip_gen: v7x
topology: tpu7x:2x2x1
jax: 0.10.0
libtpu: 0.0.40
codegen_flags: <defaults>
</compile_context>

<pallas_src>
import numpy as np
import jax
import jax.numpy as jnp
from jax.experimental import pallas as pl
from jax.experimental.pallas import tpu as pltpu

SEQ_LEN = 10          # sequence_len in the PyTorch script
MODEL_DIM = 10
NHEAD = 10
HEAD_DIM = MODEL_DIM // NHEAD        # == 1  ->  softmax scale == 1.0
NUM_LAYERS = 6
FFN_DIM = 2048
EPS = 1e-5
BLK = ((SEQ_LEN + 7) // 8) * 8       # seq rows padded to a sublane multiple (16)


def _layer_norm(z, g, b):
    mu = jnp.mean(z, axis=-1, keepdims=True)
    var = jnp.mean((z - mu) ** 2, axis=-1, keepdims=True)
    return (z - mu) * jax.lax.rsqrt(var + EPS) * g + b


def transformer_kernel(x_ref, w_in_ref, b_in_ref,
                       wattn_ref, vecs_ref,
                       w1_ref, b1_ref, w2_ref,
                       wout_ref, sel_ref, bout_ref,
                       out_ref,
                       h_scr):
    l = pl.program_id(0)
    A = sel_ref.shape[0]               # number of samples (the attention axis)

    # ---- fc_in (first grid step only): (N,1) * (1,E) + (1,E) -> (N,E) ----
    @pl.when(l == 0)
    def _init():
        h_scr[...] = x_ref[...] * w_in_ref[...] + b_in_ref[...]

    h = h_scr[...]                     # (N, E) f32, N = A*BLK

    # Packed per-layer (1, E) vectors: [bq, bk, bv, bo, b2, g1, be1, g2, be2].
    bq = vecs_ref[0, 0]
    bk = vecs_ref[0, 1]
    bv = vecs_ref[0, 2]
    bo = vecs_ref[0, 3]
    b2 = vecs_ref[0, 4]
    g1 = vecs_ref[0, 5]
    be1 = vecs_ref[0, 6]
    g2 = vecs_ref[0, 7]
    be2 = vecs_ref[0, 8]

    # ---- q/k/v projections: one (N,E)x(E,E) matmul each on the 2D slab ----
    q2 = jnp.dot(h, wattn_ref[0, 0], preferred_element_type=jnp.float32) + bq
    k2 = jnp.dot(h, wattn_ref[0, 1], preferred_element_type=jnp.float32) + bk
    v2 = jnp.dot(h, wattn_ref[0, 2], preferred_element_type=jnp.float32) + bv

    # ---- multi-head attention with nhead == model_dim => head_dim == 1:
    #      score(i,j | seq row b, head h) = q[i,b,h] * k[j,b,h]; softmax over
    #      j (the A source blocks).  scale = 1/sqrt(1) = 1 (folded away).
    #      Broadcast each source block over all target blocks via sublane
    #      concatenation and keep everything as (N, E) slab elementwise ops. ----
    s = []
    vb = []
    for j in range(A):
        kj = k2[j * BLK:(j + 1) * BLK, :]
        vj = v2[j * BLK:(j + 1) * BLK, :]
        k_t = jnp.concatenate([kj] * A, axis=0)          # (N, E)
        vb.append(jnp.concatenate([vj] * A, axis=0))     # (N, E)
        s.append(q2 * k_t)                               # (N, E)

    m = s[0]
    for j in range(1, A):
        m = jnp.maximum(m, s[j])
    den = jnp.zeros_like(q2)
    num = jnp.zeros_like(q2)
    for j in range(A):
        e = jnp.exp(s[j] - m)
        den = den + e
        num = num + e * vb[j]
    attn2 = num * pl.reciprocal(den, approx=True)        # (N, E)

    # ---- attention output projection + residual + post-LayerNorm ----
    proj = jnp.dot(attn2, wattn_ref[0, 3], preferred_element_type=jnp.float32) + bo
    y = _layer_norm(h + proj, g1, be1)

    # ---- feed-forward 10 -> 2048 -> 10 (bf16 weights, f32 accumulation) ----
    z = jnp.dot(y.astype(jnp.bfloat16), w1_ref[0],
                preferred_element_type=jnp.float32) + b1_ref[0]
    z = jnp.maximum(z, 0.0)
    f = jnp.dot(z.astype(jnp.bfloat16), w2_ref[0],
                preferred_element_type=jnp.float32) + b2
    new_h = _layer_norm(y + f, g2, be2)
    h_scr[...] = new_h

    # ---- fc_out (last grid step only): batched elementwise product with the
    #      tiled/padded weights, per-sample reduction via a selection matmul,
    #      single (A, 1) store. ----
    @pl.when(l == pl.num_programs(0) - 1)
    def _final():
        prod = new_h * wout_ref[...]                                    # (N, E)
        g = jnp.dot(sel_ref[...], prod, preferred_element_type=jnp.float32)  # (A, E)
        out_ref[...] = jnp.sum(g, axis=1, keepdims=True) + bout_ref[...]


def _const_spec(arr):
    zeros = (0,) * arr.ndim
    return pl.BlockSpec(arr.shape, lambda l, z=zeros: z)


def _layer_spec(arr):
    tail = (0,) * (arr.ndim - 1)
    return pl.BlockSpec((1,) + arr.shape[1:], lambda l, t=tail: (l,) + t)


@jax.jit
def transformer_forward(x, params):
    A = x.shape[0]
    N = A * BLK
    E = MODEL_DIM

    # Layout plumbing (outside the kernel): pad the seq axis to BLK rows and
    # flatten to an (N, 1) slab; pad+tile the fc_out weights to match the slab
    # (padding rows get weight 0, so they never contribute); build the
    # per-sample block-selection matrix used by the final reduction.
    x_pad = jnp.pad(x, ((0, 0), (0, BLK - SEQ_LEN), (0, 0))).reshape(N, 1)
    wout_pad = jnp.pad(params['wout'], ((0, BLK - SEQ_LEN), (0, 0)))    # (BLK, E)
    wout_t = jnp.tile(wout_pad, (A, 1))                                 # (N, E)
    sel = (jnp.arange(A)[:, None] == (jnp.arange(N)[None, :] // BLK)
           ).astype(jnp.float32)                                        # (A, N)

    args = (x_pad, params['w_in'], params['b_in'],
            params['w_attn'], params['vecs'],
            params['w1'], params['b1'], params['w2'],
            wout_t, sel, params['bout'])

    in_specs = [
        _const_spec(x_pad), _const_spec(params['w_in']), _const_spec(params['b_in']),
        _layer_spec(params['w_attn']), _layer_spec(params['vecs']),
        _layer_spec(params['w1']), _layer_spec(params['b1']), _layer_spec(params['w2']),
        _const_spec(wout_t), _const_spec(sel), _const_spec(params['bout']),
    ]

    grid_spec = pltpu.PrefetchScalarGridSpec(
        num_scalar_prefetch=0,
        grid=(NUM_LAYERS,),
        in_specs=in_specs,
        out_specs=pl.BlockSpec((A, 1), lambda l: (0, 0)),
        scratch_shapes=[
            pltpu.VMEM((N, E), jnp.float32),           # activation carry
        ],
    )

    return pl.pallas_call(
        transformer_kernel,
        out_shape=jax.ShapeDtypeStruct((A, 1), jnp.float32),
        grid_spec=grid_spec,
        compiler_params=pltpu.CompilerParams(dimension_semantics=("arbitrary",)),
    )(*args)


def reference_forward(x, p):
    """Pure-JAX reference with the same (pre-transposed, packed) parameters."""
    A = x.shape[0]
    h = x * p['w_in'] + p['b_in']                          # (A, S, E)
    for l in range(NUM_LAYERS):
        wq, wk, wv, wo = (p['w_attn'][l, i] for i in range(4))
        bq, bk, bv, bo, b2, g1, be1, g2, be2 = (p['vecs'][l, i] for i in range(9))
        q = h @ wq + bq
        k = h @ wk + bk
        v = h @ wv + bv
        s = jnp.einsum('ibh,jbh->ijbh', q, k) / np.sqrt(HEAD_DIM)
        pa = jax.nn.softmax(s, axis=1)
        attn = jnp.einsum('ijbh,jbh->ibh', pa, v)
        attn = attn @ wo + bo
        h = _layer_norm(h + attn, g1, be1)
        w1 = p['w1'][l].astype(jnp.float32)
        w2 = p['w2'][l].astype(jnp.float32)
        f = jnp.maximum(h @ w1 + p['b1'][l], 0.0) @ w2 + b2
        h = _layer_norm(h + f, g2, be2)
    flat = h.reshape(A, SEQ_LEN * MODEL_DIM)
    return flat @ p['wout'].reshape(SEQ_LEN * MODEL_DIM, 1) + p['bout']


def init_params(key):
    """Deterministic synthetic parameters (shapes match the PyTorch module,
    stored pre-transposed so the kernel can do `x @ W`; attention matrices and
    the per-layer (1,E) vectors are packed).  FFN weights are bf16."""
    def take():
        nonlocal key
        key, sub = jax.random.split(key)
        return sub

    def uni(shape, fan_in):
        bound = 1.0 / float(np.sqrt(fan_in))
        return jax.random.uniform(take(), shape, jnp.float32, -bound, bound)

    L, E, F, S = NUM_LAYERS, MODEL_DIM, FFN_DIM, SEQ_LEN
    # Packed attention weights: [wq, wk, wv, wo], each (E, E) pre-transposed.
    w_attn = uni((L, 4, E, E), E)
    # Packed (1, E) vectors: [bq, bk, bv, bo, b2, g1, be1, g2, be2].
    vecs = jnp.stack([
        uni((L, 1, E), E),                  # bq
        uni((L, 1, E), E),                  # bk
        uni((L, 1, E), E),                  # bv
        uni((L, 1, E), E),                  # bo
        uni((L, 1, E), F),                  # b2
        jnp.ones((L, 1, E), jnp.float32),   # g1
        jnp.zeros((L, 1, E), jnp.float32),  # be1
        jnp.ones((L, 1, E), jnp.float32),   # g2
        jnp.zeros((L, 1, E), jnp.float32),  # be2
    ], axis=1)                              # (L, 9, 1, E)
    return {
        'w_in': uni((1, E), 1),          # fc_in.weight^T    (PyTorch: (10, 1))
        'b_in': uni((1, E), 1),          # fc_in.bias
        'w_attn': w_attn,
        'vecs': vecs,
        'w1': uni((L, E, F), E).astype(jnp.bfloat16),
        'b1': uni((L, 1, F), E),
        'w2': uni((L, F, E), F).astype(jnp.bfloat16),
        'wout': uni((S, E), S * E),      # fc_out.weight (1, 100) reshaped to (seq, model_dim)
        'bout': uni((1, 1), S * E),      # fc_out.bias
    }


if __name__ == "__main__":
    key = jax.random.PRNGKey(0)
    pkey, xkey = jax.random.split(key)
    params = init_params(pkey)

    batch = 4
    x = jax.random.normal(xkey, (batch, SEQ_LEN, 1), jnp.float32)

    out = transformer_forward(x, params)
    out = jax.block_until_ready(out)

    ref = reference_forward(x, params)
    assert out.shape == (batch, 1), out.shape
    assert bool(jnp.all(jnp.isfinite(out)))
    np.testing.assert_allclose(np.asarray(out), np.asarray(ref), rtol=5e-2, atol=5e-2)
    print("KERNEL_OK")
</pallas_src>

<mosaic_0001>
module attributes {stable_mosaic.version = 11 : i64} {
  func.func @transformer_kernel(%arg0: i32, %arg1: memref<64x1xf32, #tpu.memory_space<vmem>>, %arg2: memref<1x10xf32, #tpu.memory_space<vmem>>, %arg3: memref<1x10xf32, #tpu.memory_space<vmem>>, %arg4: memref<1x4x10x10xf32, #tpu.memory_space<vmem>>, %arg5: memref<1x9x1x10xf32, #tpu.memory_space<vmem>>, %arg6: memref<1x10x2048xbf16, #tpu.memory_space<vmem>>, %arg7: memref<1x1x2048xf32, #tpu.memory_space<vmem>>, %arg8: memref<1x2048x10xbf16, #tpu.memory_space<vmem>>, %arg9: memref<64x10xf32, #tpu.memory_space<vmem>>, %arg10: memref<4x64xf32, #tpu.memory_space<vmem>>, %arg11: memref<1x1xf32, #tpu.memory_space<vmem>>, %arg12: memref<4x1xf32, #tpu.memory_space<vmem>>, %arg13: memref<64x10xf32, #tpu.memory_space<vmem>>) attributes {dimension_semantics = [#tpu.dimension_semantics<arbitrary>], iteration_bounds = array<i64: 6>, scalar_prefetch = 0 : i64, scratch_operands = 1 : i64, tpu.core_type = #tpu.core_type<tc>, window_params = [{pipeline_mode = #tpu.pipeline_mode<synchronous>, transform_indices = @transform_0, window_bounds = array<i64: 64, 1>}, {pipeline_mode = #tpu.pipeline_mode<synchronous>, transform_indices = @transform_1, window_bounds = array<i64: 1, 10>}, {pipeline_mode = #tpu.pipeline_mode<synchronous>, transform_indices = @transform_2, window_bounds = array<i64: 1, 10>}, {transform_indices = @transform_3, window_bounds = array<i64: 1, 4, 10, 10>}, {transform_indices = @transform_4, window_bounds = array<i64: 1, 9, 1, 10>}, {transform_indices = @transform_5, window_bounds = array<i64: 1, 10, 2048>}, {transform_indices = @transform_6, window_bounds = array<i64: 1, 1, 2048>}, {transform_indices = @transform_7, window_bounds = array<i64: 1, 2048, 10>}, {pipeline_mode = #tpu.pipeline_mode<synchronous>, transform_indices = @transform_8, window_bounds = array<i64: 64, 10>}, {pipeline_mode = #tpu.pipeline_mode<synchronous>, transform_indices = @transform_9, window_bounds = array<i64: 4, 64>}, {pipeline_mode = #tpu.pipeline_mode<synchronous>, transform_indices = @transform_10, window_bounds = array<i64: 1, 1>}, {pipeline_mode = #tpu.pipeline_mode<synchronous>, transform_indices = @transform_11, window_bounds = array<i64: 4, 1>}]} {
    %c0_i32 = arith.constant 0 : i32
    %0 = arith.cmpi eq, %arg0, %c0_i32 : i32
    %1 = arith.extui %0 : i1 to i32
    %c0_i32_0 = arith.constant 0 : i32
    %2 = arith.cmpi ne, %1, %c0_i32_0 : i32
    scf.if %2 {
      %c0_76 = arith.constant 0 : index
      %c0_77 = arith.constant 0 : index
      %155 = vector.load %arg1[%c0_76, %c0_77] : memref<64x1xf32, #tpu.memory_space<vmem>>, vector<64x1xf32>
      %c0_78 = arith.constant 0 : index
      %c0_79 = arith.constant 0 : index
      %156 = vector.load %arg2[%c0_78, %c0_79] : memref<1x10xf32, #tpu.memory_space<vmem>>, vector<1x10xf32>
      %157 = vector.broadcast %155 : vector<64x1xf32> to vector<64x10xf32>
      %158 = vector.broadcast %156 : vector<1x10xf32> to vector<64x10xf32>
      %159 = arith.mulf %157, %158 : vector<64x10xf32>
      %c0_80 = arith.constant 0 : index
      %c0_81 = arith.constant 0 : index
      %160 = vector.load %arg3[%c0_80, %c0_81] : memref<1x10xf32, #tpu.memory_space<vmem>>, vector<1x10xf32>
      %161 = vector.broadcast %160 : vector<1x10xf32> to vector<64x10xf32>
      %162 = arith.addf %159, %161 : vector<64x10xf32>
      %c0_82 = arith.constant 0 : index
      %c0_83 = arith.constant 0 : index
      %163 = vector.load %arg13[%c0_82, %c0_83] : memref<64x10xf32, #tpu.memory_space<vmem>>, vector<64x10xf32>
      tpu.vector_store %arg13[%c0_82, %c0_83], %162 {strides = array<i32>} : memref<64x10xf32, #tpu.memory_space<vmem>>, vector<64x10xf32>,
    } else {
    }
    %c0 = arith.constant 0 : index
    %c0_1 = arith.constant 0 : index
    %3 = vector.load %arg13[%c0, %c0_1] : memref<64x10xf32, #tpu.memory_space<vmem>>, vector<64x10xf32>
    %c0_2 = arith.constant 0 : index
    %c0_3 = arith.constant 0 : index
    %c0_4 = arith.constant 0 : index
    %c0_5 = arith.constant 0 : index
    %4 = vector.load %arg5[%c0_2, %c0_3, %c0_4, %c0_5] : memref<1x9x1x10xf32, #tpu.memory_space<vmem>>, vector<1x1x1x10xf32>
    %5 = vector.shape_cast %4 : vector<1x1x1x10xf32> to vector<1x10xf32>
    %c0_6 = arith.constant 0 : index
    %c1 = arith.constant 1 : index
    %c0_7 = arith.constant 0 : index
    %c0_8 = arith.constant 0 : index
    %6 = vector.load %arg5[%c0_6, %c1, %c0_7, %c0_8] : memref<1x9x1x10xf32, #tpu.memory_space<vmem>>, vector<1x1x1x10xf32>
    %7 = vector.shape_cast %6 : vector<1x1x1x10xf32> to vector<1x10xf32>
    %c0_9 = arith.constant 0 : index
    %c2 = arith.constant 2 : index
    %c0_10 = arith.constant 0 : index
    %c0_11 = arith.constant 0 : index
    %8 = vector.load %arg5[%c0_9, %c2, %c0_10, %c0_11] : memref<1x9x1x10xf32, #tpu.memory_space<vmem>>, vector<1x1x1x10xf32>
    %9 = vector.shape_cast %8 : vector<1x1x1x10xf32> to vector<1x10xf32>
    %c0_12 = arith.constant 0 : index
    %c3 = arith.constant 3 : index
    %c0_13 = arith.constant 0 : index
    %c0_14 = arith.constant 0 : index
    %10 = vector.load %arg5[%c0_12, %c3, %c0_13, %c0_14] : memref<1x9x1x10xf32, #tpu.memory_space<vmem>>, vector<1x1x1x10xf32>
    %11 = vector.shape_cast %10 : vector<1x1x1x10xf32> to vector<1x10xf32>
    %c0_15 = arith.constant 0 : index
    %c4 = arith.constant 4 : index
    %c0_16 = arith.constant 0 : index
    %c0_17 = arith.constant 0 : index
    %12 = vector.load %arg5[%c0_15, %c4, %c0_16, %c0_17] : memref<1x9x1x10xf32, #tpu.memory_space<vmem>>, vector<1x1x1x10xf32>
    %13 = vector.shape_cast %12 : vector<1x1x1x10xf32> to vector<1x10xf32>
    %c0_18 = arith.constant 0 : index
    %c5 = arith.constant 5 : index
    %c0_19 = arith.constant 0 : index
    %c0_20 = arith.constant 0 : index
    %14 = vector.load %arg5[%c0_18, %c5, %c0_19, %c0_20] : memref<1x9x1x10xf32, #tpu.memory_space<vmem>>, vector<1x1x1x10xf32>
    %15 = vector.shape_cast %14 : vector<1x1x1x10xf32> to vector<1x10xf32>
    %c0_21 = arith.constant 0 : index
    %c6 = arith.constant 6 : index
    %c0_22 = arith.constant 0 : index
    %c0_23 = arith.constant 0 : index
    %16 = vector.load %arg5[%c0_21, %c6, %c0_22, %c0_23] : memref<1x9x1x10xf32, #tpu.memory_space<vmem>>, vector<1x1x1x10xf32>
    %17 = vector.shape_cast %16 : vector<1x1x1x10xf32> to vector<1x10xf32>
    %c0_24 = arith.constant 0 : index
    %c7 = arith.constant 7 : index
    %c0_25 = arith.constant 0 : index
    %c0_26 = arith.constant 0 : index
    %18 = vector.load %arg5[%c0_24, %c7, %c0_25, %c0_26] : memref<1x9x1x10xf32, #tpu.memory_space<vmem>>, vector<1x1x1x10xf32>
    %19 = vector.shape_cast %18 : vector<1x1x1x10xf32> to vector<1x10xf32>
    %c0_27 = arith.constant 0 : index
    %c8 = arith.constant 8 : index
    %c0_28 = arith.constant 0 : index
    %c0_29 = arith.constant 0 : index
    %20 = vector.load %arg5[%c0_27, %c8, %c0_28, %c0_29] : memref<1x9x1x10xf32, #tpu.memory_space<vmem>>, vector<1x1x1x10xf32>
    %21 = vector.shape_cast %20 : vector<1x1x1x10xf32> to vector<1x10xf32>
    %c0_30 = arith.constant 0 : index
    %c0_31 = arith.constant 0 : index
    %c0_32 = arith.constant 0 : index
    %c0_33 = arith.constant 0 : index
    %22 = vector.load %arg4[%c0_30, %c0_31, %c0_32, %c0_33] : memref<1x4x10x10xf32, #tpu.memory_space<vmem>>, vector<1x1x10x10xf32>
    %23 = vector.shape_cast %22 : vector<1x1x10x10xf32> to vector<10x10xf32>
    %cst = arith.constant dense<0.000000e+00> : vector<64x10xf32>
    %24 = tpu.matmul %3, %23, %cst {dimension_numbers = #tpu.dot_dimension_numbers<[1], [0], [0], [1], [0, 0, 1, 1], [], []>} : vector<64x10xf32>, vector<10x10xf32>, vector<64x10xf32> -> vector<64x10xf32>
    %25 = vector.broadcast %5 : vector<1x10xf32> to vector<64x10xf32>
    %26 = arith.addf %24, %25 : vector<64x10xf32>
    %c0_34 = arith.constant 0 : index
    %c1_35 = arith.constant 1 : index
    %c0_36 = arith.constant 0 : index
    %c0_37 = arith.constant 0 : index
    %27 = vector.load %arg4[%c0_34, %c1_35, %c0_36, %c0_37] : memref<1x4x10x10xf32, #tpu.memory_space<vmem>>, vector<1x1x10x10xf32>
    %28 = vector.shape_cast %27 : vector<1x1x10x10xf32> to vector<10x10xf32>
    %cst_38 = arith.constant dense<0.000000e+00> : vector<64x10xf32>
    %29 = tpu.matmul %3, %28, %cst_38 {dimension_numbers = #tpu.dot_dimension_numbers<[1], [0], [0], [1], [0, 0, 1, 1], [], []>} : vector<64x10xf32>, vector<10x10xf32>, vector<64x10xf32> -> vector<64x10xf32>
    %30 = vector.broadcast %7 : vector<1x10xf32> to vector<64x10xf32>
    %31 = arith.addf %29, %30 : vector<64x10xf32>
    %c0_39 = arith.constant 0 : index
    %c2_40 = arith.constant 2 : index
    %c0_41 = arith.constant 0 : index
    %c0_42 = arith.constant 0 : index
    %32 = vector.load %arg4[%c0_39, %c2_40, %c0_41, %c0_42] : memref<1x4x10x10xf32, #tpu.memory_space<vmem>>, vector<1x1x10x10xf32>
    %33 = vector.shape_cast %32 : vector<1x1x10x10xf32> to vector<10x10xf32>
    %cst_43 = arith.constant dense<0.000000e+00> : vector<64x10xf32>
    %34 = tpu.matmul %3, %33, %cst_43 {dimension_numbers = #tpu.dot_dimension_numbers<[1], [0], [0], [1], [0, 0, 1, 1], [], []>} : vector<64x10xf32>, vector<10x10xf32>, vector<64x10xf32> -> vector<64x10xf32>
    %35 = vector.broadcast %9 : vector<1x10xf32> to vector<64x10xf32>
    %36 = arith.addf %34, %35 : vector<64x10xf32>
    %37 = vector.extract_strided_slice %31 {offsets = [0, 0], sizes = [16, 10], strides = [1, 1]} : vector<64x10xf32> to vector<16x10xf32>
    %38 = vector.extract_strided_slice %36 {offsets = [0, 0], sizes = [16, 10], strides = [1, 1]} : vector<64x10xf32> to vector<16x10xf32>
    %39 = tpu.concatenate %37, %37, %37, %37 in 0 : vector<16x10xf32>, vector<16x10xf32>, vector<16x10xf32>, vector<16x10xf32> -> vector<64x10xf32>
    %40 = tpu.concatenate %38, %38, %38, %38 in 0 : vector<16x10xf32>, vector<16x10xf32>, vector<16x10xf32>, vector<16x10xf32> -> vector<64x10xf32>
    %41 = arith.mulf %26, %39 : vector<64x10xf32>
    %42 = vector.extract_strided_slice %31 {offsets = [16, 0], sizes = [16, 10], strides = [1, 1]} : vector<64x10xf32> to vector<16x10xf32>
    %43 = vector.extract_strided_slice %36 {offsets = [16, 0], sizes = [16, 10], strides = [1, 1]} : vector<64x10xf32> to vector<16x10xf32>
    %44 = tpu.concatenate %42, %42, %42, %42 in 0 : vector<16x10xf32>, vector<16x10xf32>, vector<16x10xf32>, vector<16x10xf32> -> vector<64x10xf32>
    %45 = tpu.concatenate %43, %43, %43, %43 in 0 : vector<16x10xf32>, vector<16x10xf32>, vector<16x10xf32>, vector<16x10xf32> -> vector<64x10xf32>
    %46 = arith.mulf %26, %44 : vector<64x10xf32>
    %47 = vector.extract_strided_slice %31 {offsets = [32, 0], sizes = [16, 10], strides = [1, 1]} : vector<64x10xf32> to vector<16x10xf32>
    %48 = vector.extract_strided_slice %36 {offsets = [32, 0], sizes = [16, 10], strides = [1, 1]} : vector<64x10xf32> to vector<16x10xf32>
    %49 = tpu.concatenate %47, %47, %47, %47 in 0 : vector<16x10xf32>, vector<16x10xf32>, vector<16x10xf32>, vector<16x10xf32> -> vector<64x10xf32>
    %50 = tpu.concatenate %48, %48, %48, %48 in 0 : vector<16x10xf32>, vector<16x10xf32>, vector<16x10xf32>, vector<16x10xf32> -> vector<64x10xf32>
    %51 = arith.mulf %26, %49 : vector<64x10xf32>
    %52 = vector.extract_strided_slice %31 {offsets = [48, 0], sizes = [16, 10], strides = [1, 1]} : vector<64x10xf32> to vector<16x10xf32>
    %53 = vector.extract_strided_slice %36 {offsets = [48, 0], sizes = [16, 10], strides = [1, 1]} : vector<64x10xf32> to vector<16x10xf32>
    %54 = tpu.concatenate %52, %52, %52, %52 in 0 : vector<16x10xf32>, vector<16x10xf32>, vector<16x10xf32>, vector<16x10xf32> -> vector<64x10xf32>
    %55 = tpu.concatenate %53, %53, %53, %53 in 0 : vector<16x10xf32>, vector<16x10xf32>, vector<16x10xf32>, vector<16x10xf32> -> vector<64x10xf32>
    %56 = arith.mulf %26, %54 : vector<64x10xf32>
    %57 = arith.maximumf %41, %46 : vector<64x10xf32>
    %58 = arith.maximumf %57, %51 : vector<64x10xf32>
    %59 = arith.maximumf %58, %56 : vector<64x10xf32>
    %cst_44 = arith.constant 0.000000e+00 : f32
    %60 = vector.broadcast %cst_44 : f32 to vector<64x10xf32>
    %cst_45 = arith.constant 0.000000e+00 : f32
    %61 = vector.broadcast %cst_45 : f32 to vector<64x10xf32>
    %62 = arith.subf %41, %59 : vector<64x10xf32>
    %63 = math.exp %62 : vector<64x10xf32>
    %64 = arith.addf %60, %63 : vector<64x10xf32>
    %65 = arith.mulf %63, %40 : vector<64x10xf32>
    %66 = arith.addf %61, %65 : vector<64x10xf32>
    %67 = arith.subf %46, %59 : vector<64x10xf32>
    %68 = math.exp %67 : vector<64x10xf32>
    %69 = arith.addf %64, %68 : vector<64x10xf32>
    %70 = arith.mulf %68, %45 : vector<64x10xf32>
    %71 = arith.addf %66, %70 : vector<64x10xf32>
    %72 = arith.subf %51, %59 : vector<64x10xf32>
    %73 = math.exp %72 : vector<64x10xf32>
    %74 = arith.addf %69, %73 : vector<64x10xf32>
    %75 = arith.mulf %73, %50 : vector<64x10xf32>
    %76 = arith.addf %71, %75 : vector<64x10xf32>
    %77 = arith.subf %56, %59 : vector<64x10xf32>
    %78 = math.exp %77 : vector<64x10xf32>
    %79 = arith.addf %74, %78 : vector<64x10xf32>
    %80 = arith.mulf %78, %55 : vector<64x10xf32>
    %81 = arith.addf %76, %80 : vector<64x10xf32>
    %82 = tpu.reciprocal %79 {approx = true} : vector<64x10xf32> -> vector<64x10xf32>
    %83 = arith.mulf %81, %82 : vector<64x10xf32>
    %c0_46 = arith.constant 0 : index
    %c3_47 = arith.constant 3 : index
    %c0_48 = arith.constant 0 : index
    %c0_49 = arith.constant 0 : index
    %84 = vector.load %arg4[%c0_46, %c3_47, %c0_48, %c0_49] : memref<1x4x10x10xf32, #tpu.memory_space<vmem>>, vector<1x1x10x10xf32>
    %85 = vector.shape_cast %84 : vector<1x1x10x10xf32> to vector<10x10xf32>
    %cst_50 = arith.constant dense<0.000000e+00> : vector<64x10xf32>
    %86 = tpu.matmul %83, %85, %cst_50 {dimension_numbers = #tpu.dot_dimension_numbers<[1], [0], [0], [1], [0, 0, 1, 1], [], []>} : vector<64x10xf32>, vector<10x10xf32>, vector<64x10xf32> -> vector<64x10xf32>
    %87 = vector.broadcast %11 : vector<1x10xf32> to vector<64x10xf32>
    %88 = arith.addf %86, %87 : vector<64x10xf32>
    %89 = arith.addf %3, %88 : vector<64x10xf32>
    %cst_51 = arith.constant dense<0.000000e+00> : vector<64xf32>
    %90 = vector.multi_reduction <add>, %89, %cst_51 [1] : vector<64x10xf32> to vector<64xf32>
    %91 = vector.shape_cast %90 : vector<64xf32> to vector<64x1xf32>
    %cst_52 = arith.constant 1.000000e+01 : f32
    %92 = vector.broadcast %cst_52 : f32 to vector<64x1xf32>
    %93 = arith.divf %91, %92 : vector<64x1xf32>
    %94 = vector.broadcast %93 : vector<64x1xf32> to vector<64x10xf32>
    %95 = arith.subf %89, %94 : vector<64x10xf32>
    %96 = arith.mulf %95, %95 : vector<64x10xf32>
    %cst_53 = arith.constant dense<0.000000e+00> : vector<64xf32>
    %97 = vector.multi_reduction <add>, %96, %cst_53 [1] : vector<64x10xf32> to vector<64xf32>
    %98 = vector.shape_cast %97 : vector<64xf32> to vector<64x1xf32>
    %cst_54 = arith.constant 1.000000e+01 : f32
    %99 = vector.broadcast %cst_54 : f32 to vector<64x1xf32>
    %100 = arith.divf %98, %99 : vector<64x1xf32>
    %101 = vector.broadcast %93 : vector<64x1xf32> to vector<64x10xf32>
    %102 = arith.subf %89, %101 : vector<64x10xf32>
    %cst_55 = arith.constant 9.99999974E-6 : f32
    %103 = vector.broadcast %cst_55 : f32 to vector<64x1xf32>
    %104 = arith.addf %100, %103 : vector<64x1xf32>
    %105 = math.rsqrt %104 : vector<64x1xf32>
    %106 = vector.broadcast %105 : vector<64x1xf32> to vector<64x10xf32>
    %107 = arith.mulf %102, %106 : vector<64x10xf32>
    %108 = vector.broadcast %15 : vector<1x10xf32> to vector<64x10xf32>
    %109 = arith.mulf %107, %108 : vector<64x10xf32>
    %110 = vector.broadcast %17 : vector<1x10xf32> to vector<64x10xf32>
    %111 = arith.addf %109, %110 : vector<64x10xf32>
    %112 = arith.truncf %111 : vector<64x10xf32> to vector<64x10xbf16>
    %c0_56 = arith.constant 0 : index
    %c0_57 = arith.constant 0 : index
    %c0_58 = arith.constant 0 : index
    %113 = vector.load %arg6[%c0_56, %c0_57, %c0_58] : memref<1x10x2048xbf16, #tpu.memory_space<vmem>>, vector<1x10x2048xbf16>
    %114 = vector.shape_cast %113 : vector<1x10x2048xbf16> to vector<10x2048xbf16>
    %cst_59 = arith.constant dense<0.000000e+00> : vector<64x2048xf32>
    %115 = tpu.matmul %112, %114, %cst_59 {dimension_numbers = #tpu.dot_dimension_numbers<[1], [0], [0], [1], [0, 0, 1, 1], [], []>} : vector<64x10xbf16>, vector<10x2048xbf16>, vector<64x2048xf32> -> vector<64x2048xf32>
    %c0_60 = arith.constant 0 : index
    %c0_61 = arith.constant 0 : index
    %c0_62 = arith.constant 0 : index
    %116 = vector.load %arg7[%c0_60, %c0_61, %c0_62] : memref<1x1x2048xf32, #tpu.memory_space<vmem>>, vector<1x1x2048xf32>
    %117 = vector.shape_cast %116 : vector<1x1x2048xf32> to vector<1x2048xf32>
    %118 = vector.broadcast %117 : vector<1x2048xf32> to vector<64x2048xf32>
    %119 = arith.addf %115, %118 : vector<64x2048xf32>
    %cst_63 = arith.constant 0.000000e+00 : f32
    %120 = vector.broadcast %cst_63 : f32 to vector<64x2048xf32>
    %121 = arith.maximumf %119, %120 : vector<64x2048xf32>
    %122 = arith.truncf %121 : vector<64x2048xf32> to vector<64x2048xbf16>
    %c0_64 = arith.constant 0 : index
    %c0_65 = arith.constant 0 : index
    %c0_66 = arith.constant 0 : index
    %123 = vector.load %arg8[%c0_64, %c0_65, %c0_66] : memref<1x2048x10xbf16, #tpu.memory_space<vmem>>, vector<1x2048x10xbf16>
    %124 = vector.shape_cast %123 : vector<1x2048x10xbf16> to vector<2048x10xbf16>
    %cst_67 = arith.constant dense<0.000000e+00> : vector<64x10xf32>
    %125 = tpu.matmul %122, %124, %cst_67 {dimension_numbers = #tpu.dot_dimension_numbers<[1], [0], [0], [1], [0, 0, 1, 1], [], []>} : vector<64x2048xbf16>, vector<2048x10xbf16>, vector<64x10xf32> -> vector<64x10xf32>
    %126 = vector.broadcast %13 : vector<1x10xf32> to vector<64x10xf32>
    %127 = arith.addf %125, %126 : vector<64x10xf32>
    %128 = arith.addf %111, %127 : vector<64x10xf32>
    %cst_68 = arith.constant dense<0.000000e+00> : vector<64xf32>
    %129 = vector.multi_reduction <add>, %128, %cst_68 [1] : vector<64x10xf32> to vector<64xf32>
    %130 = vector.shape_cast %129 : vector<64xf32> to vector<64x1xf32>
    %cst_69 = arith.constant 1.000000e+01 : f32
    %131 = vector.broadcast %cst_69 : f32 to vector<64x1xf32>
    %132 = arith.divf %130, %131 : vector<64x1xf32>
    %133 = vector.broadcast %132 : vector<64x1xf32> to vector<64x10xf32>
    %134 = arith.subf %128, %133 : vector<64x10xf32>
    %135 = arith.mulf %134, %134 : vector<64x10xf32>
    %cst_70 = arith.constant dense<0.000000e+00> : vector<64xf32>
    %136 = vector.multi_reduction <add>, %135, %cst_70 [1] : vector<64x10xf32> to vector<64xf32>
    %137 = vector.shape_cast %136 : vector<64xf32> to vector<64x1xf32>
    %cst_71 = arith.constant 1.000000e+01 : f32
    %138 = vector.broadcast %cst_71 : f32 to vector<64x1xf32>
    %139 = arith.divf %137, %138 : vector<64x1xf32>
    %140 = vector.broadcast %132 : vector<64x1xf32> to vector<64x10xf32>
    %141 = arith.subf %128, %140 : vector<64x10xf32>
    %cst_72 = arith.constant 9.99999974E-6 : f32
    %142 = vector.broadcast %cst_72 : f32 to vector<64x1xf32>
    %143 = arith.addf %139, %142 : vector<64x1xf32>
    %144 = math.rsqrt %143 : vector<64x1xf32>
    %145 = vector.broadcast %144 : vector<64x1xf32> to vector<64x10xf32>
    %146 = arith.mulf %141, %145 : vector<64x10xf32>
    %147 = vector.broadcast %19 : vector<1x10xf32> to vector<64x10xf32>
    %148 = arith.mulf %146, %147 : vector<64x10xf32>
    %149 = vector.broadcast %21 : vector<1x10xf32> to vector<64x10xf32>
    %150 = arith.addf %148, %149 : vector<64x10xf32>
    %c0_73 = arith.constant 0 : index
    %c0_74 = arith.constant 0 : index
    %151 = vector.load %arg13[%c0_73, %c0_74] : memref<64x10xf32, #tpu.memory_space<vmem>>, vector<64x10xf32>
    tpu.vector_store %arg13[%c0_73, %c0_74], %150 {strides = array<i32>} : memref<64x10xf32, #tpu.memory_space<vmem>>, vector<64x10xf32>,
    %c5_i32 = arith.constant 5 : i32
    %152 = arith.cmpi eq, %arg0, %c5_i32 : i32
    %153 = arith.extui %152 : i1 to i32
    %c0_i32_75 = arith.constant 0 : i32
    %154 = arith.cmpi ne, %153, %c0_i32_75 : i32
    scf.if %154 {
      %c0_76 = arith.constant 0 : index
      %c0_77 = arith.constant 0 : index
      %155 = vector.load %arg9[%c0_76, %c0_77] : memref<64x10xf32, #tpu.memory_space<vmem>>, vector<64x10xf32>
      %156 = arith.mulf %150, %155 : vector<64x10xf32>
      %c0_78 = arith.constant 0 : index
      %c0_79 = arith.constant 0 : index
      %157 = vector.load %arg10[%c0_78, %c0_79] : memref<4x64xf32, #tpu.memory_space<vmem>>, vector<4x64xf32>
      %cst_80 = arith.constant dense<0.000000e+00> : vector<4x10xf32>
      %158 = tpu.matmul %157, %156, %cst_80 {dimension_numbers = #tpu.dot_dimension_numbers<[1], [0], [0], [1], [0, 0, 1, 1], [], []>} : vector<4x64xf32>, vector<64x10xf32>, vector<4x10xf32> -> vector<4x10xf32>
      %cst_81 = arith.constant dense<0.000000e+00> : vector<4xf32>
      %159 = vector.multi_reduction <add>, %158, %cst_81 [1] : vector<4x10xf32> to vector<4xf32>
      %160 = vector.shape_cast %159 : vector<4xf32> to vector<4x1xf32>
      %c0_82 = arith.constant 0 : index
      %c0_83 = arith.constant 0 : index
      %161 = vector.load %arg11[%c0_82, %c0_83] : memref<1x1xf32, #tpu.memory_space<vmem>>, vector<1x1xf32>
      %162 = vector.broadcast %161 : vector<1x1xf32> to vector<4x1xf32>
      %163 = arith.addf %160, %162 : vector<4x1xf32>
      %c0_84 = arith.constant 0 : index
      %c0_85 = arith.constant 0 : index
      %164 = vector.load %arg12[%c0_84, %c0_85] : memref<4x1xf32, #tpu.memory_space<vmem>>, vector<4x1xf32>
      tpu.vector_store %arg12[%c0_84, %c0_85], %163 {strides = array<i32>} : memref<4x1xf32, #tpu.memory_space<vmem>>, vector<4x1xf32>,
    } else {
    }
    return
  }
  func.func @transform_0(%arg0: i32) -> (i32, i32) {
    %c0_i32 = arith.constant 0 : i32
    %c0_i32_0 = arith.constant 0 : i32
    %c0_i32_1 = arith.constant 0 : i32
    return %c0_i32, %c0_i32_0 : i32, i32
  }
  func.func @transform_1(%arg0: i32) -> (i32, i32) {
    %c0_i32 = arith.constant 0 : i32
    %c0_i32_0 = arith.constant 0 : i32
    %c0_i32_1 = arith.constant 0 : i32
    return %c0_i32, %c0_i32_0 : i32, i32
  }
  func.func @transform_2(%arg0: i32) -> (i32, i32) {
    %c0_i32 = arith.constant 0 : i32
    %c0_i32_0 = arith.constant 0 : i32
    %c0_i32_1 = arith.constant 0 : i32
    return %c0_i32, %c0_i32_0 : i32, i32
  }
  func.func @transform_3(%arg0: i32) -> (i32, i32, i32, i32) {
    %c0_i32 = arith.constant 0 : i32
    %c0_i32_0 = arith.constant 0 : i32
    %c0_i32_1 = arith.constant 0 : i32
    %c0_i32_2 = arith.constant 0 : i32
    return %arg0, %c0_i32, %c0_i32_0, %c0_i32_1 : i32, i32, i32, i32
  }
  func.func @transform_4(%arg0: i32) -> (i32, i32, i32, i32) {
    %c0_i32 = arith.constant 0 : i32
    %c0_i32_0 = arith.constant 0 : i32
    %c0_i32_1 = arith.constant 0 : i32
    %c0_i32_2 = arith.constant 0 : i32
    return %arg0, %c0_i32, %c0_i32_0, %c0_i32_1 : i32, i32, i32, i32
  }
  func.func @transform_5(%arg0: i32) -> (i32, i32, i32) {
    %c0_i32 = arith.constant 0 : i32
    %c0_i32_0 = arith.constant 0 : i32
    %c0_i32_1 = arith.constant 0 : i32
    return %arg0, %c0_i32, %c0_i32_0 : i32, i32, i32
  }
  func.func @transform_6(%arg0: i32) -> (i32, i32, i32) {
    %c0_i32 = arith.constant 0 : i32
    %c0_i32_0 = arith.constant 0 : i32
    %c0_i32_1 = arith.constant 0 : i32
    return %arg0, %c0_i32, %c0_i32_0 : i32, i32, i32
  }
  func.func @transform_7(%arg0: i32) -> (i32, i32, i32) {
    %c0_i32 = arith.constant 0 : i32
    %c0_i32_0 = arith.constant 0 : i32
    %c0_i32_1 = arith.constant 0 : i32
    return %arg0, %c0_i32, %c0_i32_0 : i32, i32, i32
  }
  func.func @transform_8(%arg0: i32) -> (i32, i32) {
    %c0_i32 = arith.constant 0 : i32
    %c0_i32_0 = arith.constant 0 : i32
    %c0_i32_1 = arith.constant 0 : i32
    return %c0_i32, %c0_i32_0 : i32, i32
  }
  func.func @transform_9(%arg0: i32) -> (i32, i32) {
    %c0_i32 = arith.constant 0 : i32
    %c0_i32_0 = arith.constant 0 : i32
    %c0_i32_1 = arith.constant 0 : i32
    return %c0_i32, %c0_i32_0 : i32, i32
  }
  func.func @transform_10(%arg0: i32) -> (i32, i32) {
    %c0_i32 = arith.constant 0 : i32
    %c0_i32_0 = arith.constant 0 : i32
    %c0_i32_1 = arith.constant 0 : i32
    return %c0_i32, %c0_i32_0 : i32, i32
  }
  func.func @transform_11(%arg0: i32) -> (i32, i32) {
    %c0_i32 = arith.constant 0 : i32
    %c0_i32_0 = arith.constant 0 : i32
    %c0_i32_1 = arith.constant 0 : i32
    return %c0_i32, %c0_i32_0 : i32, i32
  }
}

</mosaic_0001>

<llo_original>
// kernel: transformer_forward.1
$region0: #{transformer_forward.1}
  #allocation0 [shape = 'u32[]', space=smem, size = 0x4, offset = 0x4, fixed_abs, tag = 'smem constant byte address 0x4 - core index']
  #allocation1 [shape = 'u32[144,128]{1,0:T(1,128)}', space=vmem, size = 0x12000, scoped, tag = 'internal scratch']
  #allocation2 [shape = 'f32[64,10]{1,0:T(8,128)}', space=vmem, size = 0x8000, scoped, tag = 'scratch operand']
  #allocation3 [shape = 'f32[1,1]{1,0:T(1,128)S(1)}', space=vmem, size = 0x200, scoped, tag = 'scoped memory for transformer_forward.1']
  %s0 = inlined_call_operand.vmem [shape: f32[64,1], index: 0, kind: input, shape index: {}]
  %s1 = inlined_call_operand.vmem [shape: f32[1,10], index: 1, kind: input, shape index: {}]
  %s2 = inlined_call_operand.vmem [shape: f32[1,10], index: 2, kind: input, shape index: {}]
  %s3 = inlined_call_operand.vmem [shape: f32[6,4,10,10], index: 3, kind: input, shape index: {}]
  %s4 = inlined_call_operand.vmem [shape: f32[6,9,1,10], index: 4, kind: input, shape index: {}]
  %s5 = inlined_call_operand.vmem [shape: bf16[6,10,2048], index: 5, kind: input, shape index: {}]
  %s6 = inlined_call_operand.vmem [shape: f32[6,1,2048], index: 6, kind: input, shape index: {}]
  %s7 = inlined_call_operand.vmem [shape: bf16[6,2048,10], index: 7, kind: input, shape index: {}]
  %s8 = inlined_call_operand.vmem [shape: f32[64,10], index: 8, kind: input, shape index: {}]
  %s9 = inlined_call_operand.vmem [shape: f32[4,64], index: 9, kind: input, shape index: {}]
  %s10 = inlined_call_operand.<no memory space> [shape: f32[1,1], index: 10, kind: input, shape index: {}]
  %s11 = inlined_call_operand.vmem [shape: f32[4,1], index: 11, kind: output, shape index: {}]
  %s12 = sld [smem:[#allocation0]]
  $region85: #{transformer_forward.1} parent=0
    _
  %s14 = ssub.s32 1, %s12
  %s15 = scalar_select 0, %s14, %s12
  %v16 = vstv %s10
  %17 = vst [vmem:[#allocation3] sm:$0x1] %v16
  loop: start=0, step=1, limit=8
  $region2: #{transformer_forward.1} parent=0 // loop_pre_header
    _
  $region3: #{transformer_forward.1} parent=0 // loop_header
    %s19 = sphi 0, %s23
    %p20 = scmp.ge.s32.totalorder %s19, 8
    %s27 = sphi 0, %s27
    %s29 = sphi 0, %s27
    %s30 = sphi 0, %s29
    %s44 = sphi 0, %s30
    %s48 = sphi 0, %s48
    %s50 = sphi 0, %s48
    %s51 = sphi 0, %s50
    %s65 = sphi 0, %s51
    %s69 = sphi 0, %s69
    %s71 = sphi 0, %s69
    %s72 = sphi 0, %s71
    %s86 = sphi 0, %s72
    %s92 = sphi 0, %s94
    %s95 = sphi 0, %s92
    %s96 = sphi 0, %s95
    %s112 = sphi 0, %s96
    %s118 = sphi 0, %s120
    %s121 = sphi 0, %s118
    %s122 = sphi 0, %s121
    %s138 = sphi 0, %s122
    %s144 = sphi 0, %s146
    %s147 = sphi 0, %s144
    %s148 = sphi 0, %s147
    %s164 = sphi 0, %s148
    %s170 = sphi 0, %s172
    %s173 = sphi 0, %s170
    %s174 = sphi 0, %s173
    %s190 = sphi 0, %s174
    %s196 = sphi 0, %s198
    %s199 = sphi 0, %s196
    %s200 = sphi 0, %s199
    %s216 = sphi 0, %s200
    %s220 = sphi 0, %s220
    %s222 = sphi 0, %s220
    %s223 = sphi 0, %s222
    %s237 = sphi 0, %s223
    %s241 = sphi 0, %s241
    %s243 = sphi 0, %s241
    %s244 = sphi 0, %s243
    %s258 = sphi 0, %s244
    %s262 = sphi 0, %s262
    %s264 = sphi 0, %s262
    %s265 = sphi 0, %s264
    %s279 = sphi 0, %s265
    %s283 = sphi 0, %s283
    %s285 = sphi 0, %s283
    %s286 = sphi 0, %s285
    %s300 = sphi 0, %s286
  $region4: #{transformer_forward.1} parent=0 // loop_header_branch
    %22 = sbr.rel (%p20) target = $region8
  $region5: #{transformer_forward.1} parent=0 // loop_body
    %s24 = ssub.s32 %s19, 1
    %s25 = ssub.s32 %s19, 2
    %s26 = sadd.s32 %s19, 1
    %s28 = sadd.s32 %s27, 1
    %p31 = scmp.eq.s32.totalorder %s19, 5
    %p32 = scmp.ne.s32.totalorder %s27, %s29
    %p33 = scmp.eq.s32.totalorder %s19, 0
    %p34 = por %p32, %p33
    %p35 = scmp.ne.s32.totalorder %s27, %s29
    %p36 = scmp.eq.s32.totalorder %s24, 5
    %p37 = por %p35, %p36
    %p38 = scmp.ne.s32.totalorder %s29, %s30
    %p39 = scmp.eq.s32.totalorder %s24, 0
    %p40 = por %p38, %p39
    %p41 = scmp.ne.s32.totalorder %s29, %s30
    %p42 = scmp.eq.s32.totalorder %s25, 5
    %p43 = por %p41, %p42
    %p45 = scmp.ne.s32.totalorder %s30, %s44
    %p46 = scmp.eq.s32.totalorder %s25, 0
    %p47 = por %p45, %p46
    %s49 = sadd.s32 %s48, 1
    %p52 = scmp.eq.s32.totalorder %s19, 5
    %p53 = scmp.ne.s32.totalorder %s48, %s50
    %p54 = scmp.eq.s32.totalorder %s19, 0
    %p55 = por %p53, %p54
    %p56 = scmp.ne.s32.totalorder %s48, %s50
    %p57 = scmp.eq.s32.totalorder %s24, 5
    %p58 = por %p56, %p57
    %p59 = scmp.ne.s32.totalorder %s50, %s51
    %p60 = scmp.eq.s32.totalorder %s24, 0
    %p61 = por %p59, %p60
    %p62 = scmp.ne.s32.totalorder %s50, %s51
    %p63 = scmp.eq.s32.totalorder %s25, 5
    %p64 = por %p62, %p63
    %p66 = scmp.ne.s32.totalorder %s51, %s65
    %p67 = scmp.eq.s32.totalorder %s25, 0
    %p68 = por %p66, %p67
    %s70 = sadd.s32 %s69, 1
    %p73 = scmp.eq.s32.totalorder %s19, 5
    %p74 = scmp.ne.s32.totalorder %s69, %s71
    %p75 = scmp.eq.s32.totalorder %s19, 0
    %p76 = por %p74, %p75
    %p77 = scmp.ne.s32.totalorder %s69, %s71
    %p78 = scmp.eq.s32.totalorder %s24, 5
    %p79 = por %p77, %p78
    %p80 = scmp.ne.s32.totalorder %s71, %s72
    %p81 = scmp.eq.s32.totalorder %s24, 0
    %p82 = por %p80, %p81
    %p83 = scmp.ne.s32.totalorder %s71, %s72
    %p84 = scmp.eq.s32.totalorder %s25, 5
    %p85 = por %p83, %p84
    %p87 = scmp.ne.s32.totalorder %s72, %s86
    %p88 = scmp.eq.s32.totalorder %s25, 0
    %p89 = por %p87, %p88
    %s90 = ssub.s32 %s19, %s26
    %p91 = scmp.eq.s32.totalorder %s90, 0
    %s93 = sadd.s32 %s92, 1
    %s94 = scalar_select %p91, %s92, %s93
    %p97 = pneg %p91
    %p98 = scmp.eq.s32.totalorder %s19, 5
    %p99 = por %p97, %p98
    %p100 = scmp.ne.s32.totalorder %s92, %s95
    %p101 = scmp.eq.s32.totalorder %s19, 0
    %p102 = por %p100, %p101
    %p103 = scmp.ne.s32.totalorder %s92, %s95
    %p104 = scmp.eq.s32.totalorder %s24, 5
    %p105 = por %p103, %p104
    %p106 = scmp.ne.s32.totalorder %s95, %s96
    %p107 = scmp.eq.s32.totalorder %s24, 0
    %p108 = por %p106, %p107
    %p109 = scmp.ne.s32.totalorder %s95, %s96
    %p110 = scmp.eq.s32.totalorder %s25, 5
    %p111 = por %p109, %p110
    %p113 = scmp.ne.s32.totalorder %s96, %s112
    %p114 = scmp.eq.s32.totalorder %s25, 0
    %p115 = por %p113, %p114
    %s116 = ssub.s32 %s19, %s26
    %p117 = scmp.eq.s32.totalorder %s116, 0
    %s119 = sadd.s32 %s118, 1
    %s120 = scalar_select %p117, %s118, %s119
    %p123 = pneg %p117
    %p124 = scmp.eq.s32.totalorder %s19, 5
    %p125 = por %p123, %p124
    %p126 = scmp.ne.s32.totalorder %s118, %s121
    %p127 = scmp.eq.s32.totalorder %s19, 0
    %p128 = por %p126, %p127
    %p129 = scmp.ne.s32.totalorder %s118, %s121
    %p130 = scmp.eq.s32.totalorder %s24, 5
    %p131 = por %p129, %p130
    %p132 = scmp.ne.s32.totalorder %s121, %s122
    %p133 = scmp.eq.s32.totalorder %s24, 0
    %p134 = por %p132, %p133
    %p135 = scmp.ne.s32.totalorder %s121, %s122
    %p136 = scmp.eq.s32.totalorder %s25, 5
    %p137 = por %p135, %p136
    %p139 = scmp.ne.s32.totalorder %s122, %s138
    %p140 = scmp.eq.s32.totalorder %s25, 0
    %p141 = por %p139, %p140
    %s142 = ssub.s32 %s19, %s26
    %p143 = scmp.eq.s32.totalorder %s142, 0
    %s145 = sadd.s32 %s144, 1
    %s146 = scalar_select %p143, %s144, %s145
    %p149 = pneg %p143
    %p150 = scmp.eq.s32.totalorder %s19, 5
    %p151 = por %p149, %p150
    %p152 = scmp.ne.s32.totalorder %s144, %s147
    %p153 = scmp.eq.s32.totalorder %s19, 0
    %p154 = por %p152, %p153
    %p155 = scmp.ne.s32.totalorder %s144, %s147
    %p156 = scmp.eq.s32.totalorder %s24, 5
    %p157 = por %p155, %p156
    %p158 = scmp.ne.s32.totalorder %s147, %s148
    %p159 = scmp.eq.s32.totalorder %s24, 0
    %p160 = por %p158, %p159
    %p161 = scmp.ne.s32.totalorder %s147, %s148
    %p162 = scmp.eq.s32.totalorder %s25, 5
    %p163 = por %p161, %p162
    %p165 = scmp.ne.s32.totalorder %s148, %s164
    %p166 = scmp.eq.s32.totalorder %s25, 0
    %p167 = por %p165, %p166
    %s168 = ssub.s32 %s19, %s26
    %p169 = scmp.eq.s32.totalorder %s168, 0
    %s171 = sadd.s32 %s170, 1
    %s172 = scalar_select %p169, %s170, %s171
    %p175 = pneg %p169
    %p176 = scmp.eq.s32.totalorder %s19, 5
    %p177 = por %p175, %p176
    %p178 = scmp.ne.s32.totalorder %s170, %s173
    %p179 = scmp.eq.s32.totalorder %s19, 0
    %p180 = por %p178, %p179
    %p181 = scmp.ne.s32.totalorder %s170, %s173
    %p182 = scmp.eq.s32.totalorder %s24, 5
    %p183 = por %p181, %p182
    %p184 = scmp.ne.s32.totalorder %s173, %s174
    %p185 = scmp.eq.s32.totalorder %s24, 0
    %p186 = por %p184, %p185
    %p187 = scmp.ne.s32.totalorder %s173, %s174
    %p188 = scmp.eq.s32.totalorder %s25, 5
    %p189 = por %p187, %p188
    %p191 = scmp.ne.s32.totalorder %s174, %s190
    %p192 = scmp.eq.s32.totalorder %s25, 0
    %p193 = por %p191, %p192
    %s194 = ssub.s32 %s19, %s26
    %p195 = scmp.eq.s32.totalorder %s194, 0
    %s197 = sadd.s32 %s196, 1
    %s198 = scalar_select %p195, %s196, %s197
    %p201 = pneg %p195
    %p202 = scmp.eq.s32.totalorder %s19, 5
    %p203 = por %p201, %p202
    %p204 = scmp.ne.s32.totalorder %s196, %s199
    %p205 = scmp.eq.s32.totalorder %s19, 0
    %p206 = por %p204, %p205
    %p207 = scmp.ne.s32.totalorder %s196, %s199
    %p208 = scmp.eq.s32.totalorder %s24, 5
    %p209 = por %p207, %p208
    %p210 = scmp.ne.s32.totalorder %s199, %s200
    %p211 = scmp.eq.s32.totalorder %s24, 0
    %p212 = por %p210, %p211
    %p213 = scmp.ne.s32.totalorder %s199, %s200
    %p214 = scmp.eq.s32.totalorder %s25, 5
    %p215 = por %p213, %p214
    %p217 = scmp.ne.s32.totalorder %s200, %s216
    %p218 = scmp.eq.s32.totalorder %s25, 0
    %p219 = por %p217, %p218
    %s221 = sadd.s32 %s220, 1
    %p224 = scmp.eq.s32.totalorder %s19, 5
    %p225 = scmp.ne.s32.totalorder %s220, %s222
    %p226 = scmp.eq.s32.totalorder %s19, 0
    %p227 = por %p225, %p226
    %p228 = scmp.ne.s32.totalorder %s220, %s222
    %p229 = scmp.eq.s32.totalorder %s24, 5
    %p230 = por %p228, %p229
    %p231 = scmp.ne.s32.totalorder %s222, %s223
    %p232 = scmp.eq.s32.totalorder %s24, 0
    %p233 = por %p231, %p232
    %p234 = scmp.ne.s32.totalorder %s222, %s223
    %p235 = scmp.eq.s32.totalorder %s25, 5
    %p236 = por %p234, %p235
    %p238 = scmp.ne.s32.totalorder %s223, %s237
    %p239 = scmp.eq.s32.totalorder %s25, 0
    %p240 = por %p238, %p239
    %s242 = sadd.s32 %s241, 1
    %p245 = scmp.eq.s32.totalorder %s19, 5
    %p246 = scmp.ne.s32.totalorder %s241, %s243
    %p247 = scmp.eq.s32.totalorder %s19, 0
    %p248 = por %p246, %p247
    %p249 = scmp.ne.s32.totalorder %s241, %s243
    %p250 = scmp.eq.s32.totalorder %s24, 5
    %p251 = por %p249, %p250
    %p252 = scmp.ne.s32.totalorder %s243, %s244
    %p253 = scmp.eq.s32.totalorder %s24, 0
    %p254 = por %p252, %p253
    %p255 = scmp.ne.s32.totalorder %s243, %s244
    %p256 = scmp.eq.s32.totalorder %s25, 5
    %p257 = por %p255, %p256
    %p259 = scmp.ne.s32.totalorder %s244, %s258
    %p260 = scmp.eq.s32.totalorder %s25, 0
    %p261 = por %p259, %p260
    %s263 = sadd.s32 %s262, 1
    %p266 = scmp.eq.s32.totalorder %s19, 5
    %p267 = scmp.ne.s32.totalorder %s262, %s264
    %p268 = scmp.eq.s32.totalorder %s19, 0
    %p269 = por %p267, %p268
    %p270 = scmp.ne.s32.totalorder %s262, %s264
    %p271 = scmp.eq.s32.totalorder %s24, 5
    %p272 = por %p270, %p271
    %p273 = scmp.ne.s32.totalorder %s264, %s265
    %p274 = scmp.eq.s32.totalorder %s24, 0
    %p275 = por %p273, %p274
    %p276 = scmp.ne.s32.totalorder %s264, %s265
    %p277 = scmp.eq.s32.totalorder %s25, 5
    %p278 = por %p276, %p277
    %p280 = scmp.ne.s32.totalorder %s265, %s279
    %p281 = scmp.eq.s32.totalorder %s25, 0
    %p282 = por %p280, %p281
    %s284 = sadd.s32 %s283, 1
    %p287 = scmp.eq.s32.totalorder %s19, 5
    %p288 = scmp.ne.s32.totalorder %s283, %s285
    %p289 = scmp.eq.s32.totalorder %s19, 0
    %p290 = por %p288, %p289
    %p291 = scmp.ne.s32.totalorder %s283, %s285
    %p292 = scmp.eq.s32.totalorder %s24, 5
    %p293 = por %p291, %p292
    %p294 = scmp.ne.s32.totalorder %s285, %s286
    %p295 = scmp.eq.s32.totalorder %s24, 0
    %p296 = por %p294, %p295
    %p297 = scmp.ne.s32.totalorder %s285, %s286
    %p298 = scmp.eq.s32.totalorder %s25, 5
    %p299 = por %p297, %p298
    %p301 = scmp.ne.s32.totalorder %s286, %s300
    %p302 = scmp.eq.s32.totalorder %s25, 0
    %p303 = por %p301, %p302
    %p304 = scmp.le.s32.totalorder 1, %s19
    %p305 = scmp.lt.s32.totalorder %s19, 7
    %p306 = pnand %p304, %p305
    %p307 = pneg %p306
    // Predicated region
    $region9: #{transformer_forward.1} parent=5 // pred_check
      _
    $region10: #{transformer_forward.1} parent=5 // pred_check_branch
      %309 = sbr.rel (%p306) target = $region12
    $region11: #{transformer_forward.1} parent=5 // pred_region
      %s310 = ssub.s32 %s19, 1
      // Predicated region
      $region13: #{transformer_forward.1} parent=11 // pred_check
        %p311 = pneg %p40
      $region14: #{transformer_forward.1} parent=11 // pred_check_branch
        %313 = sbr.rel (%p311) target = $region16
      $region15: #{transformer_forward.1} parent=11 // pred_region
        _
      $region16: #{transformer_forward.1} parent=11 // pred_fallthru
        _
      // Predicated region
      $region17: #{transformer_forward.1} parent=11 // pred_check
        %p314 = pneg %p61
      $region18: #{transformer_forward.1} parent=11 // pred_check_branch
        %316 = sbr.rel (%p314) target = $region20
      $region19: #{transformer_forward.1} parent=11 // pred_region
        _
      $region20: #{transformer_forward.1} parent=11 // pred_fallthru
        _
      // Predicated region
      $region21: #{transformer_forward.1} parent=11 // pred_check
        %p317 = pneg %p82
      $region22: #{transformer_forward.1} parent=11 // pred_check_branch
        %319 = sbr.rel (%p317) target = $region24
      $region23: #{transformer_forward.1} parent=11 // pred_region
        _
      $region24: #{transformer_forward.1} parent=11 // pred_fallthru
        _
      // Predicated region
      $region25: #{transformer_forward.1} parent=11 // pred_check
        %p320 = pneg %p233
      $region26: #{transformer_forward.1} parent=11 // pred_check_branch
        %322 = sbr.rel (%p320) target = $region28
      $region27: #{transformer_forward.1} parent=11 // pred_region
        _
      $region28: #{transformer_forward.1} parent=11 // pred_fallthru
        _
      // Predicated region
      $region29: #{transformer_forward.1} parent=11 // pred_check
        %p323 = pneg %p254
      $region30: #{transformer_forward.1} parent=11 // pred_check_branch
        %325 = sbr.rel (%p323) target = $region32
      $region31: #{transformer_forward.1} parent=11 // pred_region
        _
      $region32: #{transformer_forward.1} parent=11 // pred_fallthru
        _
      // Predicated region
      $region33: #{transformer_forward.1} parent=11 // pred_check
        %p326 = pneg %p275
      $region34: #{transformer_forward.1} parent=11 // pred_check_branch
        %328 = sbr.rel (%p326) target = $region36
      $region35: #{transformer_forward.1} parent=11 // pred_region
        _
      $region36: #{transformer_forward.1} parent=11 // pred_fallthru
        _
    $region12: #{transformer_forward.1} parent=5 // pred_fallthru
      _
    %p329 = scmp.lt.s32.totalorder %s19, 6
    // Predicated region
    $region37: #{transformer_forward.1} parent=5 // pred_check
      %p330 = pneg %p329
    $region38: #{transformer_forward.1} parent=5 // pred_check_branch
      %332 = sbr.rel (%p330) target = $region40
    $region39: #{transformer_forward.1} parent=5 // pred_region
      // Predicated region
      $region41: #{transformer_forward.1} parent=39 // pred_check
        %p333 = pneg %p102
      $region42: #{transformer_forward.1} parent=39 // pred_check_branch
        %335 = sbr.rel (%p333) target = $region44
      $region43: #{transformer_forward.1} parent=39 // pred_region
        %p336 = scmp.lt.s32.totalorder %s19, 5
        %s337 = scalar_select %p336, %s19, 5
        %s338 = smul.addr %s337, 8
        %s339 = smul.addr %s338, 8
        %s340 = scalar_lea.vmem %s3, %s339
      $region44: #{transformer_forward.1} parent=39 // pred_fallthru
        _
      // Predicated region
      $region45: #{transformer_forward.1} parent=39 // pred_check
        %p341 = pneg %p128
      $region46: #{transformer_forward.1} parent=39 // pred_check_branch
        %343 = sbr.rel (%p341) target = $region48
      $region47: #{transformer_forward.1} parent=39 // pred_region
        %p344 = scmp.lt.s32.totalorder %s19, 5
        %s345 = scalar_select %p344, %s19, 5
        %s346 = smul.addr %s345, 9
        %s347 = scalar_lea.vmem %s4, %s346
      $region48: #{transformer_forward.1} parent=39 // pred_fallthru
        _
      // Predicated region
      $region49: #{transformer_forward.1} parent=39 // pred_check
        %p348 = pneg %p154
      $region50: #{transformer_forward.1} parent=39 // pred_check_branch
        %350 = sbr.rel (%p348) target = $region52
      $region51: #{transformer_forward.1} parent=39 // pred_region
        %p351 = scmp.lt.s32.totalorder %s19, 5
        %s352 = scalar_select %p351, %s19, 5
        %s353 = smul.addr %s352, 32
        %s354 = smul.addr %s353, 4
        %s355 = scalar_lea.vmem %s5, %s354
      $region52: #{transformer_forward.1} parent=39 // pred_fallthru
        _
      // Predicated region
      $region53: #{transformer_forward.1} parent=39 // pred_check
        %p356 = pneg %p180
      $region54: #{transformer_forward.1} parent=39 // pred_check_branch
        %358 = sbr.rel (%p356) target = $region56
      $region55: #{transformer_forward.1} parent=39 // pred_region
        %p359 = scmp.lt.s32.totalorder %s19, 5
        %s360 = scalar_select %p359, %s19, 5
        %s361 = smul.addr %s360, 16
        %s362 = scalar_lea.vmem %s6, %s361
      $region56: #{transformer_forward.1} parent=39 // pred_fallthru
        _
      // Predicated region
      $region57: #{transformer_forward.1} parent=39 // pred_check
        %p363 = pneg %p206
      $region58: #{transformer_forward.1} parent=39 // pred_check_branch
        %365 = sbr.rel (%p363) target = $region60
      $region59: #{transformer_forward.1} parent=39 // pred_region
        %p366 = scmp.lt.s32.totalorder %s19, 5
        %s367 = scalar_select %p366, %s19, 5
        %s368 = smul.addr %s367, 256
        %s369 = smul.addr %s368, 4
        %s370 = scalar_lea.vmem %s7, %s369
      $region60: #{transformer_forward.1} parent=39 // pred_fallthru
        _
    $region40: #{transformer_forward.1} parent=5 // pred_fallthru
      _
    %p371 = scmp.le.s32.totalorder 1, %s19
    %p372 = scmp.lt.s32.totalorder %s19, 7
    %p373 = pnand %p371, %p372
    %p374 = pneg %p373
    // Predicated region
    $region61: #{transformer_forward.1} parent=5 // pred_check
      _
    $region62: #{transformer_forward.1} parent=5 // pred_check_branch
      %376 = sbr.rel (%p373) target = $region64
    $region63: #{transformer_forward.1} parent=5 // pred_region
      %s377 = ssub.s32 %s19, 1
      %p378 = pneg %p40
      %p379 = pneg %p37
      %p380 = pneg %p61
      %p381 = pneg %p58
      %p382 = pneg %p82
      %p383 = pneg %p79
      %p384 = scmp.lt.s32.totalorder %s24, 5
      %s385 = scalar_select %p384, %s24, 5
      %s386 = smul.addr %s385, 8
      %s387 = smul.addr %s386, 8
      %s388 = scalar_lea.vmem %s3, %s387
      %p389 = pneg %p108
      %p390 = pneg %p105
      %p391 = scmp.lt.s32.totalorder %s24, 5
      %s392 = scalar_select %p391, %s24, 5
      %s393 = smul.addr %s392, 9
      %s394 = scalar_lea.vmem %s4, %s393
      %p395 = pneg %p134
      %p396 = pneg %p131
      %p397 = scmp.lt.s32.totalorder %s24, 5
      %s398 = scalar_select %p397, %s24, 5
      %s399 = smul.addr %s398, 32
      %s400 = smul.addr %s399, 4
      %s401 = scalar_lea.vmem %s5, %s400
      %p402 = pneg %p160
      %p403 = pneg %p157
      %p404 = scmp.lt.s32.totalorder %s24, 5
      %s405 = scalar_select %p404, %s24, 5
      %s406 = smul.addr %s405, 16
      %s407 = scalar_lea.vmem %s6, %s406
      %p408 = pneg %p186
      %p409 = pneg %p183
      %p410 = scmp.lt.s32.totalorder %s24, 5
      %s411 = scalar_select %p410, %s24, 5
      %s412 = smul.addr %s411, 256
      %s413 = smul.addr %s412, 4
      %s414 = scalar_lea.vmem %s7, %s413
      %p415 = pneg %p212
      %p416 = pneg %p209
      %p417 = pneg %p233
      %p418 = pneg %p230
      %p419 = pneg %p254
      %p420 = pneg %p251
      %p421 = pneg %p275
      %p422 = pneg %p272
      %p423 = pneg %p296
      %p424 = pneg %p293
      %p425 = scmp.lt.s32.totalorder %s24, 5
      %s426 = scalar_select %p425, %s24, 5
      %s427 = smul.addr %s426, 8
      %s428 = smul.addr %s427, 8
      %s429 = scalar_lea.vmem %s3, %s428
      %p430 = scmp.lt.s32.totalorder %s24, 5
      %s431 = scalar_select %p430, %s24, 5
      %s432 = smul.addr %s431, 9
      %s433 = scalar_lea.vmem %s4, %s432
      %p434 = scmp.lt.s32.totalorder %s24, 5
      %s435 = scalar_select %p434, %s24, 5
      %s436 = smul.addr %s435, 32
      %s437 = smul.addr %s436, 4
      %s438 = scalar_lea.vmem %s5, %s437
      %p439 = scmp.lt.s32.totalorder %s24, 5
      %s440 = scalar_select %p439, %s24, 5
      %s441 = smul.addr %s440, 16
      %s442 = scalar_lea.vmem %s6, %s441
      %p443 = scmp.lt.s32.totalorder %s24, 5
      %s444 = scalar_select %p443, %s24, 5
      %s445 = smul.addr %s444, 256
      %s446 = smul.addr %s445, 4
      %s447 = scalar_lea.vmem %s7, %s446
      %p449 = scmp.eq.s32.totalorder %s24, 0
      // Predicated region
      $region65: #{transformer_forward.1} parent=63 // pred_check
        %p450 = pneg %p449
      $region66: #{transformer_forward.1} parent=63 // pred_check_branch
        %452 = sbr.rel (%p450) target = $region68
      $region67: #{transformer_forward.1} parent=63 // pred_region
        %v453 = vld [vmem:[%s0] sm:$0xff]
        %v454 = vld [vmem:[%s0 + $0x8] sm:$0xff]
        %v455 = vld [vmem:[%s0 + $0x10] sm:$0xff]
        %v456 = vld [vmem:[%s0 + $0x18] sm:$0xff]
        %v457 = vld [vmem:[%s0 + $0x20] sm:$0xff]
        %v458 = vld [vmem:[%s0 + $0x28] sm:$0xff]
        %v459 = vld [vmem:[%s0 + $0x30] sm:$0xff]
        %v460 = vld [vmem:[%s0 + $0x38] sm:$0xff]
        %v461 = vld [vmem:[%s1] sm:$0x1]
        %463 = vset.pattern.permute.xlu0 0
        %464 = vperm.xlu0 %463, %v453
        %v465 = vpop.permute.xlu0 %464
        %468 = vset.pattern.permute.xlu0 0
        %469 = vperm.xlu0 %468, %v454
        %v470 = vpop.permute.xlu0 %469
        %473 = vset.pattern.permute.xlu0 0
        %474 = vperm.xlu0 %473, %v455
        %v475 = vpop.permute.xlu0 %474
        %478 = vset.pattern.permute.xlu0 0
        %479 = vperm.xlu0 %478, %v456
        %v480 = vpop.permute.xlu0 %479
        %483 = vset.pattern.permute.xlu0 0
        %484 = vperm.xlu0 %483, %v457
        %v485 = vpop.permute.xlu0 %484
        %488 = vset.pattern.permute.xlu0 0
        %489 = vperm.xlu0 %488, %v458
        %v490 = vpop.permute.xlu0 %489
        %493 = vset.pattern.permute.xlu0 0
        %494 = vperm.xlu0 %493, %v459
        %v495 = vpop.permute.xlu0 %494
        %498 = vset.pattern.permute.xlu0 0
        %499 = vperm.xlu0 %498, %v460
        %v500 = vpop.permute.xlu0 %499
        %v503 = vlaneseq
        %v504 = vshrl.u32 %v503, 7
        %v505 = vsub.s32 0, %v504
        %v506 = vrot.slane %v461, %v505
        %v508 = vmul.f32 %v465, %v506
        %v509 = vmul.f32 %v470, %v506
        %v510 = vmul.f32 %v475, %v506
        %v511 = vmul.f32 %v480, %v506
        %v512 = vmul.f32 %v485, %v506
        %v513 = vmul.f32 %v490, %v506
        %v514 = vmul.f32 %v495, %v506
        %v515 = vmul.f32 %v500, %v506
        %v516 = vld [vmem:[%s2] sm:$0x1]
        %v518 = vlaneseq
        %v519 = vshrl.u32 %v518, 7
        %v520 = vsub.s32 0, %v519
        %v521 = vrot.slane %v516, %v520
        %v523 = vadd.f32 %v508, %v521
        %v524 = vadd.f32 %v509, %v521
        %v525 = vadd.f32 %v510, %v521
        %v526 = vadd.f32 %v511, %v521
        %v527 = vadd.f32 %v512, %v521
        %v528 = vadd.f32 %v513, %v521
        %v529 = vadd.f32 %v514, %v521
        %v530 = vadd.f32 %v515, %v521
        %vm531 = vcmask 80896
        %532 = vst.msk [vmem:[#allocation2] sm:$0xff] %vm531, %v523
        %533 = vst.msk [vmem:[#allocation2 + $0x8] sm:$0xff] %vm531, %v524
        %534 = vst.msk [vmem:[#allocation2 + $0x10] sm:$0xff] %vm531, %v525
        %535 = vst.msk [vmem:[#allocation2 + $0x18] sm:$0xff] %vm531, %v526
        %536 = vst.msk [vmem:[#allocation2 + $0x20] sm:$0xff] %vm531, %v527
        %537 = vst.msk [vmem:[#allocation2 + $0x28] sm:$0xff] %vm531, %v528
        %538 = vst.msk [vmem:[#allocation2 + $0x30] sm:$0xff] %vm531, %v529
        %539 = vst.msk [vmem:[#allocation2 + $0x38] sm:$0xff] %vm531, %v530
      $region68: #{transformer_forward.1} parent=63 // pred_fallthru
        _
      %v540 = vld [vmem:[#allocation2] sm:$0xff]
      %v541 = vld [vmem:[#allocation2 + $0x8] sm:$0xff]
      %v542 = vld [vmem:[#allocation2 + $0x10] sm:$0xff]
      %v543 = vld [vmem:[#allocation2 + $0x18] sm:$0xff]
      %v544 = vld [vmem:[#allocation2 + $0x20] sm:$0xff]
      %v545 = vld [vmem:[#allocation2 + $0x28] sm:$0xff]
      %v546 = vld [vmem:[#allocation2 + $0x30] sm:$0xff]
      %v547 = vld [vmem:[#allocation2 + $0x38] sm:$0xff]
      %v548 = vld [vmem:[%s433] sm:$0x1]
      %s549 = scalar_lea.vmem %s433, 1
      %v550 = vld [vmem:[%s549] sm:$0x1]
      %s551 = scalar_lea.vmem %s433, 2
      %v552 = vld [vmem:[%s551] sm:$0x1]
      %s553 = scalar_lea.vmem %s433, 3
      %v554 = vld [vmem:[%s553] sm:$0x1]
      %s555 = scalar_lea.vmem %s433, 4
      %v556 = vld [vmem:[%s555] sm:$0x1]
      %s557 = scalar_lea.vmem %s433, 5
      %v558 = vld [vmem:[%s557] sm:$0x1]
      %s559 = scalar_lea.vmem %s433, 6
      %v560 = vld [vmem:[%s559] sm:$0x1]
      %s561 = scalar_lea.vmem %s433, 7
      %v562 = vld [vmem:[%s561] sm:$0x1]
      %s563 = scalar_lea.vmem %s433, 8
      %v564 = vld [vmem:[%s563] sm:$0x1]
      %v565 = vld [vmem:[%s429] sm:$0xff]
      %v566 = vld [vmem:[%s429 + $0x8] sm:$0x3]
      %v568 = vlaneseq
      %v569 = vshrl.u32 %v568, 7
      %v570 = vsub.s32 0, %v569
      %v571 = vrot.slane %v548, %v570
      %vm573 = vcmask 80896
      %v575 = vsel %vm573, %v540, 0
      %v578 = vsel %vm573, %v541, 0
      %v581 = vsel %vm573, %v542, 0
      %v584 = vsel %vm573, %v543, 0
      %v587 = vsel %vm573, %v544, 0
      %v590 = vsel %vm573, %v545, 0
      %v593 = vsel %vm573, %v546, 0
      %v596 = vsel %vm573, %v547, 0
      %vm598 = vcmask 1041408
      %v600 = vsel %vm598, %v566, 0
      %602 = vmatprep.subr.mxu0 0.0
      %603 = vmatpush1.msra.mxu0 %v565
      %604 = vmatprep.subr.mxu0 0.0
      %605 = vmatpush1.msra.mxu0 %v600
      %606 = vmatprep.subr.mxu0 0.0
      %607 = vmatpush1.msra.mxu0 0.0
      %608 = vmatprep.subr.mxu0 0.0
      %609 = vmatpush1.msra.mxu0 0.0
      %610 = vmatprep.subr.mxu0 0.0
      %611 = vmatpush1.msra.mxu0 0.0
      %612 = vmatprep.subr.mxu0 0.0
      %613 = vmatpush1.msra.mxu0 0.0
      %614 = vmatprep.subr.mxu0 0.0
      %615 = vmatpush1.msra.mxu0 0.0
      %616 = vmatprep.subr.mxu0 0.0
      %617 = vmatpush1.msra.mxu0 0.0
      %618 = vmatprep.subr.mxu0 0.0
      %619 = vmatpush1.msra.mxu0 0.0
      %620 = vmatprep.subr.mxu0 0.0
      %621 = vmatpush1.msra.mxu0 0.0
      %622 = vmatprep.subr.mxu0 0.0
      %623 = vmatpush1.msra.mxu0 0.0
      %624 = vmatprep.subr.mxu0 0.0
      %625 = vmatpush1.msra.mxu0 0.0
      %626 = vmatprep.subr.mxu0 0.0
      %627 = vmatpush1.msra.mxu0 0.0
      %628 = vmatprep.subr.mxu0 0.0
      %629 = vmatpush1.msra.mxu0 0.0
      %630 = vmatprep.subr.mxu0 0.0
      %631 = vmatpush1.msra.mxu0 0.0
      %632 = vmatprep.subr.mxu0 0.0
      %633 = vmatpush1.msra.mxu0 0.0
      %634 = vmatprep.subr.mxu0 0.0
      %635 = vmatpush1.msra.mxu0 0.0
      %636 = vmatprep.subr.mxu0 0.0
      %637 = vmatpush1.msra.mxu0 0.0
      %638 = vmatprep.subr.mxu0 0.0
      %639 = vmatpush1.msra.mxu0 0.0
      %640 = vmatprep.subr.mxu0 0.0
      %641 = vmatpush1.msra.mxu0 0.0
      %642 = vmatprep.subr.mxu0 0.0
      %643 = vmatpush1.msra.mxu0 0.0
      %644 = vmatprep.subr.mxu0 0.0
      %645 = vmatpush1.msra.mxu0 0.0
      %646 = vmatprep.subr.mxu0 0.0
      %647 = vmatpush1.msra.mxu0 0.0
      %648 = vmatprep.subr.mxu0 0.0
      %649 = vmatpush1.msra.mxu0 0.0
      %650 = vmatprep.subr.mxu0 0.0
      %651 = vmatpush1.msra.mxu0 0.0
      %652 = vmatprep.subr.mxu0 0.0
      %653 = vmatpush1.msra.mxu0 0.0
      %654 = vmatprep.subr.mxu0 0.0
      %655 = vmatpush1.msra.mxu0 0.0
      %656 = vmatprep.subr.mxu0 0.0
      %657 = vmatpush1.msra.mxu0 0.0
      %658 = vmatprep.subr.mxu0 0.0
      %659 = vmatpush1.msra.mxu0 0.0
      %660 = vmatprep.subr.mxu0 0.0
      %661 = vmatpush1.msra.mxu0 0.0
      %662 = vmatprep.subr.mxu0 0.0
      %663 = vmatpush1.msra.mxu0 0.0
      %664 = vmatprep.subr.mxu0 0.0
      %665 = vmatpush1.msra.mxu0 0.0
      %666 = vmatprep.mubr.f32.mxu0 0.0
      %667 = vmatmul.mubr.f32.gmra.mrb[0].mxu0 %v575
      %v668 = vpop.f32.mrb[0].mxu0
      %v669 = vadd.f32 %v571, %v668
      %v670 = vpop.f32.mrb[0].mxu0
      %671 = vmatprep.mubr.f32.mxu0 0.0
      %672 = vmatmul.mubr.f32.gmra.mrb[0].mxu0 %v578
      %v673 = vpop.f32.mrb[0].mxu0
      %v674 = vadd.f32 %v571, %v673
      %v675 = vpop.f32.mrb[0].mxu0
      %676 = vmatprep.mubr.f32.mxu0 0.0
      %677 = vmatmul.mubr.f32.gmra.mrb[0].mxu0 %v581
      %v678 = vpop.f32.mrb[0].mxu0
      %v679 = vadd.f32 %v571, %v678
      %v680 = vpop.f32.mrb[0].mxu0
      %681 = vmatprep.mubr.f32.mxu0 0.0
      %682 = vmatmul.mubr.f32.gmra.mrb[0].mxu0 %v584
      %v683 = vpop.f32.mrb[0].mxu0
      %v684 = vadd.f32 %v571, %v683
      %v685 = vpop.f32.mrb[0].mxu0
      %686 = vmatprep.mubr.f32.mxu0 0.0
      %687 = vmatmul.mubr.f32.gmra.mrb[0].mxu0 %v587
      %v688 = vpop.f32.mrb[0].mxu0
      %v689 = vadd.f32 %v571, %v688
      %v690 = vpop.f32.mrb[0].mxu0
      %691 = vmatprep.mubr.f32.mxu0 0.0
      %692 = vmatmul.mubr.f32.gmra.mrb[0].mxu0 %v590
      %v693 = vpop.f32.mrb[0].mxu0
      %v694 = vadd.f32 %v571, %v693
      %v695 = vpop.f32.mrb[0].mxu0
      %696 = vmatprep.mubr.f32.mxu0 0.0
      %697 = vmatmul.mubr.f32.gmra.mrb[0].mxu0 %v593
      %v698 = vpop.f32.mrb[0].mxu0
      %v699 = vadd.f32 %v571, %v698
      %v700 = vpop.f32.mrb[0].mxu0
      %701 = vmatprep.mubr.f32.mxu0 0.0
      %702 = vmatmul.mubr.f32.gmra.mrb[0].mxu0 %v596
      %v703 = vpop.f32.mrb[0].mxu0
      %v704 = vadd.f32 %v571, %v703
      %v705 = vpop.f32.mrb[0].mxu0
      %706 = vdwg.mxu0
      %s707 = scalar_lea.vmem %s429, 16
      %v708 = vld [vmem:[%s707] sm:$0xff]
      %v709 = vld [vmem:[%s707 + $0x8] sm:$0x3]
      %v711 = vlaneseq
      %v712 = vshrl.u32 %v711, 7
      %v713 = vsub.s32 0, %v712
      %v714 = vrot.slane %v550, %v713
      %v717 = vsel %vm598, %v709, 0
      %719 = vmatprep.subr.mxu0 0.0
      %720 = vmatpush1.msra.mxu0 %v708
      %721 = vmatprep.subr.mxu0 0.0
      %722 = vmatpush1.msra.mxu0 %v717
      %723 = vmatprep.subr.mxu0 0.0
      %724 = vmatpush1.msra.mxu0 0.0
      %725 = vmatprep.subr.mxu0 0.0
      %726 = vmatpush1.msra.mxu0 0.0
      %727 = vmatprep.subr.mxu0 0.0
      %728 = vmatpush1.msra.mxu0 0.0
      %729 = vmatprep.subr.mxu0 0.0
      %730 = vmatpush1.msra.mxu0 0.0
      %731 = vmatprep.subr.mxu0 0.0
      %732 = vmatpush1.msra.mxu0 0.0
      %733 = vmatprep.subr.mxu0 0.0
      %734 = vmatpush1.msra.mxu0 0.0
      %735 = vmatprep.subr.mxu0 0.0
      %736 = vmatpush1.msra.mxu0 0.0
      %737 = vmatprep.subr.mxu0 0.0
      %738 = vmatpush1.msra.mxu0 0.0
      %739 = vmatprep.subr.mxu0 0.0
      %740 = vmatpush1.msra.mxu0 0.0
      %741 = vmatprep.subr.mxu0 0.0
      %742 = vmatpush1.msra.mxu0 0.0
      %743 = vmatprep.subr.mxu0 0.0
      %744 = vmatpush1.msra.mxu0 0.0
      %745 = vmatprep.subr.mxu0 0.0
      %746 = vmatpush1.msra.mxu0 0.0
      %747 = vmatprep.subr.mxu0 0.0
      %748 = vmatpush1.msra.mxu0 0.0
      %749 = vmatprep.subr.mxu0 0.0
      %750 = vmatpush1.msra.mxu0 0.0
      %751 = vmatprep.subr.mxu0 0.0
      %752 = vmatpush1.msra.mxu0 0.0
      %753 = vmatprep.subr.mxu0 0.0
      %754 = vmatpush1.msra.mxu0 0.0
      %755 = vmatprep.subr.mxu0 0.0
      %756 = vmatpush1.msra.mxu0 0.0
      %757 = vmatprep.subr.mxu0 0.0
      %758 = vmatpush1.msra.mxu0 0.0
      %759 = vmatprep.subr.mxu0 0.0
      %760 = vmatpush1.msra.mxu0 0.0
      %761 = vmatprep.subr.mxu0 0.0
      %762 = vmatpush1.msra.mxu0 0.0
      %763 = vmatprep.subr.mxu0 0.0
      %764 = vmatpush1.msra.mxu0 0.0
      %765 = vmatprep.subr.mxu0 0.0
      %766 = vmatpush1.msra.mxu0 0.0
      %767 = vmatprep.subr.mxu0 0.0
      %768 = vmatpush1.msra.mxu0 0.0
      %769 = vmatprep.subr.mxu0 0.0
      %770 = vmatpush1.msra.mxu0 0.0
      %771 = vmatprep.subr.mxu0 0.0
      %772 = vmatpush1.msra.mxu0 0.0
      %773 = vmatprep.subr.mxu0 0.0
      %774 = vmatpush1.msra.mxu0 0.0
      %775 = vmatprep.subr.mxu0 0.0
      %776 = vmatpush1.msra.mxu0 0.0
      %777 = vmatprep.subr.mxu0 0.0
      %778 = vmatpush1.msra.mxu0 0.0
      %779 = vmatprep.subr.mxu0 0.0
      %780 = vmatpush1.msra.mxu0 0.0
      %781 = vmatprep.subr.mxu0 0.0
      %782 = vmatpush1.msra.mxu0 0.0
      %783 = vmatprep.mubr.f32.mxu0 0.0
      %784 = vmatmul.mubr.f32.gmra.mrb[0].mxu0 %v575
      %v785 = vpop.f32.mrb[0].mxu0
      %v786 = vadd.f32 %v714, %v785
      %v787 = vpop.f32.mrb[0].mxu0
      %788 = vmatprep.mubr.f32.mxu0 0.0
      %789 = vmatmul.mubr.f32.gmra.mrb[0].mxu0 %v578
      %v790 = vpop.f32.mrb[0].mxu0
      %v791 = vadd.f32 %v714, %v790
      %v792 = vpop.f32.mrb[0].mxu0
      %793 = vmatprep.mubr.f32.mxu0 0.0
      %794 = vmatmul.mubr.f32.gmra.mrb[0].mxu0 %v581
      %v795 = vpop.f32.mrb[0].mxu0
      %v796 = vadd.f32 %v714, %v795
      %v797 = vpop.f32.mrb[0].mxu0
      %798 = vmatprep.mubr.f32.mxu0 0.0
      %799 = vmatmul.mubr.f32.gmra.mrb[0].mxu0 %v584
      %v800 = vpop.f32.mrb[0].mxu0
      %v801 = vadd.f32 %v714, %v800
      %v802 = vpop.f32.mrb[0].mxu0
      %803 = vmatprep.mubr.f32.mxu0 0.0
      %804 = vmatmul.mubr.f32.gmra.mrb[0].mxu0 %v587
      %v805 = vpop.f32.mrb[0].mxu0
      %v806 = vadd.f32 %v714, %v805
      %v807 = vpop.f32.mrb[0].mxu0
      %808 = vmatprep.mubr.f32.mxu0 0.0
      %809 = vmatmul.mubr.f32.gmra.mrb[0].mxu0 %v590
      %v810 = vpop.f32.mrb[0].mxu0
      %v811 = vadd.f32 %v714, %v810
      %v812 = vpop.f32.mrb[0].mxu0
      %813 = vmatprep.mubr.f32.mxu0 0.0
      %814 = vmatmul.mubr.f32.gmra.mrb[0].mxu0 %v593
      %v815 = vpop.f32.mrb[0].mxu0
      %v816 = vadd.f32 %v714, %v815
      %v817 = vpop.f32.mrb[0].mxu0
      %818 = vmatprep.mubr.f32.mxu0 0.0
      %819 = vmatmul.mubr.f32.gmra.mrb[0].mxu0 %v596
      %v820 = vpop.f32.mrb[0].mxu0
      %v821 = vadd.f32 %v714, %v820
      %v822 = vpop.f32.mrb[0].mxu0
      %823 = vdwg.mxu0
      %s824 = scalar_lea.vmem %s429, 32
      %v825 = vld [vmem:[%s824] sm:$0xff]
      %v826 = vld [vmem:[%s824 + $0x8] sm:$0x3]
      %v828 = vlaneseq
      %v829 = vshrl.u32 %v828, 7
      %v830 = vsub.s32 0, %v829
      %v831 = vrot.slane %v552, %v830
      %v834 = vsel %vm598, %v826, 0
      %836 = vmatprep.subr.mxu0 0.0
      %837 = vmatpush1.msra.mxu0 %v825
      %838 = vmatprep.subr.mxu0 0.0
      %839 = vmatpush1.msra.mxu0 %v834
      %840 = vmatprep.subr.mxu0 0.0
      %841 = vmatpush1.msra.mxu0 0.0
      %842 = vmatprep.subr.mxu0 0.0
      %843 = vmatpush1.msra.mxu0 0.0
      %844 = vmatprep.subr.mxu0 0.0
      %845 = vmatpush1.msra.mxu0 0.0
      %846 = vmatprep.subr.mxu0 0.0
      %847 = vmatpush1.msra.mxu0 0.0
      %848 = vmatprep.subr.mxu0 0.0
      %849 = vmatpush1.msra.mxu0 0.0
      %850 = vmatprep.subr.mxu0 0.0
      %851 = vmatpush1.msra.mxu0 0.0
      %852 = vmatprep.subr.mxu0 0.0
      %853 = vmatpush1.msra.mxu0 0.0
      %854 = vmatprep.subr.mxu0 0.0
      %855 = vmatpush1.msra.mxu0 0.0
      %856 = vmatprep.subr.mxu0 0.0
      %857 = vmatpush1.msra.mxu0 0.0
      %858 = vmatprep.subr.mxu0 0.0
      %859 = vmatpush1.msra.mxu0 0.0
      %860 = vmatprep.subr.mxu0 0.0
      %861 = vmatpush1.msra.mxu0 0.0
      %862 = vmatprep.subr.mxu0 0.0
      %863 = vmatpush1.msra.mxu0 0.0
      %864 = vmatprep.subr.mxu0 0.0
      %865 = vmatpush1.msra.mxu0 0.0
      %866 = vmatprep.subr.mxu0 0.0
      %867 = vmatpush1.msra.mxu0 0.0
      %868 = vmatprep.subr.mxu0 0.0
      %869 = vmatpush1.msra.mxu0 0.0
      %870 = vmatprep.subr.mxu0 0.0
      %871 = vmatpush1.msra.mxu0 0.0
      %872 = vmatprep.subr.mxu0 0.0
      %873 = vmatpush1.msra.mxu0 0.0
      %874 = vmatprep.subr.mxu0 0.0
      %875 = vmatpush1.msra.mxu0 0.0
      %876 = vmatprep.subr.mxu0 0.0
      %877 = vmatpush1.msra.mxu0 0.0
      %878 = vmatprep.subr.mxu0 0.0
      %879 = vmatpush1.msra.mxu0 0.0
      %880 = vmatprep.subr.mxu0 0.0
      %881 = vmatpush1.msra.mxu0 0.0
      %882 = vmatprep.subr.mxu0 0.0
      %883 = vmatpush1.msra.mxu0 0.0
      %884 = vmatprep.subr.mxu0 0.0
      %885 = vmatpush1.msra.mxu0 0.0
      %886 = vmatprep.subr.mxu0 0.0
      %887 = vmatpush1.msra.mxu0 0.0
      %888 = vmatprep.subr.mxu0 0.0
      %889 = vmatpush1.msra.mxu0 0.0
      %890 = vmatprep.subr.mxu0 0.0
      %891 = vmatpush1.msra.mxu0 0.0
      %892 = vmatprep.subr.mxu0 0.0
      %893 = vmatpush1.msra.mxu0 0.0
      %894 = vmatprep.subr.mxu0 0.0
      %895 = vmatpush1.msra.mxu0 0.0
      %896 = vmatprep.subr.mxu0 0.0
      %897 = vmatpush1.msra.mxu0 0.0
      %898 = vmatprep.subr.mxu0 0.0
      %899 = vmatpush1.msra.mxu0 0.0
      %900 = vmatprep.mubr.f32.mxu0 0.0
      %901 = vmatmul.mubr.f32.gmra.mrb[0].mxu0 %v575
      %v902 = vpop.f32.mrb[0].mxu0
      %v903 = vadd.f32 %v831, %v902
      %v904 = vpop.f32.mrb[0].mxu0
      %905 = vmatprep.mubr.f32.mxu0 0.0
      %906 = vmatmul.mubr.f32.gmra.mrb[0].mxu0 %v578
      %v907 = vpop.f32.mrb[0].mxu0
      %v908 = vadd.f32 %v831, %v907
      %v909 = vpop.f32.mrb[0].mxu0
      %910 = vmatprep.mubr.f32.mxu0 0.0
      %911 = vmatmul.mubr.f32.gmra.mrb[0].mxu0 %v581
      %v912 = vpop.f32.mrb[0].mxu0
      %v913 = vadd.f32 %v831, %v912
      %v914 = vpop.f32.mrb[0].mxu0
      %915 = vmatprep.mubr.f32.mxu0 0.0
      %916 = vmatmul.mubr.f32.gmra.mrb[0].mxu0 %v584
      %v917 = vpop.f32.mrb[0].mxu0
      %v918 = vadd.f32 %v831, %v917
      %v919 = vpop.f32.mrb[0].mxu0
      %920 = vmatprep.mubr.f32.mxu0 0.0
      %921 = vmatmul.mubr.f32.gmra.mrb[0].mxu0 %v587
      %v922 = vpop.f32.mrb[0].mxu0
      %v923 = vadd.f32 %v831, %v922
      %v924 = vpop.f32.mrb[0].mxu0
      %925 = vmatprep.mubr.f32.mxu0 0.0
      %926 = vmatmul.mubr.f32.gmra.mrb[0].mxu0 %v590
      %v927 = vpop.f32.mrb[0].mxu0
      %v928 = vadd.f32 %v831, %v927
      %v929 = vpop.f32.mrb[0].mxu0
      %930 = vmatprep.mubr.f32.mxu0 0.0
      %931 = vmatmul.mubr.f32.gmra.mrb[0].mxu0 %v593
      %v932 = vpop.f32.mrb[0].mxu0
      %v933 = vadd.f32 %v831, %v932
      %v934 = vpop.f32.mrb[0].mxu0
      %935 = vmatprep.mubr.f32.mxu0 0.0
      %936 = vmatmul.mubr.f32.gmra.mrb[0].mxu0 %v596
      %v937 = vpop.f32.mrb[0].mxu0
      %v938 = vadd.f32 %v831, %v937
      %v939 = vpop.f32.mrb[0].mxu0
      %940 = vdwg.mxu0
      %v941 = vmul.f32 %v669, %v786
      %v942 = vmul.f32 %v674, %v791
      %v943 = vmul.f32 %v679, %v786
      %v944 = vmul.f32 %v684, %v791
      %v945 = vmul.f32 %v689, %v786
      %v946 = vmul.f32 %v694, %v791
      %v947 = vmul.f32 %v699, %v786
      %v948 = vmul.f32 %v704, %v791
      %v949 = vmul.f32 %v669, %v796
      %v950 = vmul.f32 %v674, %v801
      %v951 = vmul.f32 %v679, %v796
      %v952 = vmul.f32 %v684, %v801
      %v953 = vmul.f32 %v689, %v796
      %v954 = vmul.f32 %v694, %v801
      %v955 = vmul.f32 %v699, %v796
      %v956 = vmul.f32 %v704, %v801
      %v957 = vmul.f32 %v669, %v806
      %v958 = vmul.f32 %v674, %v811
      %v959 = vmul.f32 %v679, %v806
      %v960 = vmul.f32 %v684, %v811
      %v961 = vmul.f32 %v689, %v806
      %v962 = vmul.f32 %v694, %v811
      %v963 = vmul.f32 %v699, %v806
      %v964 = vmul.f32 %v704, %v811
      %v965 = vmul.f32 %v669, %v816
      %v966 = vmul.f32 %v674, %v821
      %v967 = vmul.f32 %v679, %v816
      %v968 = vmul.f32 %v684, %v821
      %v969 = vmul.f32 %v689, %v816
      %v970 = vmul.f32 %v694, %v821
      %v971 = vmul.f32 %v699, %v816
      %v972 = vmul.f32 %v704, %v821
      %v973 = vmax.f32 %v941, %v949
      %v974 = vmax.f32 %v942, %v950
      %v975 = vmax.f32 %v943, %v951
      %v976 = vmax.f32 %v944, %v952
      %v977 = vmax.f32 %v945, %v953
      %v978 = vmax.f32 %v946, %v954
      %v979 = vmax.f32 %v947, %v955
      %v980 = vmax.f32 %v948, %v956
      %v981 = vmax.f32 %v973, %v957
      %v982 = vmax.f32 %v974, %v958
      %v983 = vmax.f32 %v975, %v959
      %v984 = vmax.f32 %v976, %v960
      %v985 = vmax.f32 %v977, %v961
      %v986 = vmax.f32 %v978, %v962
      %v987 = vmax.f32 %v979, %v963
      %v988 = vmax.f32 %v980, %v964
      %v989 = vmax.f32 %v981, %v965
      %v990 = vmax.f32 %v982, %v966
      %v991 = vmax.f32 %v983, %v967
      %v992 = vmax.f32 %v984, %v968
      %v993 = vmax.f32 %v985, %v969
      %v994 = vmax.f32 %v986, %v970
      %v995 = vmax.f32 %v987, %v971
      %v996 = vmax.f32 %v988, %v972
      %v997 = vsub.f32 %v941, %v989
      %v998 = vsub.f32 %v942, %v990
      %v999 = vsub.f32 %v943, %v991
      %v1000 = vsub.f32 %v944, %v992
      %v1001 = vsub.f32 %v945, %v993
      %v1002 = vsub.f32 %v946, %v994
      %v1003 = vsub.f32 %v947, %v995
      %v1004 = vsub.f32 %v948, %v996
      %v1005 = vmul.f32 %v997, 1.442695
      %v1006 = vpow.pop %v1005
      %v1007 = vmul.f32 %v998, 1.442695
      %v1008 = vpow.pop %v1007
      %v1009 = vmul.f32 %v999, 1.442695
      %v1010 = vpow.pop %v1009
      %v1011 = vmul.f32 %v1000, 1.442695
      %v1012 = vpow.pop %v1011
      %v1013 = vmul.f32 %v1001, 1.442695
      %v1014 = vpow.pop %v1013
      %v1015 = vmul.f32 %v1002, 1.442695
      %v1016 = vpow.pop %v1015
      %v1017 = vmul.f32 %v1003, 1.442695
      %v1018 = vpow.pop %v1017
      %v1019 = vmul.f32 %v1004, 1.442695
      %v1020 = vpow.pop %v1019
      %v1021 = vadd.f32 %v1006, 0.0
      %v1022 = vadd.f32 %v1008, 0.0
      %v1023 = vadd.f32 %v1010, 0.0
      %v1024 = vadd.f32 %v1012, 0.0
      %v1025 = vadd.f32 %v1014, 0.0
      %v1026 = vadd.f32 %v1016, 0.0
      %v1027 = vadd.f32 %v1018, 0.0
      %v1028 = vadd.f32 %v1020, 0.0
      %v1029 = vmul.f32 %v1006, %v903
      %v1030 = vmul.f32 %v1008, %v908
      %v1031 = vmul.f32 %v1010, %v903
      %v1032 = vmul.f32 %v1012, %v908
      %v1033 = vmul.f32 %v1014, %v903
      %v1034 = vmul.f32 %v1016, %v908
      %v1035 = vmul.f32 %v1018, %v903
      %v1036 = vmul.f32 %v1020, %v908
      %v1037 = vadd.f32 %v1029, 0.0
      %v1038 = vadd.f32 %v1030, 0.0
      %v1039 = vadd.f32 %v1031, 0.0
      %v1040 = vadd.f32 %v1032, 0.0
      %v1041 = vadd.f32 %v1033, 0.0
      %v1042 = vadd.f32 %v1034, 0.0
      %v1043 = vadd.f32 %v1035, 0.0
      %v1044 = vadd.f32 %v1036, 0.0
      %v1045 = vsub.f32 %v949, %v989
      %v1046 = vsub.f32 %v950, %v990
      %v1047 = vsub.f32 %v951, %v991
      %v1048 = vsub.f32 %v952, %v992
      %v1049 = vsub.f32 %v953, %v993
      %v1050 = vsub.f32 %v954, %v994
      %v1051 = vsub.f32 %v955, %v995
      %v1052 = vsub.f32 %v956, %v996
      %v1053 = vmul.f32 %v1045, 1.442695
      %v1054 = vpow.pop %v1053
      %v1055 = vmul.f32 %v1046, 1.442695
      %v1056 = vpow.pop %v1055
      %v1057 = vmul.f32 %v1047, 1.442695
      %v1058 = vpow.pop %v1057
      %v1059 = vmul.f32 %v1048, 1.442695
      %v1060 = vpow.pop %v1059
      %v1061 = vmul.f32 %v1049, 1.442695
      %v1062 = vpow.pop %v1061
      %v1063 = vmul.f32 %v1050, 1.442695
      %v1064 = vpow.pop %v1063
      %v1065 = vmul.f32 %v1051, 1.442695
      %v1066 = vpow.pop %v1065
      %v1067 = vmul.f32 %v1052, 1.442695
      %v1068 = vpow.pop %v1067
      %v1069 = vadd.f32 %v1021, %v1054
      %v1070 = vadd.f32 %v1022, %v1056
      %v1071 = vadd.f32 %v1023, %v1058
      %v1072 = vadd.f32 %v1024, %v1060
      %v1073 = vadd.f32 %v1025, %v1062
      %v1074 = vadd.f32 %v1026, %v1064
      %v1075 = vadd.f32 %v1027, %v1066
      %v1076 = vadd.f32 %v1028, %v1068
      %v1077 = vmul.f32 %v1054, %v913
      %v1078 = vmul.f32 %v1056, %v918
      %v1079 = vmul.f32 %v1058, %v913
      %v1080 = vmul.f32 %v1060, %v918
      %v1081 = vmul.f32 %v1062, %v913
      %v1082 = vmul.f32 %v1064, %v918
      %v1083 = vmul.f32 %v1066, %v913
      %v1084 = vmul.f32 %v1068, %v918
      %v1085 = vadd.f32 %v1037, %v1077
      %v1086 = vadd.f32 %v1038, %v1078
      %v1087 = vadd.f32 %v1039, %v1079
      %v1088 = vadd.f32 %v1040, %v1080
      %v1089 = vadd.f32 %v1041, %v1081
      %v1090 = vadd.f32 %v1042, %v1082
      %v1091 = vadd.f32 %v1043, %v1083
      %v1092 = vadd.f32 %v1044, %v1084
      %v1093 = vsub.f32 %v957, %v989
      %v1094 = vsub.f32 %v958, %v990
      %v1095 = vsub.f32 %v959, %v991
      %v1096 = vsub.f32 %v960, %v992
      %v1097 = vsub.f32 %v961, %v993
      %v1098 = vsub.f32 %v962, %v994
      %v1099 = vsub.f32 %v963, %v995
      %v1100 = vsub.f32 %v964, %v996
      %v1101 = vmul.f32 %v1093, 1.442695
      %v1102 = vpow.pop %v1101
      %v1103 = vmul.f32 %v1094, 1.442695
      %v1104 = vpow.pop %v1103
      %v1105 = vmul.f32 %v1095, 1.442695
      %v1106 = vpow.pop %v1105
      %v1107 = vmul.f32 %v1096, 1.442695
      %v1108 = vpow.pop %v1107
      %v1109 = vmul.f32 %v1097, 1.442695
      %v1110 = vpow.pop %v1109
      %v1111 = vmul.f32 %v1098, 1.442695
      %v1112 = vpow.pop %v1111
      %v1113 = vmul.f32 %v1099, 1.442695
      %v1114 = vpow.pop %v1113
      %v1115 = vmul.f32 %v1100, 1.442695
      %v1116 = vpow.pop %v1115
      %v1117 = vadd.f32 %v1069, %v1102
      %v1118 = vadd.f32 %v1070, %v1104
      %v1119 = vadd.f32 %v1071, %v1106
      %v1120 = vadd.f32 %v1072, %v1108
      %v1121 = vadd.f32 %v1073, %v1110
      %v1122 = vadd.f32 %v1074, %v1112
      %v1123 = vadd.f32 %v1075, %v1114
      %v1124 = vadd.f32 %v1076, %v1116
      %v1125 = vmul.f32 %v1102, %v923
      %v1126 = vmul.f32 %v1104, %v928
      %v1127 = vmul.f32 %v1106, %v923
      %v1128 = vmul.f32 %v1108, %v928
      %v1129 = vmul.f32 %v1110, %v923
      %v1130 = vmul.f32 %v1112, %v928
      %v1131 = vmul.f32 %v1114, %v923
      %v1132 = vmul.f32 %v1116, %v928
      %v1133 = vadd.f32 %v1085, %v1125
      %v1134 = vadd.f32 %v1086, %v1126
      %v1135 = vadd.f32 %v1087, %v1127
      %v1136 = vadd.f32 %v1088, %v1128
      %v1137 = vadd.f32 %v1089, %v1129
      %v1138 = vadd.f32 %v1090, %v1130
      %v1139 = vadd.f32 %v1091, %v1131
      %v1140 = vadd.f32 %v1092, %v1132
      %v1141 = vsub.f32 %v965, %v989
      %v1142 = vsub.f32 %v966, %v990
      %v1143 = vsub.f32 %v967, %v991
      %v1144 = vsub.f32 %v968, %v992
      %v1145 = vsub.f32 %v969, %v993
      %v1146 = vsub.f32 %v970, %v994
      %v1147 = vsub.f32 %v971, %v995
      %v1148 = vsub.f32 %v972, %v996
      %v1149 = vmul.f32 %v1141, 1.442695
      %v1150 = vpow.pop %v1149
      %v1151 = vmul.f32 %v1142, 1.442695
      %v1152 = vpow.pop %v1151
      %v1153 = vmul.f32 %v1143, 1.442695
      %v1154 = vpow.pop %v1153
      %v1155 = vmul.f32 %v1144, 1.442695
      %v1156 = vpow.pop %v1155
      %v1157 = vmul.f32 %v1145, 1.442695
      %v1158 = vpow.pop %v1157
      %v1159 = vmul.f32 %v1146, 1.442695
      %v1160 = vpow.pop %v1159
      %v1161 = vmul.f32 %v1147, 1.442695
      %v1162 = vpow.pop %v1161
      %v1163 = vmul.f32 %v1148, 1.442695
      %v1164 = vpow.pop %v1163
      %v1165 = vadd.f32 %v1117, %v1150
      %v1166 = vadd.f32 %v1118, %v1152
      %v1167 = vadd.f32 %v1119, %v1154
      %v1168 = vadd.f32 %v1120, %v1156
      %v1169 = vadd.f32 %v1121, %v1158
      %v1170 = vadd.f32 %v1122, %v1160
      %v1171 = vadd.f32 %v1123, %v1162
      %v1172 = vadd.f32 %v1124, %v1164
      %v1173 = vmul.f32 %v1150, %v933
      %v1174 = vmul.f32 %v1152, %v938
      %v1175 = vmul.f32 %v1154, %v933
      %v1176 = vmul.f32 %v1156, %v938
      %v1177 = vmul.f32 %v1158, %v933
      %v1178 = vmul.f32 %v1160, %v938
      %v1179 = vmul.f32 %v1162, %v933
      %v1180 = vmul.f32 %v1164, %v938
      %v1181 = vadd.f32 %v1133, %v1173
      %v1182 = vadd.f32 %v1134, %v1174
      %v1183 = vadd.f32 %v1135, %v1175
      %v1184 = vadd.f32 %v1136, %v1176
      %v1185 = vadd.f32 %v1137, %v1177
      %v1186 = vadd.f32 %v1138, %v1178
      %v1187 = vadd.f32 %v1139, %v1179
      %v1188 = vadd.f32 %v1140, %v1180
      %v1189 = vrcp.pop %v1165
      %v1190 = vrcp.pop %v1166
      %v1191 = vrcp.pop %v1167
      %v1192 = vrcp.pop %v1168
      %v1193 = vrcp.pop %v1169
      %v1194 = vrcp.pop %v1170
      %v1195 = vrcp.pop %v1171
      %v1196 = vrcp.pop %v1172
      %v1197 = vmul.f32 %v1181, %v1189
      %v1198 = vmul.f32 %v1182, %v1190
      %v1199 = vmul.f32 %v1183, %v1191
      %v1200 = vmul.f32 %v1184, %v1192
      %v1201 = vmul.f32 %v1185, %v1193
      %v1202 = vmul.f32 %v1186, %v1194
      %v1203 = vmul.f32 %v1187, %v1195
      %v1204 = vmul.f32 %v1188, %v1196
      %s1205 = scalar_lea.vmem %s429, 48
      %v1206 = vld [vmem:[%s1205] sm:$0xff]
      %v1207 = vld [vmem:[%s1205 + $0x8] sm:$0x3]
      %v1209 = vlaneseq
      %v1210 = vshrl.u32 %v1209, 7
      %v1211 = vsub.s32 0, %v1210
      %v1212 = vrot.slane %v554, %v1211
      %v1215 = vsel %vm573, %v1197, 0
      %v1218 = vsel %vm573, %v1198, 0
      %v1221 = vsel %vm573, %v1199, 0
      %v1224 = vsel %vm573, %v1200, 0
      %v1227 = vsel %vm573, %v1201, 0
      %v1230 = vsel %vm573, %v1202, 0
      %v1233 = vsel %vm573, %v1203, 0
      %v1236 = vsel %vm573, %v1204, 0
      %v1239 = vsel %vm598, %v1207, 0
      %1241 = vmatprep.subr.mxu0 0.0
      %1242 = vmatpush1.msra.mxu0 %v1206
      %1243 = vmatprep.subr.mxu0 0.0
      %1244 = vmatpush1.msra.mxu0 %v1239
      %1245 = vmatprep.subr.mxu0 0.0
      %1246 = vmatpush1.msra.mxu0 0.0
      %1247 = vmatprep.subr.mxu0 0.0
      %1248 = vmatpush1.msra.mxu0 0.0
      %1249 = vmatprep.subr.mxu0 0.0
      %1250 = vmatpush1.msra.mxu0 0.0
      %1251 = vmatprep.subr.mxu0 0.0
      %1252 = vmatpush1.msra.mxu0 0.0
      %1253 = vmatprep.subr.mxu0 0.0
      %1254 = vmatpush1.msra.mxu0 0.0
      %1255 = vmatprep.subr.mxu0 0.0
      %1256 = vmatpush1.msra.mxu0 0.0
      %1257 = vmatprep.subr.mxu0 0.0
      %1258 = vmatpush1.msra.mxu0 0.0
      %1259 = vmatprep.subr.mxu0 0.0
      %1260 = vmatpush1.msra.mxu0 0.0
      %1261 = vmatprep.subr.mxu0 0.0
      %1262 = vmatpush1.msra.mxu0 0.0
      %1263 = vmatprep.subr.mxu0 0.0
      %1264 = vmatpush1.msra.mxu0 0.0
      %1265 = vmatprep.subr.mxu0 0.0
      %1266 = vmatpush1.msra.mxu0 0.0
      %1267 = vmatprep.subr.mxu0 0.0
      %1268 = vmatpush1.msra.mxu0 0.0
      %1269 = vmatprep.subr.mxu0 0.0
      %1270 = vmatpush1.msra.mxu0 0.0
      %1271 = vmatprep.subr.mxu0 0.0
      %1272 = vmatpush1.msra.mxu0 0.0
      %1273 = vmatprep.subr.mxu0 0.0
      %1274 = vmatpush1.msra.mxu0 0.0
      %1275 = vmatprep.subr.mxu0 0.0
      %1276 = vmatpush1.msra.mxu0 0.0
      %1277 = vmatprep.subr.mxu0 0.0
      %1278 = vmatpush1.msra.mxu0 0.0
      %1279 = vmatprep.subr.mxu0 0.0
      %1280 = vmatpush1.msra.mxu0 0.0
      %1281 = vmatprep.subr.mxu0 0.0
      %1282 = vmatpush1.msra.mxu0 0.0
      %1283 = vmatprep.subr.mxu0 0.0
      %1284 = vmatpush1.msra.mxu0 0.0
      %1285 = vmatprep.subr.mxu0 0.0
      %1286 = vmatpush1.msra.mxu0 0.0
      %1287 = vmatprep.subr.mxu0 0.0
      %1288 = vmatpush1.msra.mxu0 0.0
      %1289 = vmatprep.subr.mxu0 0.0
      %1290 = vmatpush1.msra.mxu0 0.0
      %1291 = vmatprep.subr.mxu0 0.0
      %1292 = vmatpush1.msra.mxu0 0.0
      %1293 = vmatprep.subr.mxu0 0.0
      %1294 = vmatpush1.msra.mxu0 0.0
      %1295 = vmatprep.subr.mxu0 0.0
      %1296 = vmatpush1.msra.mxu0 0.0
      %1297 = vmatprep.subr.mxu0 0.0
      %1298 = vmatpush1.msra.mxu0 0.0
      %1299 = vmatprep.subr.mxu0 0.0
      %1300 = vmatpush1.msra.mxu0 0.0
      %1301 = vmatprep.subr.mxu0 0.0
      %1302 = vmatpush1.msra.mxu0 0.0
      %1303 = vmatprep.subr.mxu0 0.0
      %1304 = vmatpush1.msra.mxu0 0.0
      %1305 = vmatprep.mubr.f32.mxu0 0.0
      %1306 = vmatmul.mubr.f32.gmra.mrb[0].mxu0 %v1215
      %v1307 = vpop.f32.mrb[0].mxu0
      %v1308 = vadd.f32 %v1212, %v1307
      %v1309 = vpop.f32.mrb[0].mxu0
      %1310 = vmatprep.mubr.f32.mxu0 0.0
      %1311 = vmatmul.mubr.f32.gmra.mrb[0].mxu0 %v1218
      %v1312 = vpop.f32.mrb[0].mxu0
      %v1313 = vadd.f32 %v1212, %v1312
      %v1314 = vpop.f32.mrb[0].mxu0
      %1315 = vmatprep.mubr.f32.mxu0 0.0
      %1316 = vmatmul.mubr.f32.gmra.mrb[0].mxu0 %v1221
      %v1317 = vpop.f32.mrb[0].mxu0
      %v1318 = vadd.f32 %v1212, %v1317
      %v1319 = vpop.f32.mrb[0].mxu0
      %1320 = vmatprep.mubr.f32.mxu0 0.0
      %1321 = vmatmul.mubr.f32.gmra.mrb[0].mxu0 %v1224
      %v1322 = vpop.f32.mrb[0].mxu0
      %v1323 = vadd.f32 %v1212, %v1322
      %v1324 = vpop.f32.mrb[0].mxu0
      %1325 = vmatprep.mubr.f32.mxu0 0.0
      %1326 = vmatmul.mubr.f32.gmra.mrb[0].mxu0 %v1227
      %v1327 = vpop.f32.mrb[0].mxu0
      %v1328 = vadd.f32 %v1212, %v1327
      %v1329 = vpop.f32.mrb[0].mxu0
      %1330 = vmatprep.mubr.f32.mxu0 0.0
      %1331 = vmatmul.mubr.f32.gmra.mrb[0].mxu0 %v1230
      %v1332 = vpop.f32.mrb[0].mxu0
      %v1333 = vadd.f32 %v1212, %v1332
      %v1334 = vpop.f32.mrb[0].mxu0
      %1335 = vmatprep.mubr.f32.mxu0 0.0
      %1336 = vmatmul.mubr.f32.gmra.mrb[0].mxu0 %v1233
      %v1337 = vpop.f32.mrb[0].mxu0
      %v1338 = vadd.f32 %v1212, %v1337
      %v1339 = vpop.f32.mrb[0].mxu0
      %1340 = vmatprep.mubr.f32.mxu0 0.0
      %1341 = vmatmul.mubr.f32.gmra.mrb[0].mxu0 %v1236
      %v1342 = vpop.f32.mrb[0].mxu0
      %v1343 = vadd.f32 %v1212, %v1342
      %v1344 = vpop.f32.mrb[0].mxu0
      %1345 = vdwg.mxu0
      %v1346 = vadd.f32 %v540, %v1308
      %v1347 = vadd.f32 %v541, %v1313
      %v1348 = vadd.f32 %v542, %v1318
      %v1349 = vadd.f32 %v543, %v1323
      %v1350 = vadd.f32 %v544, %v1328
      %v1351 = vadd.f32 %v545, %v1333
      %v1352 = vadd.f32 %v546, %v1338
      %v1353 = vadd.f32 %v547, %v1343
      %v1354 = vsel %vm573, %v1346, 0.0
      %1355 = vadd.xlane.f32.xlu0 %v1354
      %v1356 = vpop.xlane.xlu0 %1355
      %v1357 = vsel %vm573, %v1347, 0.0
      %1358 = vadd.xlane.f32.xlu0 %v1357
      %v1359 = vpop.xlane.xlu0 %1358
      %v1360 = vsel %vm573, %v1348, 0.0
      %1361 = vadd.xlane.f32.xlu0 %v1360
      %v1362 = vpop.xlane.xlu0 %1361
      %v1363 = vsel %vm573, %v1349, 0.0
      %1364 = vadd.xlane.f32.xlu0 %v1363
      %v1365 = vpop.xlane.xlu0 %1364
      %v1366 = vsel %vm573, %v1350, 0.0
      %1367 = vadd.xlane.f32.xlu0 %v1366
      %v1368 = vpop.xlane.xlu0 %1367
      %v1369 = vsel %vm573, %v1351, 0.0
      %1370 = vadd.xlane.f32.xlu0 %v1369
      %v1371 = vpop.xlane.xlu0 %1370
      %v1372 = vsel %vm573, %v1352, 0.0
      %1373 = vadd.xlane.f32.xlu0 %v1372
      %v1374 = vpop.xlane.xlu0 %1373
      %v1375 = vsel %vm573, %v1353, 0.0
      %1376 = vadd.xlane.f32.xlu0 %v1375
      %v1377 = vpop.xlane.xlu0 %1376
      %v1378 = vrcp.pop 10.0
      %v1379 = vmul.f32 %v1356, %v1378
      %v1380 = vmul.f32 %v1359, %v1378
      %v1381 = vmul.f32 %v1362, %v1378
      %v1382 = vmul.f32 %v1365, %v1378
      %v1383 = vmul.f32 %v1368, %v1378
      %v1384 = vmul.f32 %v1371, %v1378
      %v1385 = vmul.f32 %v1374, %v1378
      %v1386 = vmul.f32 %v1377, %v1378
      %v1387 = vsub.f32 %v1346, %v1379
      %v1388 = vsub.f32 %v1347, %v1380
      %v1389 = vsub.f32 %v1348, %v1381
      %v1390 = vsub.f32 %v1349, %v1382
      %v1391 = vsub.f32 %v1350, %v1383
      %v1392 = vsub.f32 %v1351, %v1384
      %v1393 = vsub.f32 %v1352, %v1385
      %v1394 = vsub.f32 %v1353, %v1386
      %v1395 = vmul.f32 %v1387, %v1387
      %v1396 = vmul.f32 %v1388, %v1388
      %v1397 = vmul.f32 %v1389, %v1389
      %v1398 = vmul.f32 %v1390, %v1390
      %v1399 = vmul.f32 %v1391, %v1391
      %v1400 = vmul.f32 %v1392, %v1392
      %v1401 = vmul.f32 %v1393, %v1393
      %v1402 = vmul.f32 %v1394, %v1394
      %v1403 = vsel %vm573, %v1395, 0.0
      %1404 = vadd.xlane.f32.xlu0 %v1403
      %v1405 = vpop.xlane.xlu0 %1404
      %v1406 = vsel %vm573, %v1396, 0.0
      %1407 = vadd.xlane.f32.xlu0 %v1406
      %v1408 = vpop.xlane.xlu0 %1407
      %v1409 = vsel %vm573, %v1397, 0.0
      %1410 = vadd.xlane.f32.xlu0 %v1409
      %v1411 = vpop.xlane.xlu0 %1410
      %v1412 = vsel %vm573, %v1398, 0.0
      %1413 = vadd.xlane.f32.xlu0 %v1412
      %v1414 = vpop.xlane.xlu0 %1413
      %v1415 = vsel %vm573, %v1399, 0.0
      %1416 = vadd.xlane.f32.xlu0 %v1415
      %v1417 = vpop.xlane.xlu0 %1416
      %v1418 = vsel %vm573, %v1400, 0.0
      %1419 = vadd.xlane.f32.xlu0 %v1418
      %v1420 = vpop.xlane.xlu0 %1419
      %v1421 = vsel %vm573, %v1401, 0.0
      %1422 = vadd.xlane.f32.xlu0 %v1421
      %v1423 = vpop.xlane.xlu0 %1422
      %v1424 = vsel %vm573, %v1402, 0.0
      %1425 = vadd.xlane.f32.xlu0 %v1424
      %v1426 = vpop.xlane.xlu0 %1425
      %v1427 = vmul.f32 %v1405, %v1378
      %v1428 = vmul.f32 %v1408, %v1378
      %v1429 = vmul.f32 %v1411, %v1378
      %v1430 = vmul.f32 %v1414, %v1378
      %v1431 = vmul.f32 %v1417, %v1378
      %v1432 = vmul.f32 %v1420, %v1378
      %v1433 = vmul.f32 %v1423, %v1378
      %v1434 = vmul.f32 %v1426, %v1378
      %v1435 = vadd.f32 %v1427, 1e-05
      %v1436 = vadd.f32 %v1428, 1e-05
      %v1437 = vadd.f32 %v1429, 1e-05
      %v1438 = vadd.f32 %v1430, 1e-05
      %v1439 = vadd.f32 %v1431, 1e-05
      %v1440 = vadd.f32 %v1432, 1e-05
      %v1441 = vadd.f32 %v1433, 1e-05
      %v1442 = vadd.f32 %v1434, 1e-05
      %v1443 = vrsqrt.pop %v1435
      %v1444 = vrsqrt.pop %v1436
      %v1445 = vrsqrt.pop %v1437
      %v1446 = vrsqrt.pop %v1438
      %v1447 = vrsqrt.pop %v1439
      %v1448 = vrsqrt.pop %v1440
      %v1449 = vrsqrt.pop %v1441
      %v1450 = vrsqrt.pop %v1442
      %v1451 = vmul.f32 %v1387, %v1443
      %v1452 = vmul.f32 %v1388, %v1444
      %v1453 = vmul.f32 %v1389, %v1445
      %v1454 = vmul.f32 %v1390, %v1446
      %v1455 = vmul.f32 %v1391, %v1447
      %v1456 = vmul.f32 %v1392, %v1448
      %v1457 = vmul.f32 %v1393, %v1449
      %v1458 = vmul.f32 %v1394, %v1450
      %v1460 = vlaneseq
      %v1461 = vshrl.u32 %v1460, 7
      %v1462 = vsub.s32 0, %v1461
      %v1463 = vrot.slane %v558, %v1462
      %v1465 = vmul.f32 %v1451, %v1463
      %v1466 = vmul.f32 %v1452, %v1463
      %v1467 = vmul.f32 %v1453, %v1463
      %v1468 = vmul.f32 %v1454, %v1463
      %v1469 = vmul.f32 %v1455, %v1463
      %v1470 = vmul.f32 %v1456, %v1463
      %v1471 = vmul.f32 %v1457, %v1463
      %v1472 = vmul.f32 %v1458, %v1463
      %v1474 = vlaneseq
      %v1475 = vshrl.u32 %v1474, 7
      %v1476 = vsub.s32 0, %v1475
      %v1477 = vrot.slane %v560, %v1476
      %v1479 = vadd.f32 %v1465, %v1477
      %v1480 = vadd.f32 %v1466, %v1477
      %v1481 = vadd.f32 %v1467, %v1477
      %v1482 = vadd.f32 %v1468, %v1477
      %v1483 = vadd.f32 %v1469, %v1477
      %v1484 = vadd.f32 %v1470, %v1477
      %v1485 = vadd.f32 %v1471, %v1477
      %v1486 = vadd.f32 %v1472, %v1477
      %v1487 = vpack.c.bf16 %v1480, %v1479
      %v1488 = vpack.c.bf16 %v1482, %v1481
      %v1489 = vpack.c.bf16 %v1484, %v1483
      %v1490 = vpack.c.bf16 %v1486, %v1485
      %v1491 = vld [vmem:[%s438] sm:$0xff]
      %v1492 = vld [vmem:[%s438 + $0x8] sm:$0xff]
      %v1493 = vld [vmem:[%s438 + $0x10] sm:$0xff]
      %v1494 = vld [vmem:[%s438 + $0x18] sm:$0xff]
      %v1495 = vld [vmem:[%s438 + $0x20] sm:$0xff]
      %v1496 = vld [vmem:[%s438 + $0x28] sm:$0xff]
      %v1497 = vld [vmem:[%s438 + $0x30] sm:$0xff]
      %v1498 = vld [vmem:[%s438 + $0x38] sm:$0xff]
      %v1499 = vld [vmem:[%s438 + $0x40] sm:$0x11]
      %v1500 = vld [vmem:[%s438 + $0x48] sm:$0x11]
      %v1501 = vld [vmem:[%s438 + $0x50] sm:$0x11]
      %v1502 = vld [vmem:[%s438 + $0x58] sm:$0x11]
      %v1503 = vld [vmem:[%s438 + $0x60] sm:$0x11]
      %v1504 = vld [vmem:[%s438 + $0x68] sm:$0x11]
      %v1505 = vld [vmem:[%s438 + $0x70] sm:$0x11]
      %v1506 = vld [vmem:[%s438 + $0x78] sm:$0x11]
      %v1507 = vld [vmem:[%s442] sm:$0xff]
      %v1508 = vld [vmem:[%s442 + $0x8] sm:$0xff]
      %v1511 = vlaneseq
      %v1512 = vshrl.u32 %v1511, 7
      %v1513 = vsub.s32 0, %v1512
      %v1514 = vrot.slane %v1507, %v1513
      %v1515 = vlaneseq
      %v1516 = vshrl.u32 %v1515, 7
      %v1517 = vsub.s32 1, %v1516
      %v1518 = vrot.slane %v1507, %v1517
      %v1519 = vlaneseq
      %v1520 = vshrl.u32 %v1519, 7
      %v1521 = vsub.s32 2, %v1520
      %v1522 = vrot.slane %v1507, %v1521
      %v1523 = vlaneseq
      %v1524 = vshrl.u32 %v1523, 7
      %v1525 = vsub.s32 3, %v1524
      %v1526 = vrot.slane %v1507, %v1525
      %v1527 = vlaneseq
      %v1528 = vshrl.u32 %v1527, 7
      %v1529 = vsub.s32 4, %v1528
      %v1530 = vrot.slane %v1507, %v1529
      %v1531 = vlaneseq
      %v1532 = vshrl.u32 %v1531, 7
      %v1533 = vsub.s32 5, %v1532
      %v1534 = vrot.slane %v1507, %v1533
      %v1535 = vlaneseq
      %v1536 = vshrl.u32 %v1535, 7
      %v1537 = vsub.s32 6, %v1536
      %v1538 = vrot.slane %v1507, %v1537
      %v1539 = vlaneseq
      %v1540 = vshrl.u32 %v1539, 7
      %v1541 = vsub.s32 7, %v1540
      %v1542 = vrot.slane %v1507, %v1541
      %v1543 = vlaneseq
      %v1544 = vshrl.u32 %v1543, 7
      %v1545 = vsub.s32 0, %v1544
      %v1546 = vrot.slane %v1508, %v1545
      %v1547 = vlaneseq
      %v1548 = vshrl.u32 %v1547, 7
      %v1549 = vsub.s32 1, %v1548
      %v1550 = vrot.slane %v1508, %v1549
      %v1551 = vlaneseq
      %v1552 = vshrl.u32 %v1551, 7
      %v1553 = vsub.s32 2, %v1552
      %v1554 = vrot.slane %v1508, %v1553
      %v1555 = vlaneseq
      %v1556 = vshrl.u32 %v1555, 7
      %v1557 = vsub.s32 3, %v1556
      %v1558 = vrot.slane %v1508, %v1557
      %v1559 = vlaneseq
      %v1560 = vshrl.u32 %v1559, 7
      %v1561 = vsub.s32 4, %v1560
      %v1562 = vrot.slane %v1508, %v1561
      %v1563 = vlaneseq
      %v1564 = vshrl.u32 %v1563, 7
      %v1565 = vsub.s32 5, %v1564
      %v1566 = vrot.slane %v1508, %v1565
      %v1567 = vlaneseq
      %v1568 = vshrl.u32 %v1567, 7
      %v1569 = vsub.s32 6, %v1568
      %v1570 = vrot.slane %v1508, %v1569
      %v1571 = vlaneseq
      %v1572 = vshrl.u32 %v1571, 7
      %v1573 = vsub.s32 7, %v1572
      %v1574 = vrot.slane %v1508, %v1573
      %v1607 = vunpack.c.l.b16 %v1491
      %v1608 = vunpack.c.h.b16 %v1491
      %v1609 = vunpack.c.l.b16 %v1492
      %v1610 = vunpack.c.h.b16 %v1492
      %v1611 = vunpack.c.l.b16 %v1493
      %v1612 = vunpack.c.h.b16 %v1493
      %v1613 = vunpack.c.l.b16 %v1494
      %v1614 = vunpack.c.h.b16 %v1494
      %v1615 = vunpack.c.l.b16 %v1495
      %v1616 = vunpack.c.h.b16 %v1495
      %v1617 = vunpack.c.l.b16 %v1496
      %v1618 = vunpack.c.h.b16 %v1496
      %v1619 = vunpack.c.l.b16 %v1497
      %v1620 = vunpack.c.h.b16 %v1497
      %v1621 = vunpack.c.l.b16 %v1498
      %v1622 = vunpack.c.h.b16 %v1498
      %v1623 = vunpack.c.l.b16 %v1499
      %v1624 = vunpack.c.h.b16 %v1499
      %v1625 = vunpack.c.l.b16 %v1500
      %v1626 = vunpack.c.h.b16 %v1500
      %v1627 = vunpack.c.l.b16 %v1501
      %v1628 = vunpack.c.h.b16 %v1501
      %v1629 = vunpack.c.l.b16 %v1502
      %v1630 = vunpack.c.h.b16 %v1502
      %v1631 = vunpack.c.l.b16 %v1503
      %v1632 = vunpack.c.h.b16 %v1503
      %v1633 = vunpack.c.l.b16 %v1504
      %v1634 = vunpack.c.h.b16 %v1504
      %v1635 = vunpack.c.l.b16 %v1505
      %v1636 = vunpack.c.h.b16 %v1505
      %v1637 = vunpack.c.l.b16 %v1506
      %v1638 = vunpack.c.h.b16 %v1506
      %v1639 = vpack.c.b16 %v1623, %v1607
      %v1640 = vpack.c.b16 %v1624, %v1608
      %v1641 = vpack.c.b16 %v1625, %v1609
      %v1642 = vpack.c.b16 %v1626, %v1610
      %v1643 = vpack.c.b16 %v1627, %v1611
      %v1644 = vpack.c.b16 %v1628, %v1612
      %v1645 = vpack.c.b16 %v1629, %v1613
      %v1646 = vpack.c.b16 %v1630, %v1614
      %v1647 = vpack.c.b16 %v1631, %v1615
      %v1648 = vpack.c.b16 %v1632, %v1616
      %v1649 = vpack.c.b16 %v1633, %v1617
      %v1650 = vpack.c.b16 %v1634, %v1618
      %v1651 = vpack.c.b16 %v1635, %v1619
      %v1652 = vpack.c.b16 %v1636, %v1620
      %v1653 = vpack.c.b16 %v1637, %v1621
      %v1654 = vpack.c.b16 %v1638, %v1622
      %v1656 = vsel %vm573, %v1487, 0
      %v1659 = vsel %vm573, %v1488, 0
      %v1662 = vsel %vm573, %v1489, 0
      %v1665 = vsel %vm573, %v1490, 0
      %vm1667 = vcmask 1044480
      %v1669 = vsel %vm1667, %v1639, 0
      %v1672 = vsel %vm1667, %v1640, 0
      %v1675 = vsel %vm1667, %v1641, 0
      %v1678 = vsel %vm1667, %v1642, 0
      %v1681 = vsel %vm1667, %v1643, 0
      %v1684 = vsel %vm1667, %v1644, 0
      %v1687 = vsel %vm1667, %v1645, 0
      %v1690 = vsel %vm1667, %v1646, 0
      %v1693 = vsel %vm1667, %v1647, 0
      %v1696 = vsel %vm1667, %v1648, 0
      %v1699 = vsel %vm1667, %v1649, 0
      %v1702 = vsel %vm1667, %v1650, 0
      %v1705 = vsel %vm1667, %v1651, 0
      %v1708 = vsel %vm1667, %v1652, 0
      %v1711 = vsel %vm1667, %v1653, 0
      %v1714 = vsel %vm1667, %v1654, 0
      %1716 = vmatprep.subr.bf16.mxu0 %v1672
      %1717 = vmatpush1.bf16.msra.mxu0 %v1669
      %1718 = vmatprep.subr.bf16.mxu0 0
      %1719 = vmatpush1.bf16.msra.mxu0 0
      %1720 = vmatprep.subr.bf16.mxu0 0
      %1721 = vmatpush1.bf16.msra.mxu0 0
      %1722 = vmatprep.subr.bf16.mxu0 0
      %1723 = vmatpush1.bf16.msra.mxu0 0
      %1724 = vmatprep.subr.bf16.mxu0 0
      %1725 = vmatpush1.bf16.msra.mxu0 0
      %1726 = vmatprep.subr.bf16.mxu0 0
      %1727 = vmatpush1.bf16.msra.mxu0 0
      %1728 = vmatprep.subr.bf16.mxu0 0
      %1729 = vmatpush1.bf16.msra.mxu0 0
      %1730 = vmatprep.subr.bf16.mxu0 0
      %1731 = vmatpush1.bf16.msra.mxu0 0
      %1732 = vmatprep.subr.bf16.mxu0 0
      %1733 = vmatpush1.bf16.msra.mxu0 0
      %1734 = vmatprep.subr.bf16.mxu0 0
      %1735 = vmatpush1.bf16.msra.mxu0 0
      %1736 = vmatprep.subr.bf16.mxu0 0
      %1737 = vmatpush1.bf16.msra.mxu0 0
      %1738 = vmatprep.subr.bf16.mxu0 0
      %1739 = vmatpush1.bf16.msra.mxu0 0
      %1740 = vmatprep.subr.bf16.mxu0 0
      %1741 = vmatpush1.bf16.msra.mxu0 0
      %1742 = vmatprep.subr.bf16.mxu0 0
      %1743 = vmatpush1.bf16.msra.mxu0 0
      %1744 = vmatprep.subr.bf16.mxu0 0
      %1745 = vmatpush1.bf16.msra.mxu0 0
      %1746 = vmatprep.subr.bf16.mxu0 0
      %1747 = vmatpush1.bf16.msra.mxu0 0
      %1748 = vmatprep.mubr.bf16.mxu0 0
      %1749 = vmatmul.mubr.bf16.gmra.mrb[0].mxu0 %v1656
      %v1750 = vpop.f32.mrb[0].mxu0
      %v1751 = vadd.f32 %v1514, %v1750
      %v1752 = vpop.f32.mrb[0].mxu0
      %v1753 = vadd.f32 %v1518, %v1752
      %v1754 = vpop.f32.mrb[0].mxu0
      %v1755 = vadd.f32 %v1514, %v1754
      %v1756 = vpop.f32.mrb[0].mxu0
      %v1757 = vadd.f32 %v1518, %v1756
      %1758 = vmatprep.mubr.bf16.mxu0 0
      %1759 = vmatmul.mubr.bf16.gmra.mrb[0].mxu0 %v1659
      %v1760 = vpop.f32.mrb[0].mxu0
      %v1761 = vadd.f32 %v1514, %v1760
      %v1762 = vpop.f32.mrb[0].mxu0
      %v1763 = vadd.f32 %v1518, %v1762
      %v1764 = vpop.f32.mrb[0].mxu0
      %v1765 = vadd.f32 %v1514, %v1764
      %v1766 = vpop.f32.mrb[0].mxu0
      %v1767 = vadd.f32 %v1518, %v1766
      %1768 = vmatprep.mubr.bf16.mxu0 0
      %1769 = vmatmul.mubr.bf16.gmra.mrb[0].mxu0 %v1662
      %v1770 = vpop.f32.mrb[0].mxu0
      %v1771 = vadd.f32 %v1514, %v1770
      %v1772 = vpop.f32.mrb[0].mxu0
      %v1773 = vadd.f32 %v1518, %v1772
      %v1774 = vpop.f32.mrb[0].mxu0
      %v1775 = vadd.f32 %v1514, %v1774
      %v1776 = vpop.f32.mrb[0].mxu0
      %v1777 = vadd.f32 %v1518, %v1776
      %1778 = vmatprep.mubr.bf16.mxu0 0
      %1779 = vmatmul.mubr.bf16.gmra.mrb[0].mxu0 %v1665
      %v1780 = vpop.f32.mrb[0].mxu0
      %v1781 = vadd.f32 %v1514, %v1780
      %v1782 = vpop.f32.mrb[0].mxu0
      %v1783 = vadd.f32 %v1518, %v1782
      %v1784 = vpop.f32.mrb[0].mxu0
      %v1785 = vadd.f32 %v1514, %v1784
      %v1786 = vpop.f32.mrb[0].mxu0
      %v1787 = vadd.f32 %v1518, %v1786
      %1788 = vdwg.mxu0
      %1789 = vmatprep.subr.bf16.mxu0 %v1678
      %1790 = vmatpush1.bf16.msra.mxu0 %v1675
      %1791 = vmatprep.subr.bf16.mxu0 0
      %1792 = vmatpush1.bf16.msra.mxu0 0
      %1793 = vmatprep.subr.bf16.mxu0 0
      %1794 = vmatpush1.bf16.msra.mxu0 0
      %1795 = vmatprep.subr.bf16.mxu0 0
      %1796 = vmatpush1.bf16.msra.mxu0 0
      %1797 = vmatprep.subr.bf16.mxu0 0
      %1798 = vmatpush1.bf16.msra.mxu0 0
      %1799 = vmatprep.subr.bf16.mxu0 0
      %1800 = vmatpush1.bf16.msra.mxu0 0
      %1801 = vmatprep.subr.bf16.mxu0 0
      %1802 = vmatpush1.bf16.msra.mxu0 0
      %1803 = vmatprep.subr.bf16.mxu0 0
      %1804 = vmatpush1.bf16.msra.mxu0 0
      %1805 = vmatprep.subr.bf16.mxu0 0
      %1806 = vmatpush1.bf16.msra.mxu0 0
      %1807 = vmatprep.subr.bf16.mxu0 0
      %1808 = vmatpush1.bf16.msra.mxu0 0
      %1809 = vmatprep.subr.bf16.mxu0 0
      %1810 = vmatpush1.bf16.msra.mxu0 0
      %1811 = vmatprep.subr.bf16.mxu0 0
      %1812 = vmatpush1.bf16.msra.mxu0 0
      %1813 = vmatprep.subr.bf16.mxu0 0
      %1814 = vmatpush1.bf16.msra.mxu0 0
      %1815 = vmatprep.subr.bf16.mxu0 0
      %1816 = vmatpush1.bf16.msra.mxu0 0
      %1817 = vmatprep.subr.bf16.mxu0 0
      %1818 = vmatpush1.bf16.msra.mxu0 0
      %1819 = vmatprep.subr.bf16.mxu0 0
      %1820 = vmatpush1.bf16.msra.mxu0 0
      %1821 = vmatprep.mubr.bf16.mxu0 0
      %1822 = vmatmul.mubr.bf16.gmra.mrb[0].mxu0 %v1656
      %v1823 = vpop.f32.mrb[0].mxu0
      %v1824 = vadd.f32 %v1522, %v1823
      %v1825 = vpop.f32.mrb[0].mxu0
      %v1826 = vadd.f32 %v1526, %v1825
      %v1827 = vpop.f32.mrb[0].mxu0
      %v1828 = vadd.f32 %v1522, %v1827
      %v1829 = vpop.f32.mrb[0].mxu0
      %v1830 = vadd.f32 %v1526, %v1829
      %1831 = vmatprep.mubr.bf16.mxu0 0
      %1832 = vmatmul.mubr.bf16.gmra.mrb[0].mxu0 %v1659
      %v1833 = vpop.f32.mrb[0].mxu0
      %v1834 = vadd.f32 %v1522, %v1833
      %v1835 = vpop.f32.mrb[0].mxu0
      %v1836 = vadd.f32 %v1526, %v1835
      %v1837 = vpop.f32.mrb[0].mxu0
      %v1838 = vadd.f32 %v1522, %v1837
      %v1839 = vpop.f32.mrb[0].mxu0
      %v1840 = vadd.f32 %v1526, %v1839
      %1841 = vmatprep.mubr.bf16.mxu0 0
      %1842 = vmatmul.mubr.bf16.gmra.mrb[0].mxu0 %v1662
      %v1843 = vpop.f32.mrb[0].mxu0
      %v1844 = vadd.f32 %v1522, %v1843
      %v1845 = vpop.f32.mrb[0].mxu0
      %v1846 = vadd.f32 %v1526, %v1845
      %v1847 = vpop.f32.mrb[0].mxu0
      %v1848 = vadd.f32 %v1522, %v1847
      %v1849 = vpop.f32.mrb[0].mxu0
      %v1850 = vadd.f32 %v1526, %v1849
      %1851 = vmatprep.mubr.bf16.mxu0 0
      %1852 = vmatmul.mubr.bf16.gmra.mrb[0].mxu0 %v1665
      %v1853 = vpop.f32.mrb[0].mxu0
      %v1854 = vadd.f32 %v1522, %v1853
      %v1855 = vpop.f32.mrb[0].mxu0
      %v1856 = vadd.f32 %v1526, %v1855
      %v1857 = vpop.f32.mrb[0].mxu0
      %v1858 = vadd.f32 %v1522, %v1857
      %v1859 = vpop.f32.mrb[0].mxu0
      %v1860 = vadd.f32 %v1526, %v1859
      %1861 = vdwg.mxu0
      %1862 = vmatprep.subr.bf16.mxu0 %v1684
      %1863 = vmatpush1.bf16.msra.mxu0 %v1681
      %1864 = vmatprep.subr.bf16.mxu0 0
      %1865 = vmatpush1.bf16.msra.mxu0 0
      %1866 = vmatprep.subr.bf16.mxu0 0
      %1867 = vmatpush1.bf16.msra.mxu0 0
      %1868 = vmatprep.subr.bf16.mxu0 0
      %1869 = vmatpush1.bf16.msra.mxu0 0
      %1870 = vmatprep.subr.bf16.mxu0 0
      %1871 = vmatpush1.bf16.msra.mxu0 0
      %1872 = vmatprep.subr.bf16.mxu0 0
      %1873 = vmatpush1.bf16.msra.mxu0 0
      %1874 = vmatprep.subr.bf16.mxu0 0
      %1875 = vmatpush1.bf16.msra.mxu0 0
      %1876 = vmatprep.subr.bf16.mxu0 0
      %1877 = vmatpush1.bf16.msra.mxu0 0
      %1878 = vmatprep.subr.bf16.mxu0 0
      %1879 = vmatpush1.bf16.msra.mxu0 0
      %1880 = vmatprep.subr.bf16.mxu0 0
      %1881 = vmatpush1.bf16.msra.mxu0 0
      %1882 = vmatprep.subr.bf16.mxu0 0
      %1883 = vmatpush1.bf16.msra.mxu0 0
      %1884 = vmatprep.subr.bf16.mxu0 0
      %1885 = vmatpush1.bf16.msra.mxu0 0
      %1886 = vmatprep.subr.bf16.mxu0 0
      %1887 = vmatpush1.bf16.msra.mxu0 0
      %1888 = vmatprep.subr.bf16.mxu0 0
      %1889 = vmatpush1.bf16.msra.mxu0 0
      %1890 = vmatprep.subr.bf16.mxu0 0
      %1891 = vmatpush1.bf16.msra.mxu0 0
      %1892 = vmatprep.subr.bf16.mxu0 0
      %1893 = vmatpush1.bf16.msra.mxu0 0
      %1894 = vmatprep.mubr.bf16.mxu0 0
      %1895 = vmatmul.mubr.bf16.gmra.mrb[0].mxu0 %v1656
      %v1896 = vpop.f32.mrb[0].mxu0
      %v1897 = vadd.f32 %v1530, %v1896
      %v1898 = vpop.f32.mrb[0].mxu0
      %v1899 = vadd.f32 %v1534, %v1898
      %v1900 = vpop.f32.mrb[0].mxu0
      %v1901 = vadd.f32 %v1530, %v1900
      %v1902 = vpop.f32.mrb[0].mxu0
      %v1903 = vadd.f32 %v1534, %v1902
      %1904 = vmatprep.mubr.bf16.mxu0 0
      %1905 = vmatmul.mubr.bf16.gmra.mrb[0].mxu0 %v1659
      %v1906 = vpop.f32.mrb[0].mxu0
      %v1907 = vadd.f32 %v1530, %v1906
      %v1908 = vpop.f32.mrb[0].mxu0
      %v1909 = vadd.f32 %v1534, %v1908
      %v1910 = vpop.f32.mrb[0].mxu0
      %v1911 = vadd.f32 %v1530, %v1910
      %v1912 = vpop.f32.mrb[0].mxu0
      %v1913 = vadd.f32 %v1534, %v1912
      %1914 = vmatprep.mubr.bf16.mxu0 0
      %1915 = vmatmul.mubr.bf16.gmra.mrb[0].mxu0 %v1662
      %v1916 = vpop.f32.mrb[0].mxu0
      %v1917 = vadd.f32 %v1530, %v1916
      %v1918 = vpop.f32.mrb[0].mxu0
      %v1919 = vadd.f32 %v1534, %v1918
      %v1920 = vpop.f32.mrb[0].mxu0
      %v1921 = vadd.f32 %v1530, %v1920
      %v1922 = vpop.f32.mrb[0].mxu0
      %v1923 = vadd.f32 %v1534, %v1922
      %1924 = vmatprep.mubr.bf16.mxu0 0
      %1925 = vmatmul.mubr.bf16.gmra.mrb[0].mxu0 %v1665
      %v1926 = vpop.f32.mrb[0].mxu0
      %v1927 = vadd.f32 %v1530, %v1926
      %v1928 = vpop.f32.mrb[0].mxu0
      %v1929 = vadd.f32 %v1534, %v1928
      %v1930 = vpop.f32.mrb[0].mxu0
      %v1931 = vadd.f32 %v1530, %v1930
      %v1932 = vpop.f32.mrb[0].mxu0
      %v1933 = vadd.f32 %v1534, %v1932
      %1934 = vdwg.mxu0
      %1935 = vmatprep.subr.bf16.mxu0 %v1690
      %1936 = vmatpush1.bf16.msra.mxu0 %v1687
      %1937 = vmatprep.subr.bf16.mxu0 0
      %1938 = vmatpush1.bf16.msra.mxu0 0
      %1939 = vmatprep.subr.bf16.mxu0 0
      %1940 = vmatpush1.bf16.msra.mxu0 0
      %1941 = vmatprep.subr.bf16.mxu0 0
      %1942 = vmatpush1.bf16.msra.mxu0 0
      %1943 = vmatprep.subr.bf16.mxu0 0
      %1944 = vmatpush1.bf16.msra.mxu0 0
      %1945 = vmatprep.subr.bf16.mxu0 0
      %1946 = vmatpush1.bf16.msra.mxu0 0
      %1947 = vmatprep.subr.bf16.mxu0 0
      %1948 = vmatpush1.bf16.msra.mxu0 0
      %1949 = vmatprep.subr.bf16.mxu0 0
      %1950 = vmatpush1.bf16.msra.mxu0 0
      %1951 = vmatprep.subr.bf16.mxu0 0
      %1952 = vmatpush1.bf16.msra.mxu0 0
      %1953 = vmatprep.subr.bf16.mxu0 0
      %1954 = vmatpush1.bf16.msra.mxu0 0
      %1955 = vmatprep.subr.bf16.mxu0 0
      %1956 = vmatpush1.bf16.msra.mxu0 0
      %1957 = vmatprep.subr.bf16.mxu0 0
      %1958 = vmatpush1.bf16.msra.mxu0 0
      %1959 = vmatprep.subr.bf16.mxu0 0
      %1960 = vmatpush1.bf16.msra.mxu0 0
      %1961 = vmatprep.subr.bf16.mxu0 0
      %1962 = vmatpush1.bf16.msra.mxu0 0
      %1963 = vmatprep.subr.bf16.mxu0 0
      %1964 = vmatpush1.bf16.msra.mxu0 0
      %1965 = vmatprep.subr.bf16.mxu0 0
      %1966 = vmatpush1.bf16.msra.mxu0 0
      %1967 = vmatprep.mubr.bf16.mxu0 0
      %1968 = vmatmul.mubr.bf16.gmra.mrb[0].mxu0 %v1656
      %v1969 = vpop.f32.mrb[0].mxu0
      %v1970 = vadd.f32 %v1538, %v1969
      %v1971 = vpop.f32.mrb[0].mxu0
      %v1972 = vadd.f32 %v1542, %v1971
      %v1973 = vpop.f32.mrb[0].mxu0
      %v1974 = vadd.f32 %v1538, %v1973
      %v1975 = vpop.f32.mrb[0].mxu0
      %v1976 = vadd.f32 %v1542, %v1975
      %1977 = vmatprep.mubr.bf16.mxu0 0
      %1978 = vmatmul.mubr.bf16.gmra.mrb[0].mxu0 %v1659
      %v1979 = vpop.f32.mrb[0].mxu0
      %v1980 = vadd.f32 %v1538, %v1979
      %v1981 = vpop.f32.mrb[0].mxu0
      %v1982 = vadd.f32 %v1542, %v1981
      %v1983 = vpop.f32.mrb[0].mxu0
      %v1984 = vadd.f32 %v1538, %v1983
      %v1985 = vpop.f32.mrb[0].mxu0
      %v1986 = vadd.f32 %v1542, %v1985
      %1987 = vmatprep.mubr.bf16.mxu0 0
      %1988 = vmatmul.mubr.bf16.gmra.mrb[0].mxu0 %v1662
      %v1989 = vpop.f32.mrb[0].mxu0
      %v1990 = vadd.f32 %v1538, %v1989
      %v1991 = vpop.f32.mrb[0].mxu0
      %v1992 = vadd.f32 %v1542, %v1991
      %v1993 = vpop.f32.mrb[0].mxu0
      %v1994 = vadd.f32 %v1538, %v1993
      %v1995 = vpop.f32.mrb[0].mxu0
      %v1996 = vadd.f32 %v1542, %v1995
      %1997 = vmatprep.mubr.bf16.mxu0 0
      %1998 = vmatmul.mubr.bf16.gmra.mrb[0].mxu0 %v1665
      %v1999 = vpop.f32.mrb[0].mxu0
      %v2000 = vadd.f32 %v1538, %v1999
      %v2001 = vpop.f32.mrb[0].mxu0
      %v2002 = vadd.f32 %v1542, %v2001
      %v2003 = vpop.f32.mrb[0].mxu0
      %v2004 = vadd.f32 %v1538, %v2003
      %v2005 = vpop.f32.mrb[0].mxu0
      %v2006 = vadd.f32 %v1542, %v2005
      %2007 = vdwg.mxu0
      %2008 = vmatprep.subr.bf16.mxu0 %v1696
      %2009 = vmatpush1.bf16.msra.mxu0 %v1693
      %2010 = vmatprep.subr.bf16.mxu0 0
      %2011 = vmatpush1.bf16.msra.mxu0 0
      %2012 = vmatprep.subr.bf16.mxu0 0
      %2013 = vmatpush1.bf16.msra.mxu0 0
      %2014 = vmatprep.subr.bf16.mxu0 0
      %2015 = vmatpush1.bf16.msra.mxu0 0
      %2016 = vmatprep.subr.bf16.mxu0 0
      %2017 = vmatpush1.bf16.msra.mxu0 0
      %2018 = vmatprep.subr.bf16.mxu0 0
      %2019 = vmatpush1.bf16.msra.mxu0 0
      %2020 = vmatprep.subr.bf16.mxu0 0
      %2021 = vmatpush1.bf16.msra.mxu0 0
      %2022 = vmatprep.subr.bf16.mxu0 0
      %2023 = vmatpush1.bf16.msra.mxu0 0
      %2024 = vmatprep.subr.bf16.mxu0 0
      %2025 = vmatpush1.bf16.msra.mxu0 0
      %2026 = vmatprep.subr.bf16.mxu0 0
      %2027 = vmatpush1.bf16.msra.mxu0 0
      %2028 = vmatprep.subr.bf16.mxu0 0
      %2029 = vmatpush1.bf16.msra.mxu0 0
      %2030 = vmatprep.subr.bf16.mxu0 0
      %2031 = vmatpush1.bf16.msra.mxu0 0
      %2032 = vmatprep.subr.bf16.mxu0 0
      %2033 = vmatpush1.bf16.msra.mxu0 0
      %2034 = vmatprep.subr.bf16.mxu0 0
      %2035 = vmatpush1.bf16.msra.mxu0 0
      %2036 = vmatprep.subr.bf16.mxu0 0
      %2037 = vmatpush1.bf16.msra.mxu0 0
      %2038 = vmatprep.subr.bf16.mxu0 0
      %2039 = vmatpush1.bf16.msra.mxu0 0
      %2040 = vmatprep.mubr.bf16.mxu0 0
      %2041 = vmatmul.mubr.bf16.gmra.mrb[0].mxu0 %v1656
      %v2042 = vpop.f32.mrb[0].mxu0
      %v2043 = vadd.f32 %v1546, %v2042
      %v2044 = vpop.f32.mrb[0].mxu0
      %v2045 = vadd.f32 %v1550, %v2044
      %v2046 = vpop.f32.mrb[0].mxu0
      %v2047 = vadd.f32 %v1546, %v2046
      %v2048 = vpop.f32.mrb[0].mxu0
      %v2049 = vadd.f32 %v1550, %v2048
      %2050 = vmatprep.mubr.bf16.mxu0 0
      %2051 = vmatmul.mubr.bf16.gmra.mrb[0].mxu0 %v1659
      %v2052 = vpop.f32.mrb[0].mxu0
      %v2053 = vadd.f32 %v1546, %v2052
      %v2054 = vpop.f32.mrb[0].mxu0
      %v2055 = vadd.f32 %v1550, %v2054
      %v2056 = vpop.f32.mrb[0].mxu0
      %v2057 = vadd.f32 %v1546, %v2056
      %v2058 = vpop.f32.mrb[0].mxu0
      %v2059 = vadd.f32 %v1550, %v2058
      %2060 = vmatprep.mubr.bf16.mxu0 0
      %2061 = vmatmul.mubr.bf16.gmra.mrb[0].mxu0 %v1662
      %v2062 = vpop.f32.mrb[0].mxu0
      %v2063 = vadd.f32 %v1546, %v2062
      %v2064 = vpop.f32.mrb[0].mxu0
      %v2065 = vadd.f32 %v1550, %v2064
      %v2066 = vpop.f32.mrb[0].mxu0
      %v2067 = vadd.f32 %v1546, %v2066
      %v2068 = vpop.f32.mrb[0].mxu0
      %v2069 = vadd.f32 %v1550, %v2068
      %2070 = vmatprep.mubr.bf16.mxu0 0
      %2071 = vmatmul.mubr.bf16.gmra.mrb[0].mxu0 %v1665
      %v2072 = vpop.f32.mrb[0].mxu0
      %v2073 = vadd.f32 %v1546, %v2072
      %v2074 = vpop.f32.mrb[0].mxu0
      %v2075 = vadd.f32 %v1550, %v2074
      %v2076 = vpop.f32.mrb[0].mxu0
      %v2077 = vadd.f32 %v1546, %v2076
      %v2078 = vpop.f32.mrb[0].mxu0
      %v2079 = vadd.f32 %v1550, %v2078
      %2080 = vdwg.mxu0
      %2081 = vmatprep.subr.bf16.mxu0 %v1702
      %2082 = vmatpush1.bf16.msra.mxu0 %v1699
      %2083 = vmatprep.subr.bf16.mxu0 0
      %2084 = vmatpush1.bf16.msra.mxu0 0
      %2085 = vmatprep.subr.bf16.mxu0 0
      %2086 = vmatpush1.bf16.msra.mxu0 0
      %2087 = vmatprep.subr.bf16.mxu0 0
      %2088 = vmatpush1.bf16.msra.mxu0 0
      %2089 = vmatprep.subr.bf16.mxu0 0
      %2090 = vmatpush1.bf16.msra.mxu0 0
      %2091 = vmatprep.subr.bf16.mxu0 0
      %2092 = vmatpush1.bf16.msra.mxu0 0
      %2093 = vmatprep.subr.bf16.mxu0 0
      %2094 = vmatpush1.bf16.msra.mxu0 0
      %2095 = vmatprep.subr.bf16.mxu0 0
      %2096 = vmatpush1.bf16.msra.mxu0 0
      %2097 = vmatprep.subr.bf16.mxu0 0
      %2098 = vmatpush1.bf16.msra.mxu0 0
      %2099 = vmatprep.subr.bf16.mxu0 0
      %2100 = vmatpush1.bf16.msra.mxu0 0
      %2101 = vmatprep.subr.bf16.mxu0 0
      %2102 = vmatpush1.bf16.msra.mxu0 0
      %2103 = vmatprep.subr.bf16.mxu0 0
      %2104 = vmatpush1.bf16.msra.mxu0 0
      %2105 = vmatprep.subr.bf16.mxu0 0
      %2106 = vmatpush1.bf16.msra.mxu0 0
      %2107 = vmatprep.subr.bf16.mxu0 0
      %2108 = vmatpush1.bf16.msra.mxu0 0
      %2109 = vmatprep.subr.bf16.mxu0 0
      %2110 = vmatpush1.bf16.msra.mxu0 0
      %2111 = vmatprep.subr.bf16.mxu0 0
      %2112 = vmatpush1.bf16.msra.mxu0 0
      %2113 = vmatprep.mubr.bf16.mxu0 0
      %2114 = vmatmul.mubr.bf16.gmra.mrb[0].mxu0 %v1656
      %v2115 = vpop.f32.mrb[0].mxu0
      %v2116 = vadd.f32 %v1554, %v2115
      %v2117 = vpop.f32.mrb[0].mxu0
      %v2118 = vadd.f32 %v1558, %v2117
      %v2119 = vpop.f32.mrb[0].mxu0
      %v2120 = vadd.f32 %v1554, %v2119
      %v2121 = vpop.f32.mrb[0].mxu0
      %v2122 = vadd.f32 %v1558, %v2121
      %2123 = vmatprep.mubr.bf16.mxu0 0
      %2124 = vmatmul.mubr.bf16.gmra.mrb[0].mxu0 %v1659
      %v2125 = vpop.f32.mrb[0].mxu0
      %v2126 = vadd.f32 %v1554, %v2125
      %v2127 = vpop.f32.mrb[0].mxu0
      %v2128 = vadd.f32 %v1558, %v2127
      %v2129 = vpop.f32.mrb[0].mxu0
      %v2130 = vadd.f32 %v1554, %v2129
      %v2131 = vpop.f32.mrb[0].mxu0
      %v2132 = vadd.f32 %v1558, %v2131
      %2133 = vmatprep.mubr.bf16.mxu0 0
      %2134 = vmatmul.mubr.bf16.gmra.mrb[0].mxu0 %v1662
      %v2135 = vpop.f32.mrb[0].mxu0
      %v2136 = vadd.f32 %v1554, %v2135
      %v2137 = vpop.f32.mrb[0].mxu0
      %v2138 = vadd.f32 %v1558, %v2137
      %v2139 = vpop.f32.mrb[0].mxu0
      %v2140 = vadd.f32 %v1554, %v2139
      %v2141 = vpop.f32.mrb[0].mxu0
      %v2142 = vadd.f32 %v1558, %v2141
      %2143 = vmatprep.mubr.bf16.mxu0 0
      %2144 = vmatmul.mubr.bf16.gmra.mrb[0].mxu0 %v1665
      %v2145 = vpop.f32.mrb[0].mxu0
      %v2146 = vadd.f32 %v1554, %v2145
      %v2147 = vpop.f32.mrb[0].mxu0
      %v2148 = vadd.f32 %v1558, %v2147
      %v2149 = vpop.f32.mrb[0].mxu0
      %v2150 = vadd.f32 %v1554, %v2149
      %v2151 = vpop.f32.mrb[0].mxu0
      %v2152 = vadd.f32 %v1558, %v2151
      %2153 = vdwg.mxu0
      %2154 = vmatprep.subr.bf16.mxu0 %v1708
      %2155 = vmatpush1.bf16.msra.mxu0 %v1705
      %2156 = vmatprep.subr.bf16.mxu0 0
      %2157 = vmatpush1.bf16.msra.mxu0 0
      %2158 = vmatprep.subr.bf16.mxu0 0
      %2159 = vmatpush1.bf16.msra.mxu0 0
      %2160 = vmatprep.subr.bf16.mxu0 0
      %2161 = vmatpush1.bf16.msra.mxu0 0
      %2162 = vmatprep.subr.bf16.mxu0 0
      %2163 = vmatpush1.bf16.msra.mxu0 0
      %2164 = vmatprep.subr.bf16.mxu0 0
      %2165 = vmatpush1.bf16.msra.mxu0 0
      %2166 = vmatprep.subr.bf16.mxu0 0
      %2167 = vmatpush1.bf16.msra.mxu0 0
      %2168 = vmatprep.subr.bf16.mxu0 0
      %2169 = vmatpush1.bf16.msra.mxu0 0
      %2170 = vmatprep.subr.bf16.mxu0 0
      %2171 = vmatpush1.bf16.msra.mxu0 0
      %2172 = vmatprep.subr.bf16.mxu0 0
      %2173 = vmatpush1.bf16.msra.mxu0 0
      %2174 = vmatprep.subr.bf16.mxu0 0
      %2175 = vmatpush1.bf16.msra.mxu0 0
      %2176 = vmatprep.subr.bf16.mxu0 0
      %2177 = vmatpush1.bf16.msra.mxu0 0
      %2178 = vmatprep.subr.bf16.mxu0 0
      %2179 = vmatpush1.bf16.msra.mxu0 0
      %2180 = vmatprep.subr.bf16.mxu0 0
      %2181 = vmatpush1.bf16.msra.mxu0 0
      %2182 = vmatprep.subr.bf16.mxu0 0
      %2183 = vmatpush1.bf16.msra.mxu0 0
      %2184 = vmatprep.subr.bf16.mxu0 0
      %2185 = vmatpush1.bf16.msra.mxu0 0
      %2186 = vmatprep.mubr.bf16.mxu0 0
      %2187 = vmatmul.mubr.bf16.gmra.mrb[0].mxu0 %v1656
      %v2188 = vpop.f32.mrb[0].mxu0
      %v2189 = vadd.f32 %v1562, %v2188
      %v2190 = vpop.f32.mrb[0].mxu0
      %v2191 = vadd.f32 %v1566, %v2190
      %v2192 = vpop.f32.mrb[0].mxu0
      %v2193 = vadd.f32 %v1562, %v2192
      %v2194 = vpop.f32.mrb[0].mxu0
      %v2195 = vadd.f32 %v1566, %v2194
      %2196 = vmatprep.mubr.bf16.mxu0 0
      %2197 = vmatmul.mubr.bf16.gmra.mrb[0].mxu0 %v1659
      %v2198 = vpop.f32.mrb[0].mxu0
      %v2199 = vadd.f32 %v1562, %v2198
      %v2200 = vpop.f32.mrb[0].mxu0
      %v2201 = vadd.f32 %v1566, %v2200
      %v2202 = vpop.f32.mrb[0].mxu0
      %v2203 = vadd.f32 %v1562, %v2202
      %v2204 = vpop.f32.mrb[0].mxu0
      %v2205 = vadd.f32 %v1566, %v2204
      %2206 = vmatprep.mubr.bf16.mxu0 0
      %2207 = vmatmul.mubr.bf16.gmra.mrb[0].mxu0 %v1662
      %v2208 = vpop.f32.mrb[0].mxu0
      %v2209 = vadd.f32 %v1562, %v2208
      %v2210 = vpop.f32.mrb[0].mxu0
      %v2211 = vadd.f32 %v1566, %v2210
      %v2212 = vpop.f32.mrb[0].mxu0
      %v2213 = vadd.f32 %v1562, %v2212
      %v2214 = vpop.f32.mrb[0].mxu0
      %v2215 = vadd.f32 %v1566, %v2214
      %2216 = vmatprep.mubr.bf16.mxu0 0
      %2217 = vmatmul.mubr.bf16.gmra.mrb[0].mxu0 %v1665
      %v2218 = vpop.f32.mrb[0].mxu0
      %v2219 = vadd.f32 %v1562, %v2218
      %v2220 = vpop.f32.mrb[0].mxu0
      %v2221 = vadd.f32 %v1566, %v2220
      %v2222 = vpop.f32.mrb[0].mxu0
      %v2223 = vadd.f32 %v1562, %v2222
      %v2224 = vpop.f32.mrb[0].mxu0
      %v2225 = vadd.f32 %v1566, %v2224
      %2226 = vdwg.mxu0
      %2227 = vmatprep.subr.bf16.mxu0 %v1714
      %2228 = vmatpush1.bf16.msra.mxu0 %v1711
      %2229 = vmatprep.subr.bf16.mxu0 0
      %2230 = vmatpush1.bf16.msra.mxu0 0
      %2231 = vmatprep.subr.bf16.mxu0 0
      %2232 = vmatpush1.bf16.msra.mxu0 0
      %2233 = vmatprep.subr.bf16.mxu0 0
      %2234 = vmatpush1.bf16.msra.mxu0 0
      %2235 = vmatprep.subr.bf16.mxu0 0
      %2236 = vmatpush1.bf16.msra.mxu0 0
      %2237 = vmatprep.subr.bf16.mxu0 0
      %2238 = vmatpush1.bf16.msra.mxu0 0
      %2239 = vmatprep.subr.bf16.mxu0 0
      %2240 = vmatpush1.bf16.msra.mxu0 0
      %2241 = vmatprep.subr.bf16.mxu0 0
      %2242 = vmatpush1.bf16.msra.mxu0 0
      %2243 = vmatprep.subr.bf16.mxu0 0
      %2244 = vmatpush1.bf16.msra.mxu0 0
      %2245 = vmatprep.subr.bf16.mxu0 0
      %2246 = vmatpush1.bf16.msra.mxu0 0
      %2247 = vmatprep.subr.bf16.mxu0 0
      %2248 = vmatpush1.bf16.msra.mxu0 0
      %2249 = vmatprep.subr.bf16.mxu0 0
      %2250 = vmatpush1.bf16.msra.mxu0 0
      %2251 = vmatprep.subr.bf16.mxu0 0
      %2252 = vmatpush1.bf16.msra.mxu0 0
      %2253 = vmatprep.subr.bf16.mxu0 0
      %2254 = vmatpush1.bf16.msra.mxu0 0
      %2255 = vmatprep.subr.bf16.mxu0 0
      %2256 = vmatpush1.bf16.msra.mxu0 0
      %2257 = vmatprep.subr.bf16.mxu0 0
      %2258 = vmatpush1.bf16.msra.mxu0 0
      %2259 = vmatprep.mubr.bf16.mxu0 0
      %2260 = vmatmul.mubr.bf16.gmra.mrb[0].mxu0 %v1656
      %v2261 = vpop.f32.mrb[0].mxu0
      %v2262 = vadd.f32 %v1570, %v2261
      %v2263 = vpop.f32.mrb[0].mxu0
      %v2264 = vadd.f32 %v1574, %v2263
      %v2265 = vpop.f32.mrb[0].mxu0
      %v2266 = vadd.f32 %v1570, %v2265
      %v2267 = vpop.f32.mrb[0].mxu0
      %v2268 = vadd.f32 %v1574, %v2267
      %2269 = vmatprep.mubr.bf16.mxu0 0
      %2270 = vmatmul.mubr.bf16.gmra.mrb[0].mxu0 %v1659
      %v2271 = vpop.f32.mrb[0].mxu0
      %v2272 = vadd.f32 %v1570, %v2271
      %v2273 = vpop.f32.mrb[0].mxu0
      %v2274 = vadd.f32 %v1574, %v2273
      %v2275 = vpop.f32.mrb[0].mxu0
      %v2276 = vadd.f32 %v1570, %v2275
      %v2277 = vpop.f32.mrb[0].mxu0
      %v2278 = vadd.f32 %v1574, %v2277
      %2279 = vmatprep.mubr.bf16.mxu0 0
      %2280 = vmatmul.mubr.bf16.gmra.mrb[0].mxu0 %v1662
      %v2281 = vpop.f32.mrb[0].mxu0
      %v2282 = vadd.f32 %v1570, %v2281
      %v2283 = vpop.f32.mrb[0].mxu0
      %v2284 = vadd.f32 %v1574, %v2283
      %v2285 = vpop.f32.mrb[0].mxu0
      %v2286 = vadd.f32 %v1570, %v2285
      %v2287 = vpop.f32.mrb[0].mxu0
      %v2288 = vadd.f32 %v1574, %v2287
      %2289 = vmatprep.mubr.bf16.mxu0 0
      %2290 = vmatmul.mubr.bf16.gmra.mrb[0].mxu0 %v1665
      %v2291 = vpop.f32.mrb[0].mxu0
      %v2292 = vadd.f32 %v1570, %v2291
      %v2293 = vpop.f32.mrb[0].mxu0
      %v2294 = vadd.f32 %v1574, %v2293
      %v2295 = vpop.f32.mrb[0].mxu0
      %v2296 = vadd.f32 %v1570, %v2295
      %v2297 = vpop.f32.mrb[0].mxu0
      %v2298 = vadd.f32 %v1574, %v2297
      %2299 = vdwg.mxu0
      %v2300 = vmax.f32 %v1751, 0.0
      %v2301 = vmax.f32 %v1753, 0.0
      %v2302 = vmax.f32 %v1824, 0.0
      %v2303 = vmax.f32 %v1826, 0.0
      %v2304 = vmax.f32 %v1897, 0.0
      %v2305 = vmax.f32 %v1899, 0.0
      %v2306 = vmax.f32 %v1970, 0.0
      %v2307 = vmax.f32 %v1972, 0.0
      %v2308 = vmax.f32 %v2043, 0.0
      %v2309 = vmax.f32 %v2045, 0.0
      %v2310 = vmax.f32 %v2116, 0.0
      %v2311 = vmax.f32 %v2118, 0.0
      %v2312 = vmax.f32 %v2189, 0.0
      %v2313 = vmax.f32 %v2191, 0.0
      %v2314 = vmax.f32 %v2262, 0.0
      %v2315 = vmax.f32 %v2264, 0.0
      %v2316 = vmax.f32 %v1755, 0.0
      %v2317 = vmax.f32 %v1757, 0.0
      %v2318 = vmax.f32 %v1828, 0.0
      %v2319 = vmax.f32 %v1830, 0.0
      %v2320 = vmax.f32 %v1901, 0.0
      %v2321 = vmax.f32 %v1903, 0.0
      %v2322 = vmax.f32 %v1974, 0.0
      %v2323 = vmax.f32 %v1976, 0.0
      %v2324 = vmax.f32 %v2047, 0.0
      %v2325 = vmax.f32 %v2049, 0.0
      %v2326 = vmax.f32 %v2120, 0.0
      %v2327 = vmax.f32 %v2122, 0.0
      %v2328 = vmax.f32 %v2193, 0.0
      %v2329 = vmax.f32 %v2195, 0.0
      %v2330 = vmax.f32 %v2266, 0.0
      %v2331 = vmax.f32 %v2268, 0.0
      %v2332 = vmax.f32 %v1761, 0.0
      %v2333 = vmax.f32 %v1763, 0.0
      %v2334 = vmax.f32 %v1834, 0.0
      %v2335 = vmax.f32 %v1836, 0.0
      %v2336 = vmax.f32 %v1907, 0.0
      %v2337 = vmax.f32 %v1909, 0.0
      %v2338 = vmax.f32 %v1980, 0.0
      %v2339 = vmax.f32 %v1982, 0.0
      %v2340 = vmax.f32 %v2053, 0.0
      %v2341 = vmax.f32 %v2055, 0.0
      %v2342 = vmax.f32 %v2126, 0.0
      %v2343 = vmax.f32 %v2128, 0.0
      %v2344 = vmax.f32 %v2199, 0.0
      %v2345 = vmax.f32 %v2201, 0.0
      %v2346 = vmax.f32 %v2272, 0.0
      %v2347 = vmax.f32 %v2274, 0.0
      %v2348 = vmax.f32 %v1765, 0.0
      %v2349 = vmax.f32 %v1767, 0.0
      %v2350 = vmax.f32 %v1838, 0.0
      %v2351 = vmax.f32 %v1840, 0.0
      %v2352 = vmax.f32 %v1911, 0.0
      %v2353 = vmax.f32 %v1913, 0.0
      %v2354 = vmax.f32 %v1984, 0.0
      %v2355 = vmax.f32 %v1986, 0.0
      %v2356 = vmax.f32 %v2057, 0.0
      %v2357 = vmax.f32 %v2059, 0.0
      %v2358 = vmax.f32 %v2130, 0.0
      %v2359 = vmax.f32 %v2132, 0.0
      %v2360 = vmax.f32 %v2203, 0.0
      %v2361 = vmax.f32 %v2205, 0.0
      %v2362 = vmax.f32 %v2276, 0.0
      %v2363 = vmax.f32 %v2278, 0.0
      %v2364 = vmax.f32 %v1771, 0.0
      %v2365 = vmax.f32 %v1773, 0.0
      %v2366 = vmax.f32 %v1844, 0.0
      %v2367 = vmax.f32 %v1846, 0.0
      %v2368 = vmax.f32 %v1917, 0.0
      %v2369 = vmax.f32 %v1919, 0.0
      %v2370 = vmax.f32 %v1990, 0.0
      %v2371 = vmax.f32 %v1992, 0.0
      %v2372 = vmax.f32 %v2063, 0.0
      %v2373 = vmax.f32 %v2065, 0.0
      %v2374 = vmax.f32 %v2136, 0.0
      %v2375 = vmax.f32 %v2138, 0.0
      %v2376 = vmax.f32 %v2209, 0.0
      %v2377 = vmax.f32 %v2211, 0.0
      %v2378 = vmax.f32 %v2282, 0.0
      %v2379 = vmax.f32 %v2284, 0.0
      %v2380 = vmax.f32 %v1775, 0.0
      %v2381 = vmax.f32 %v1777, 0.0
      %v2382 = vmax.f32 %v1848, 0.0
      %v2383 = vmax.f32 %v1850, 0.0
      %v2384 = vmax.f32 %v1921, 0.0
      %v2385 = vmax.f32 %v1923, 0.0
      %v2386 = vmax.f32 %v1994, 0.0
      %v2387 = vmax.f32 %v1996, 0.0
      %v2388 = vmax.f32 %v2067, 0.0
      %v2389 = vmax.f32 %v2069, 0.0
      %v2390 = vmax.f32 %v2140, 0.0
      %v2391 = vmax.f32 %v2142, 0.0
      %v2392 = vmax.f32 %v2213, 0.0
      %v2393 = vmax.f32 %v2215, 0.0
      %v2394 = vmax.f32 %v2286, 0.0
      %v2395 = vmax.f32 %v2288, 0.0
      %v2396 = vmax.f32 %v1781, 0.0
      %v2397 = vmax.f32 %v1783, 0.0
      %v2398 = vmax.f32 %v1854, 0.0
      %v2399 = vmax.f32 %v1856, 0.0
      %v2400 = vmax.f32 %v1927, 0.0
      %v2401 = vmax.f32 %v1929, 0.0
      %v2402 = vmax.f32 %v2000, 0.0
      %v2403 = vmax.f32 %v2002, 0.0
      %v2404 = vmax.f32 %v2073, 0.0
      %v2405 = vmax.f32 %v2075, 0.0
      %v2406 = vmax.f32 %v2146, 0.0
      %v2407 = vmax.f32 %v2148, 0.0
      %v2408 = vmax.f32 %v2219, 0.0
      %v2409 = vmax.f32 %v2221, 0.0
      %v2410 = vmax.f32 %v2292, 0.0
      %v2411 = vmax.f32 %v2294, 0.0
      %v2412 = vmax.f32 %v1785, 0.0
      %v2413 = vmax.f32 %v1787, 0.0
      %v2414 = vmax.f32 %v1858, 0.0
      %v2415 = vmax.f32 %v1860, 0.0
      %v2416 = vmax.f32 %v1931, 0.0
      %v2417 = vmax.f32 %v1933, 0.0
      %v2418 = vmax.f32 %v2004, 0.0
      %v2419 = vmax.f32 %v2006, 0.0
      %v2420 = vmax.f32 %v2077, 0.0
      %v2421 = vmax.f32 %v2079, 0.0
      %v2422 = vmax.f32 %v2150, 0.0
      %v2423 = vmax.f32 %v2152, 0.0
      %v2424 = vmax.f32 %v2223, 0.0
      %v2425 = vmax.f32 %v2225, 0.0
      %v2426 = vmax.f32 %v2296, 0.0
      %v2427 = vmax.f32 %v2298, 0.0
      %v2428 = vpack.c.bf16 %v2316, %v2300
      %v2429 = vpack.c.bf16 %v2317, %v2301
      %v2430 = vpack.c.bf16 %v2318, %v2302
      %v2431 = vpack.c.bf16 %v2319, %v2303
      %v2432 = vpack.c.bf16 %v2320, %v2304
      %v2433 = vpack.c.bf16 %v2321, %v2305
      %v2434 = vpack.c.bf16 %v2322, %v2306
      %v2435 = vpack.c.bf16 %v2323, %v2307
      %v2436 = vpack.c.bf16 %v2324, %v2308
      %v2437 = vpack.c.bf16 %v2325, %v2309
      %v2438 = vpack.c.bf16 %v2326, %v2310
      %v2439 = vpack.c.bf16 %v2327, %v2311
      %v2440 = vpack.c.bf16 %v2328, %v2312
      %v2441 = vpack.c.bf16 %v2329, %v2313
      %v2442 = vpack.c.bf16 %v2330, %v2314
      %v2443 = vpack.c.bf16 %v2331, %v2315
      %v2444 = vpack.c.bf16 %v2348, %v2332
      %v2445 = vpack.c.bf16 %v2349, %v2333
      %v2446 = vpack.c.bf16 %v2350, %v2334
      %v2447 = vpack.c.bf16 %v2351, %v2335
      %v2448 = vpack.c.bf16 %v2352, %v2336
      %v2449 = vpack.c.bf16 %v2353, %v2337
      %v2450 = vpack.c.bf16 %v2354, %v2338
      %v2451 = vpack.c.bf16 %v2355, %v2339
      %v2452 = vpack.c.bf16 %v2356, %v2340
      %v2453 = vpack.c.bf16 %v2357, %v2341
      %v2454 = vpack.c.bf16 %v2358, %v2342
      %v2455 = vpack.c.bf16 %v2359, %v2343
      %v2456 = vpack.c.bf16 %v2360, %v2344
      %v2457 = vpack.c.bf16 %v2361, %v2345
      %v2458 = vpack.c.bf16 %v2362, %v2346
      %v2459 = vpack.c.bf16 %v2363, %v2347
      %v2460 = vpack.c.bf16 %v2380, %v2364
      %v2461 = vpack.c.bf16 %v2381, %v2365
      %v2462 = vpack.c.bf16 %v2382, %v2366
      %v2463 = vpack.c.bf16 %v2383, %v2367
      %v2464 = vpack.c.bf16 %v2384, %v2368
      %v2465 = vpack.c.bf16 %v2385, %v2369
      %v2466 = vpack.c.bf16 %v2386, %v2370
      %v2467 = vpack.c.bf16 %v2387, %v2371
      %v2468 = vpack.c.bf16 %v2388, %v2372
      %v2469 = vpack.c.bf16 %v2389, %v2373
      %v2470 = vpack.c.bf16 %v2390, %v2374
      %v2471 = vpack.c.bf16 %v2391, %v2375
      %v2472 = vpack.c.bf16 %v2392, %v2376
      %v2473 = vpack.c.bf16 %v2393, %v2377
      %v2474 = vpack.c.bf16 %v2394, %v2378
      %v2475 = vpack.c.bf16 %v2395, %v2379
      %v2476 = vpack.c.bf16 %v2412, %v2396
      %v2477 = vpack.c.bf16 %v2413, %v2397
      %v2478 = vpack.c.bf16 %v2414, %v2398
      %v2479 = vpack.c.bf16 %v2415, %v2399
      %v2480 = vpack.c.bf16 %v2416, %v2400
      %v2481 = vpack.c.bf16 %v2417, %v2401
      %v2482 = vpack.c.bf16 %v2418, %v2402
      %v2483 = vpack.c.bf16 %v2419, %v2403
      %v2484 = vpack.c.bf16 %v2420, %v2404
      %v2485 = vpack.c.bf16 %v2421, %v2405
      %v2486 = vpack.c.bf16 %v2422, %v2406
      %v2487 = vpack.c.bf16 %v2423, %v2407
      %v2488 = vpack.c.bf16 %v2424, %v2408
      %v2489 = vpack.c.bf16 %v2425, %v2409
      %v2490 = vpack.c.bf16 %v2426, %v2410
      %v2491 = vpack.c.bf16 %v2427, %v2411
      %v2492 = vld [vmem:[%s447] sm:$0xf]
      %v2493 = vld [vmem:[%s447 + $0x4] sm:$0xf]
      %v2494 = vld [vmem:[%s447 + $0x8] sm:$0xf]
      %v2495 = vld [vmem:[%s447 + $0xc] sm:$0xf]
      %v2496 = vld [vmem:[%s447 + $0x10] sm:$0xf]
      %v2497 = vld [vmem:[%s447 + $0x14] sm:$0xf]
      %v2498 = vld [vmem:[%s447 + $0x18] sm:$0xf]
      %v2499 = vld [vmem:[%s447 + $0x1c] sm:$0xf]
      %v2500 = vld [vmem:[%s447 + $0x20] sm:$0xf]
      %v2501 = vld [vmem:[%s447 + $0x24] sm:$0xf]
      %v2502 = vld [vmem:[%s447 + $0x28] sm:$0xf]
      %v2503 = vld [vmem:[%s447 + $0x2c] sm:$0xf]
      %v2504 = vld [vmem:[%s447 + $0x30] sm:$0xf]
      %v2505 = vld [vmem:[%s447 + $0x34] sm:$0xf]
      %v2506 = vld [vmem:[%s447 + $0x38] sm:$0xf]
      %v2507 = vld [vmem:[%s447 + $0x3c] sm:$0xf]
      %v2508 = vld [vmem:[%s447 + $0x40] sm:$0xf]
      %v2509 = vld [vmem:[%s447 + $0x44] sm:$0xf]
      %v2510 = vld [vmem:[%s447 + $0x48] sm:$0xf]
      %v2511 = vld [vmem:[%s447 + $0x4c] sm:$0xf]
      %v2512 = vld [vmem:[%s447 + $0x50] sm:$0xf]
      %v2513 = vld [vmem:[%s447 + $0x54] sm:$0xf]
      %v2514 = vld [vmem:[%s447 + $0x58] sm:$0xf]
      %v2515 = vld [vmem:[%s447 + $0x5c] sm:$0xf]
      %v2516 = vld [vmem:[%s447 + $0x60] sm:$0xf]
      %v2517 = vld [vmem:[%s447 + $0x64] sm:$0xf]
      %v2518 = vld [vmem:[%s447 + $0x68] sm:$0xf]
      %v2519 = vld [vmem:[%s447 + $0x6c] sm:$0xf]
      %v2520 = vld [vmem:[%s447 + $0x70] sm:$0xf]
      %v2521 = vld [vmem:[%s447 + $0x74] sm:$0xf]
      %v2522 = vld [vmem:[%s447 + $0x78] sm:$0xf]
      %v2523 = vld [vmem:[%s447 + $0x7c] sm:$0xf]
      %v2524 = vld [vmem:[%s447 + $0x80] sm:$0xf]
      %v2525 = vld [vmem:[%s447 + $0x84] sm:$0xf]
      %v2526 = vld [vmem:[%s447 + $0x88] sm:$0xf]
      %v2527 = vld [vmem:[%s447 + $0x8c] sm:$0xf]
      %v2528 = vld [vmem:[%s447 + $0x90] sm:$0xf]
      %v2529 = vld [vmem:[%s447 + $0x94] sm:$0xf]
      %v2530 = vld [vmem:[%s447 + $0x98] sm:$0xf]
      %v2531 = vld [vmem:[%s447 + $0x9c] sm:$0xf]
      %v2532 = vld [vmem:[%s447 + $0xa0] sm:$0xf]
      %v2533 = vld [vmem:[%s447 + $0xa4] sm:$0xf]
      %v2534 = vld [vmem:[%s447 + $0xa8] sm:$0xf]
      %v2535 = vld [vmem:[%s447 + $0xac] sm:$0xf]
      %v2536 = vld [vmem:[%s447 + $0xb0] sm:$0xf]
      %v2537 = vld [vmem:[%s447 + $0xb4] sm:$0xf]
      %v2538 = vld [vmem:[%s447 + $0xb8] sm:$0xf]
      %v2539 = vld [vmem:[%s447 + $0xbc] sm:$0xf]
      %v2540 = vld [vmem:[%s447 + $0xc0] sm:$0xf]
      %v2541 = vld [vmem:[%s447 + $0xc4] sm:$0xf]
      %v2542 = vld [vmem:[%s447 + $0xc8] sm:$0xf]
      %v2543 = vld [vmem:[%s447 + $0xcc] sm:$0xf]
      %v2544 = vld [vmem:[%s447 + $0xd0] sm:$0xf]
      %v2545 = vld [vmem:[%s447 + $0xd4] sm:$0xf]
      %v2546 = vld [vmem:[%s447 + $0xd8] sm:$0xf]
      %v2547 = vld [vmem:[%s447 + $0xdc] sm:$0xf]
      %v2548 = vld [vmem:[%s447 + $0xe0] sm:$0xf]
      %v2549 = vld [vmem:[%s447 + $0xe4] sm:$0xf]
      %v2550 = vld [vmem:[%s447 + $0xe8] sm:$0xf]
      %v2551 = vld [vmem:[%s447 + $0xec] sm:$0xf]
      %v2552 = vld [vmem:[%s447 + $0xf0] sm:$0xf]
      %v2553 = vld [vmem:[%s447 + $0xf4] sm:$0xf]
      %v2554 = vld [vmem:[%s447 + $0xf8] sm:$0xf]
      %v2555 = vld [vmem:[%s447 + $0xfc] sm:$0xf]
      %v2556 = vld [vmem:[%s447 + $0x100] sm:$0xf]
      %v2557 = vld [vmem:[%s447 + $0x104] sm:$0xf]
      %v2558 = vld [vmem:[%s447 + $0x108] sm:$0xf]
      %v2559 = vld [vmem:[%s447 + $0x10c] sm:$0xf]
      %v2560 = vld [vmem:[%s447 + $0x110] sm:$0xf]
      %v2561 = vld [vmem:[%s447 + $0x114] sm:$0xf]
      %v2562 = vld [vmem:[%s447 + $0x118] sm:$0xf]
      %v2563 = vld [vmem:[%s447 + $0x11c] sm:$0xf]
      %v2564 = vld [vmem:[%s447 + $0x120] sm:$0xf]
      %v2565 = vld [vmem:[%s447 + $0x124] sm:$0xf]
      %v2566 = vld [vmem:[%s447 + $0x128] sm:$0xf]
      %v2567 = vld [vmem:[%s447 + $0x12c] sm:$0xf]
      %v2568 = vld [vmem:[%s447 + $0x130] sm:$0xf]
      %v2569 = vld [vmem:[%s447 + $0x134] sm:$0xf]
      %v2570 = vld [vmem:[%s447 + $0x138] sm:$0xf]
      %v2571 = vld [vmem:[%s447 + $0x13c] sm:$0xf]
      %v2572 = vld [vmem:[%s447 + $0x140] sm:$0xf]
      %v2573 = vld [vmem:[%s447 + $0x144] sm:$0xf]
      %v2574 = vld [vmem:[%s447 + $0x148] sm:$0xf]
      %v2575 = vld [vmem:[%s447 + $0x14c] sm:$0xf]
      %v2576 = vld [vmem:[%s447 + $0x150] sm:$0xf]
      %v2577 = vld [vmem:[%s447 + $0x154] sm:$0xf]
      %v2578 = vld [vmem:[%s447 + $0x158] sm:$0xf]
      %v2579 = vld [vmem:[%s447 + $0x15c] sm:$0xf]
      %v2580 = vld [vmem:[%s447 + $0x160] sm:$0xf]
      %v2581 = vld [vmem:[%s447 + $0x164] sm:$0xf]
      %v2582 = vld [vmem:[%s447 + $0x168] sm:$0xf]
      %v2583 = vld [vmem:[%s447 + $0x16c] sm:$0xf]
      %v2584 = vld [vmem:[%s447 + $0x170] sm:$0xf]
      %v2585 = vld [vmem:[%s447 + $0x174] sm:$0xf]
      %v2586 = vld [vmem:[%s447 + $0x178] sm:$0xf]
      %v2587 = vld [vmem:[%s447 + $0x17c] sm:$0xf]
      %v2588 = vld [vmem:[%s447 + $0x180] sm:$0xf]
      %v2589 = vld [vmem:[%s447 + $0x184] sm:$0xf]
      %v2590 = vld [vmem:[%s447 + $0x188] sm:$0xf]
      %v2591 = vld [vmem:[%s447 + $0x18c] sm:$0xf]
      %v2592 = vld [vmem:[%s447 + $0x190] sm:$0xf]
      %v2593 = vld [vmem:[%s447 + $0x194] sm:$0xf]
      %v2594 = vld [vmem:[%s447 + $0x198] sm:$0xf]
      %v2595 = vld [vmem:[%s447 + $0x19c] sm:$0xf]
      %v2596 = vld [vmem:[%s447 + $0x1a0] sm:$0xf]
      %v2597 = vld [vmem:[%s447 + $0x1a4] sm:$0xf]
      %v2598 = vld [vmem:[%s447 + $0x1a8] sm:$0xf]
      %v2599 = vld [vmem:[%s447 + $0x1ac] sm:$0xf]
      %v2600 = vld [vmem:[%s447 + $0x1b0] sm:$0xf]
      %v2601 = vld [vmem:[%s447 + $0x1b4] sm:$0xf]
      %v2602 = vld [vmem:[%s447 + $0x1b8] sm:$0xf]
      %v2603 = vld [vmem:[%s447 + $0x1bc] sm:$0xf]
      %v2604 = vld [vmem:[%s447 + $0x1c0] sm:$0xf]
      %v2605 = vld [vmem:[%s447 + $0x1c4] sm:$0xf]
      %v2606 = vld [vmem:[%s447 + $0x1c8] sm:$0xf]
      %v2607 = vld [vmem:[%s447 + $0x1cc] sm:$0xf]
      %v2608 = vld [vmem:[%s447 + $0x1d0] sm:$0xf]
      %v2609 = vld [vmem:[%s447 + $0x1d4] sm:$0xf]
      %v2610 = vld [vmem:[%s447 + $0x1d8] sm:$0xf]
      %v2611 = vld [vmem:[%s447 + $0x1dc] sm:$0xf]
      %v2612 = vld [vmem:[%s447 + $0x1e0] sm:$0xf]
      %v2613 = vld [vmem:[%s447 + $0x1e4] sm:$0xf]
      %v2614 = vld [vmem:[%s447 + $0x1e8] sm:$0xf]
      %v2615 = vld [vmem:[%s447 + $0x1ec] sm:$0xf]
      %v2616 = vld [vmem:[%s447 + $0x1f0] sm:$0xf]
      %v2617 = vld [vmem:[%s447 + $0x1f4] sm:$0xf]
      %v2618 = vld [vmem:[%s447 + $0x1f8] sm:$0xf]
      %v2619 = vld [vmem:[%s447 + $0x1fc] sm:$0xf]
      %v2620 = vld [vmem:[%s447 + $0x200] sm:$0xf]
      %v2621 = vld [vmem:[%s447 + $0x204] sm:$0xf]
      %v2622 = vld [vmem:[%s447 + $0x208] sm:$0xf]
      %v2623 = vld [vmem:[%s447 + $0x20c] sm:$0xf]
      %v2624 = vld [vmem:[%s447 + $0x210] sm:$0xf]
      %v2625 = vld [vmem:[%s447 + $0x214] sm:$0xf]
      %v2626 = vld [vmem:[%s447 + $0x218] sm:$0xf]
      %v2627 = vld [vmem:[%s447 + $0x21c] sm:$0xf]
      %v2628 = vld [vmem:[%s447 + $0x220] sm:$0xf]
      %v2629 = vld [vmem:[%s447 + $0x224] sm:$0xf]
      %v2630 = vld [vmem:[%s447 + $0x228] sm:$0xf]
      %v2631 = vld [vmem:[%s447 + $0x22c] sm:$0xf]
      %v2632 = vld [vmem:[%s447 + $0x230] sm:$0xf]
      %v2633 = vld [vmem:[%s447 + $0x234] sm:$0xf]
      %v2634 = vld [vmem:[%s447 + $0x238] sm:$0xf]
      %v2635 = vld [vmem:[%s447 + $0x23c] sm:$0xf]
      %v2636 = vld [vmem:[%s447 + $0x240] sm:$0xf]
      %v2637 = vld [vmem:[%s447 + $0x244] sm:$0xf]
      %v2638 = vld [vmem:[%s447 + $0x248] sm:$0xf]
      %v2639 = vld [vmem:[%s447 + $0x24c] sm:$0xf]
      %v2640 = vld [vmem:[%s447 + $0x250] sm:$0xf]
      %v2641 = vld [vmem:[%s447 + $0x254] sm:$0xf]
      %v2642 = vld [vmem:[%s447 + $0x258] sm:$0xf]
      %v2643 = vld [vmem:[%s447 + $0x25c] sm:$0xf]
      %v2644 = vld [vmem:[%s447 + $0x260] sm:$0xf]
      %v2645 = vld [vmem:[%s447 + $0x264] sm:$0xf]
      %v2646 = vld [vmem:[%s447 + $0x268] sm:$0xf]
      %v2647 = vld [vmem:[%s447 + $0x26c] sm:$0xf]
      %v2648 = vld [vmem:[%s447 + $0x270] sm:$0xf]
      %v2649 = vld [vmem:[%s447 + $0x274] sm:$0xf]
      %v2650 = vld [vmem:[%s447 + $0x278] sm:$0xf]
      %v2651 = vld [vmem:[%s447 + $0x27c] sm:$0xf]
      %v2652 = vld [vmem:[%s447 + $0x280] sm:$0xf]
      %v2653 = vld [vmem:[%s447 + $0x284] sm:$0xf]
      %v2654 = vld [vmem:[%s447 + $0x288] sm:$0xf]
      %v2655 = vld [vmem:[%s447 + $0x28c] sm:$0xf]
      %v2656 = vld [vmem:[%s447 + $0x290] sm:$0xf]
      %v2657 = vld [vmem:[%s447 + $0x294] sm:$0xf]
      %v2658 = vld [vmem:[%s447 + $0x298] sm:$0xf]
      %v2659 = vld [vmem:[%s447 + $0x29c] sm:$0xf]
      %v2660 = vld [vmem:[%s447 + $0x2a0] sm:$0xf]
      %v2661 = vld [vmem:[%s447 + $0x2a4] sm:$0xf]
      %v2662 = vld [vmem:[%s447 + $0x2a8] sm:$0xf]
      %v2663 = vld [vmem:[%s447 + $0x2ac] sm:$0xf]
      %v2664 = vld [vmem:[%s447 + $0x2b0] sm:$0xf]
      %v2665 = vld [vmem:[%s447 + $0x2b4] sm:$0xf]
      %v2666 = vld [vmem:[%s447 + $0x2b8] sm:$0xf]
      %v2667 = vld [vmem:[%s447 + $0x2bc] sm:$0xf]
      %v2668 = vld [vmem:[%s447 + $0x2c0] sm:$0xf]
      %v2669 = vld [vmem:[%s447 + $0x2c4] sm:$0xf]
      %v2670 = vld [vmem:[%s447 + $0x2c8] sm:$0xf]
      %v2671 = vld [vmem:[%s447 + $0x2cc] sm:$0xf]
      %v2672 = vld [vmem:[%s447 + $0x2d0] sm:$0xf]
      %v2673 = vld [vmem:[%s447 + $0x2d4] sm:$0xf]
      %v2674 = vld [vmem:[%s447 + $0x2d8] sm:$0xf]
      %v2675 = vld [vmem:[%s447 + $0x2dc] sm:$0xf]
      %v2676 = vld [vmem:[%s447 + $0x2e0] sm:$0xf]
      %v2677 = vld [vmem:[%s447 + $0x2e4] sm:$0xf]
      %v2678 = vld [vmem:[%s447 + $0x2e8] sm:$0xf]
      %v2679 = vld [vmem:[%s447 + $0x2ec] sm:$0xf]
      %v2680 = vld [vmem:[%s447 + $0x2f0] sm:$0xf]
      %v2681 = vld [vmem:[%s447 + $0x2f4] sm:$0xf]
      %v2682 = vld [vmem:[%s447 + $0x2f8] sm:$0xf]
      %v2683 = vld [vmem:[%s447 + $0x2fc] sm:$0xf]
      %v2684 = vld [vmem:[%s447 + $0x300] sm:$0xf]
      %v2685 = vld [vmem:[%s447 + $0x304] sm:$0xf]
      %v2686 = vld [vmem:[%s447 + $0x308] sm:$0xf]
      %v2687 = vld [vmem:[%s447 + $0x30c] sm:$0xf]
      %v2688 = vld [vmem:[%s447 + $0x310] sm:$0xf]
      %v2689 = vld [vmem:[%s447 + $0x314] sm:$0xf]
      %v2690 = vld [vmem:[%s447 + $0x318] sm:$0xf]
      %v2691 = vld [vmem:[%s447 + $0x31c] sm:$0xf]
      %v2692 = vld [vmem:[%s447 + $0x320] sm:$0xf]
      %v2693 = vld [vmem:[%s447 + $0x324] sm:$0xf]
      %v2694 = vld [vmem:[%s447 + $0x328] sm:$0xf]
      %v2695 = vld [vmem:[%s447 + $0x32c] sm:$0xf]
      %v2696 = vld [vmem:[%s447 + $0x330] sm:$0xf]
      %v2697 = vld [vmem:[%s447 + $0x334] sm:$0xf]
      %v2698 = vld [vmem:[%s447 + $0x338] sm:$0xf]
      %v2699 = vld [vmem:[%s447 + $0x33c] sm:$0xf]
      %v2700 = vld [vmem:[%s447 + $0x340] sm:$0xf]
      %v2701 = vld [vmem:[%s447 + $0x344] sm:$0xf]
      %v2702 = vld [vmem:[%s447 + $0x348] sm:$0xf]
      %v2703 = vld [vmem:[%s447 + $0x34c] sm:$0xf]
      %v2704 = vld [vmem:[%s447 + $0x350] sm:$0xf]
      %v2705 = vld [vmem:[%s447 + $0x354] sm:$0xf]
      %v2706 = vld [vmem:[%s447 + $0x358] sm:$0xf]
      %v2707 = vld [vmem:[%s447 + $0x35c] sm:$0xf]
      %v2708 = vld [vmem:[%s447 + $0x360] sm:$0xf]
      %v2709 = vld [vmem:[%s447 + $0x364] sm:$0xf]
      %v2710 = vld [vmem:[%s447 + $0x368] sm:$0xf]
      %v2711 = vld [vmem:[%s447 + $0x36c] sm:$0xf]
      %v2712 = vld [vmem:[%s447 + $0x370] sm:$0xf]
      %v2713 = vld [vmem:[%s447 + $0x374] sm:$0xf]
      %v2714 = vld [vmem:[%s447 + $0x378] sm:$0xf]
      %v2715 = vld [vmem:[%s447 + $0x37c] sm:$0xf]
      %v2716 = vld [vmem:[%s447 + $0x380] sm:$0xf]
      %v2717 = vld [vmem:[%s447 + $0x384] sm:$0xf]
      %v2718 = vld [vmem:[%s447 + $0x388] sm:$0xf]
      %v2719 = vld [vmem:[%s447 + $0x38c] sm:$0xf]
      %v2720 = vld [vmem:[%s447 + $0x390] sm:$0xf]
      %v2721 = vld [vmem:[%s447 + $0x394] sm:$0xf]
      %v2722 = vld [vmem:[%s447 + $0x398] sm:$0xf]
      %v2723 = vld [vmem:[%s447 + $0x39c] sm:$0xf]
      %v2724 = vld [vmem:[%s447 + $0x3a0] sm:$0xf]
      %v2725 = vld [vmem:[%s447 + $0x3a4] sm:$0xf]
      %v2726 = vld [vmem:[%s447 + $0x3a8] sm:$0xf]
      %v2727 = vld [vmem:[%s447 + $0x3ac] sm:$0xf]
      %v2728 = vld [vmem:[%s447 + $0x3b0] sm:$0xf]
      %v2729 = vld [vmem:[%s447 + $0x3b4] sm:$0xf]
      %v2730 = vld [vmem:[%s447 + $0x3b8] sm:$0xf]
      %v2731 = vld [vmem:[%s447 + $0x3bc] sm:$0xf]
      %v2732 = vld [vmem:[%s447 + $0x3c0] sm:$0xf]
      %v2733 = vld [vmem:[%s447 + $0x3c4] sm:$0xf]
      %v2734 = vld [vmem:[%s447 + $0x3c8] sm:$0xf]
      %v2735 = vld [vmem:[%s447 + $0x3cc] sm:$0xf]
      %v2736 = vld [vmem:[%s447 + $0x3d0] sm:$0xf]
      %v2737 = vld [vmem:[%s447 + $0x3d4] sm:$0xf]
      %v2738 = vld [vmem:[%s447 + $0x3d8] sm:$0xf]
      %v2739 = vld [vmem:[%s447 + $0x3dc] sm:$0xf]
      %v2740 = vld [vmem:[%s447 + $0x3e0] sm:$0xf]
      %v2741 = vld [vmem:[%s447 + $0x3e4] sm:$0xf]
      %v2742 = vld [vmem:[%s447 + $0x3e8] sm:$0xf]
      %v2743 = vld [vmem:[%s447 + $0x3ec] sm:$0xf]
      %v2744 = vld [vmem:[%s447 + $0x3f0] sm:$0xf]
      %v2745 = vld [vmem:[%s447 + $0x3f4] sm:$0xf]
      %v2746 = vld [vmem:[%s447 + $0x3f8] sm:$0xf]
      %v2747 = vld [vmem:[%s447 + $0x3fc] sm:$0xf]
      %v2749 = vlaneseq
      %v2750 = vshrl.u32 %v2749, 7
      %v2751 = vsub.s32 0, %v2750
      %v2752 = vrot.slane %v556, %v2751
      %v3010 = vunpack.c.l.b16 %v2492
      %v3011 = vunpack.c.l.b16 %v2493
      %v3012 = vunpack.c.l.b16 %v2494
      %v3013 = vunpack.c.l.b16 %v2495
      %v3014 = vunpack.c.l.b16 %v2496
      %v3015 = vunpack.c.l.b16 %v2497
      %v3016 = vunpack.c.l.b16 %v2498
      %v3017 = vunpack.c.l.b16 %v2499
      %v3018 = vunpack.c.l.b16 %v2500
      %v3019 = vunpack.c.l.b16 %v2501
      %v3020 = vunpack.c.l.b16 %v2502
      %v3021 = vunpack.c.l.b16 %v2503
      %v3022 = vunpack.c.l.b16 %v2504
      %v3023 = vunpack.c.l.b16 %v2505
      %v3024 = vunpack.c.l.b16 %v2506
      %v3025 = vunpack.c.l.b16 %v2507
      %v3026 = vunpack.c.l.b16 %v2508
      %v3027 = vunpack.c.l.b16 %v2509
      %v3028 = vunpack.c.l.b16 %v2510
      %v3029 = vunpack.c.l.b16 %v2511
      %v3030 = vunpack.c.l.b16 %v2512
      %v3031 = vunpack.c.l.b16 %v2513
      %v3032 = vunpack.c.l.b16 %v2514
      %v3033 = vunpack.c.l.b16 %v2515
      %v3034 = vunpack.c.l.b16 %v2516
      %v3035 = vunpack.c.l.b16 %v2517
      %v3036 = vunpack.c.l.b16 %v2518
      %v3037 = vunpack.c.l.b16 %v2519
      %v3038 = vunpack.c.l.b16 %v2520
      %v3039 = vunpack.c.l.b16 %v2521
      %v3040 = vunpack.c.l.b16 %v2522
      %v3041 = vunpack.c.l.b16 %v2523
      %v3042 = vunpack.c.l.b16 %v2524
      %v3043 = vunpack.c.l.b16 %v2525
      %v3044 = vunpack.c.l.b16 %v2526
      %v3045 = vunpack.c.l.b16 %v2527
      %v3046 = vunpack.c.l.b16 %v2528
      %v3047 = vunpack.c.l.b16 %v2529
      %v3048 = vunpack.c.l.b16 %v2530
      %v3049 = vunpack.c.l.b16 %v2531
      %v3050 = vunpack.c.l.b16 %v2532
      %v3051 = vunpack.c.l.b16 %v2533
      %v3052 = vunpack.c.l.b16 %v2534
      %v3053 = vunpack.c.l.b16 %v2535
      %v3054 = vunpack.c.l.b16 %v2536
      %v3055 = vunpack.c.l.b16 %v2537
      %v3056 = vunpack.c.l.b16 %v2538
      %v3057 = vunpack.c.l.b16 %v2539
      %v3058 = vunpack.c.l.b16 %v2540
      %v3059 = vunpack.c.l.b16 %v2541
      %v3060 = vunpack.c.l.b16 %v2542
      %v3061 = vunpack.c.l.b16 %v2543
      %v3062 = vunpack.c.l.b16 %v2544
      %v3063 = vunpack.c.l.b16 %v2545
      %v3064 = vunpack.c.l.b16 %v2546
      %v3065 = vunpack.c.l.b16 %v2547
      %v3066 = vunpack.c.l.b16 %v2548
      %v3067 = vunpack.c.l.b16 %v2549
      %v3068 = vunpack.c.l.b16 %v2550
      %v3069 = vunpack.c.l.b16 %v2551
      %v3070 = vunpack.c.l.b16 %v2552
      %v3071 = vunpack.c.l.b16 %v2553
      %v3072 = vunpack.c.l.b16 %v2554
      %v3073 = vunpack.c.l.b16 %v2555
      %v3074 = vunpack.c.l.b16 %v2556
      %v3075 = vunpack.c.l.b16 %v2557
      %v3076 = vunpack.c.l.b16 %v2558
      %v3077 = vunpack.c.l.b16 %v2559
      %v3078 = vunpack.c.l.b16 %v2560
      %v3079 = vunpack.c.l.b16 %v2561
      %v3080 = vunpack.c.l.b16 %v2562
      %v3081 = vunpack.c.l.b16 %v2563
      %v3082 = vunpack.c.l.b16 %v2564
      %v3083 = vunpack.c.l.b16 %v2565
      %v3084 = vunpack.c.l.b16 %v2566
      %v3085 = vunpack.c.l.b16 %v2567
      %v3086 = vunpack.c.l.b16 %v2568
      %v3087 = vunpack.c.l.b16 %v2569
      %v3088 = vunpack.c.l.b16 %v2570
      %v3089 = vunpack.c.l.b16 %v2571
      %v3090 = vunpack.c.l.b16 %v2572
      %v3091 = vunpack.c.l.b16 %v2573
      %v3092 = vunpack.c.l.b16 %v2574
      %v3093 = vunpack.c.l.b16 %v2575
      %v3094 = vunpack.c.l.b16 %v2576
      %v3095 = vunpack.c.l.b16 %v2577
      %v3096 = vunpack.c.l.b16 %v2578
      %v3097 = vunpack.c.l.b16 %v2579
      %v3098 = vunpack.c.l.b16 %v2580
      %v3099 = vunpack.c.l.b16 %v2581
      %v3100 = vunpack.c.l.b16 %v2582
      %v3101 = vunpack.c.l.b16 %v2583
      %v3102 = vunpack.c.l.b16 %v2584
      %v3103 = vunpack.c.l.b16 %v2585
      %v3104 = vunpack.c.l.b16 %v2586
      %v3105 = vunpack.c.l.b16 %v2587
      %v3106 = vunpack.c.l.b16 %v2588
      %v3107 = vunpack.c.l.b16 %v2589
      %v3108 = vunpack.c.l.b16 %v2590
      %v3109 = vunpack.c.l.b16 %v2591
      %v3110 = vunpack.c.l.b16 %v2592
      %v3111 = vunpack.c.l.b16 %v2593
      %v3112 = vunpack.c.l.b16 %v2594
      %v3113 = vunpack.c.l.b16 %v2595
      %v3114 = vunpack.c.l.b16 %v2596
      %v3115 = vunpack.c.l.b16 %v2597
      %v3116 = vunpack.c.l.b16 %v2598
      %v3117 = vunpack.c.l.b16 %v2599
      %v3118 = vunpack.c.l.b16 %v2600
      %v3119 = vunpack.c.l.b16 %v2601
      %v3120 = vunpack.c.l.b16 %v2602
      %v3121 = vunpack.c.l.b16 %v2603
      %v3122 = vunpack.c.l.b16 %v2604
      %v3123 = vunpack.c.l.b16 %v2605
      %v3124 = vunpack.c.l.b16 %v2606
      %v3125 = vunpack.c.l.b16 %v2607
      %v3126 = vunpack.c.l.b16 %v2608
      %v3127 = vunpack.c.l.b16 %v2609
      %v3128 = vunpack.c.l.b16 %v2610
      %v3129 = vunpack.c.l.b16 %v2611
      %v3130 = vunpack.c.l.b16 %v2612
      %v3131 = vunpack.c.l.b16 %v2613
      %v3132 = vunpack.c.l.b16 %v2614
      %v3133 = vunpack.c.l.b16 %v2615
      %v3134 = vunpack.c.l.b16 %v2616
      %v3135 = vunpack.c.l.b16 %v2617
      %v3136 = vunpack.c.l.b16 %v2618
      %v3137 = vunpack.c.l.b16 %v2619
      %v3138 = vunpack.c.l.b16 %v2620
      %v3139 = vunpack.c.l.b16 %v2621
      %v3140 = vunpack.c.l.b16 %v2622
      %v3141 = vunpack.c.l.b16 %v2623
      %v3142 = vunpack.c.l.b16 %v2624
      %v3143 = vunpack.c.l.b16 %v2625
      %v3144 = vunpack.c.l.b16 %v2626
      %v3145 = vunpack.c.l.b16 %v2627
      %v3146 = vunpack.c.l.b16 %v2628
      %v3147 = vunpack.c.l.b16 %v2629
      %v3148 = vunpack.c.l.b16 %v2630
      %v3149 = vunpack.c.l.b16 %v2631
      %v3150 = vunpack.c.l.b16 %v2632
      %v3151 = vunpack.c.l.b16 %v2633
      %v3152 = vunpack.c.l.b16 %v2634
      %v3153 = vunpack.c.l.b16 %v2635
      %v3154 = vunpack.c.l.b16 %v2636
      %v3155 = vunpack.c.l.b16 %v2637
      %v3156 = vunpack.c.l.b16 %v2638
      %v3157 = vunpack.c.l.b16 %v2639
      %v3158 = vunpack.c.l.b16 %v2640
      %v3159 = vunpack.c.l.b16 %v2641
      %v3160 = vunpack.c.l.b16 %v2642
      %v3161 = vunpack.c.l.b16 %v2643
      %v3162 = vunpack.c.l.b16 %v2644
      %v3163 = vunpack.c.l.b16 %v2645
      %v3164 = vunpack.c.l.b16 %v2646
      %v3165 = vunpack.c.l.b16 %v2647
      %v3166 = vunpack.c.l.b16 %v2648
      %v3167 = vunpack.c.l.b16 %v2649
      %v3168 = vunpack.c.l.b16 %v2650
      %v3169 = vunpack.c.l.b16 %v2651
      %v3170 = vunpack.c.l.b16 %v2652
      %v3171 = vunpack.c.l.b16 %v2653
      %v3172 = vunpack.c.l.b16 %v2654
      %v3173 = vunpack.c.l.b16 %v2655
      %v3174 = vunpack.c.l.b16 %v2656
      %v3175 = vunpack.c.l.b16 %v2657
      %v3176 = vunpack.c.l.b16 %v2658
      %v3177 = vunpack.c.l.b16 %v2659
      %v3178 = vunpack.c.l.b16 %v2660
      %v3179 = vunpack.c.l.b16 %v2661
      %v3180 = vunpack.c.l.b16 %v2662
      %v3181 = vunpack.c.l.b16 %v2663
      %v3182 = vunpack.c.l.b16 %v2664
      %v3183 = vunpack.c.l.b16 %v2665
      %v3184 = vunpack.c.l.b16 %v2666
      %v3185 = vunpack.c.l.b16 %v2667
      %v3186 = vunpack.c.l.b16 %v2668
      %v3187 = vunpack.c.l.b16 %v2669
      %v3188 = vunpack.c.l.b16 %v2670
      %v3189 = vunpack.c.l.b16 %v2671
      %v3190 = vunpack.c.l.b16 %v2672
      %v3191 = vunpack.c.l.b16 %v2673
      %v3192 = vunpack.c.l.b16 %v2674
      %v3193 = vunpack.c.l.b16 %v2675
      %v3194 = vunpack.c.l.b16 %v2676
      %v3195 = vunpack.c.l.b16 %v2677
      %v3196 = vunpack.c.l.b16 %v2678
      %v3197 = vunpack.c.l.b16 %v2679
      %v3198 = vunpack.c.l.b16 %v2680
      %v3199 = vunpack.c.l.b16 %v2681
      %v3200 = vunpack.c.l.b16 %v2682
      %v3201 = vunpack.c.l.b16 %v2683
      %v3202 = vunpack.c.l.b16 %v2684
      %v3203 = vunpack.c.l.b16 %v2685
      %v3204 = vunpack.c.l.b16 %v2686
      %v3205 = vunpack.c.l.b16 %v2687
      %v3206 = vunpack.c.l.b16 %v2688
      %v3207 = vunpack.c.l.b16 %v2689
      %v3208 = vunpack.c.l.b16 %v2690
      %v3209 = vunpack.c.l.b16 %v2691
      %v3210 = vunpack.c.l.b16 %v2692
      %v3211 = vunpack.c.l.b16 %v2693
      %v3212 = vunpack.c.l.b16 %v2694
      %v3213 = vunpack.c.l.b16 %v2695
      %v3214 = vunpack.c.l.b16 %v2696
      %v3215 = vunpack.c.l.b16 %v2697
      %v3216 = vunpack.c.l.b16 %v2698
      %v3217 = vunpack.c.l.b16 %v2699
      %v3218 = vunpack.c.l.b16 %v2700
      %v3219 = vunpack.c.l.b16 %v2701
      %v3220 = vunpack.c.l.b16 %v2702
      %v3221 = vunpack.c.l.b16 %v2703
      %v3222 = vunpack.c.l.b16 %v2704
      %v3223 = vunpack.c.l.b16 %v2705
      %v3224 = vunpack.c.l.b16 %v2706
      %v3225 = vunpack.c.l.b16 %v2707
      %v3226 = vunpack.c.l.b16 %v2708
      %v3227 = vunpack.c.l.b16 %v2709
      %v3228 = vunpack.c.l.b16 %v2710
      %v3229 = vunpack.c.l.b16 %v2711
      %v3230 = vunpack.c.l.b16 %v2712
      %v3231 = vunpack.c.l.b16 %v2713
      %v3232 = vunpack.c.l.b16 %v2714
      %v3233 = vunpack.c.l.b16 %v2715
      %v3234 = vunpack.c.l.b16 %v2716
      %v3235 = vunpack.c.l.b16 %v2717
      %v3236 = vunpack.c.l.b16 %v2718
      %v3237 = vunpack.c.l.b16 %v2719
      %v3238 = vunpack.c.l.b16 %v2720
      %v3239 = vunpack.c.l.b16 %v2721
      %v3240 = vunpack.c.l.b16 %v2722
      %v3241 = vunpack.c.l.b16 %v2723
      %v3242 = vunpack.c.l.b16 %v2724
      %v3243 = vunpack.c.l.b16 %v2725
      %v3244 = vunpack.c.l.b16 %v2726
      %v3245 = vunpack.c.l.b16 %v2727
      %v3246 = vunpack.c.l.b16 %v2728
      %v3247 = vunpack.c.l.b16 %v2729
      %v3248 = vunpack.c.l.b16 %v2730
      %v3249 = vunpack.c.l.b16 %v2731
      %v3250 = vunpack.c.l.b16 %v2732
      %v3251 = vunpack.c.l.b16 %v2733
      %v3252 = vunpack.c.l.b16 %v2734
      %v3253 = vunpack.c.l.b16 %v2735
      %v3254 = vunpack.c.l.b16 %v2736
      %v3255 = vunpack.c.l.b16 %v2737
      %v3256 = vunpack.c.l.b16 %v2738
      %v3257 = vunpack.c.l.b16 %v2739
      %v3258 = vunpack.c.l.b16 %v2740
      %v3259 = vunpack.c.l.b16 %v2741
      %v3260 = vunpack.c.l.b16 %v2742
      %v3261 = vunpack.c.l.b16 %v2743
      %v3262 = vunpack.c.l.b16 %v2744
      %v3263 = vunpack.c.l.b16 %v2745
      %v3264 = vunpack.c.l.b16 %v2746
      %v3265 = vunpack.c.l.b16 %v2747
      %v3266 = vpack.c.b16 %v3011, %v3010
      %v3267 = vpack.c.b16 %v3013, %v3012
      %v3268 = vpack.c.b16 %v3015, %v3014
      %v3269 = vpack.c.b16 %v3017, %v3016
      %v3270 = vpack.c.b16 %v3019, %v3018
      %v3271 = vpack.c.b16 %v3021, %v3020
      %v3272 = vpack.c.b16 %v3023, %v3022
      %v3273 = vpack.c.b16 %v3025, %v3024
      %v3274 = vpack.c.b16 %v3027, %v3026
      %v3275 = vpack.c.b16 %v3029, %v3028
      %v3276 = vpack.c.b16 %v3031, %v3030
      %v3277 = vpack.c.b16 %v3033, %v3032
      %v3278 = vpack.c.b16 %v3035, %v3034
      %v3279 = vpack.c.b16 %v3037, %v3036
      %v3280 = vpack.c.b16 %v3039, %v3038
      %v3281 = vpack.c.b16 %v3041, %v3040
      %v3282 = vpack.c.b16 %v3043, %v3042
      %v3283 = vpack.c.b16 %v3045, %v3044
      %v3284 = vpack.c.b16 %v3047, %v3046
      %v3285 = vpack.c.b16 %v3049, %v3048
      %v3286 = vpack.c.b16 %v3051, %v3050
      %v3287 = vpack.c.b16 %v3053, %v3052
      %v3288 = vpack.c.b16 %v3055, %v3054
      %v3289 = vpack.c.b16 %v3057, %v3056
      %v3290 = vpack.c.b16 %v3059, %v3058
      %v3291 = vpack.c.b16 %v3061, %v3060
      %v3292 = vpack.c.b16 %v3063, %v3062
      %v3293 = vpack.c.b16 %v3065, %v3064
      %v3294 = vpack.c.b16 %v3067, %v3066
      %v3295 = vpack.c.b16 %v3069, %v3068
      %v3296 = vpack.c.b16 %v3071, %v3070
      %v3297 = vpack.c.b16 %v3073, %v3072
      %v3298 = vpack.c.b16 %v3075, %v3074
      %v3299 = vpack.c.b16 %v3077, %v3076
      %v3300 = vpack.c.b16 %v3079, %v3078
      %v3301 = vpack.c.b16 %v3081, %v3080
      %v3302 = vpack.c.b16 %v3083, %v3082
      %v3303 = vpack.c.b16 %v3085, %v3084
      %v3304 = vpack.c.b16 %v3087, %v3086
      %v3305 = vpack.c.b16 %v3089, %v3088
      %v3306 = vpack.c.b16 %v3091, %v3090
      %v3307 = vpack.c.b16 %v3093, %v3092
      %v3308 = vpack.c.b16 %v3095, %v3094
      %v3309 = vpack.c.b16 %v3097, %v3096
      %v3310 = vpack.c.b16 %v3099, %v3098
      %v3311 = vpack.c.b16 %v3101, %v3100
      %v3312 = vpack.c.b16 %v3103, %v3102
      %v3313 = vpack.c.b16 %v3105, %v3104
      %v3314 = vpack.c.b16 %v3107, %v3106
      %v3315 = vpack.c.b16 %v3109, %v3108
      %v3316 = vpack.c.b16 %v3111, %v3110
      %v3317 = vpack.c.b16 %v3113, %v3112
      %v3318 = vpack.c.b16 %v3115, %v3114
      %v3319 = vpack.c.b16 %v3117, %v3116
      %v3320 = vpack.c.b16 %v3119, %v3118
      %v3321 = vpack.c.b16 %v3121, %v3120
      %v3322 = vpack.c.b16 %v3123, %v3122
      %v3323 = vpack.c.b16 %v3125, %v3124
      %v3324 = vpack.c.b16 %v3127, %v3126
      %v3325 = vpack.c.b16 %v3129, %v3128
      %v3326 = vpack.c.b16 %v3131, %v3130
      %v3327 = vpack.c.b16 %v3133, %v3132
      %v3328 = vpack.c.b16 %v3135, %v3134
      %v3329 = vpack.c.b16 %v3137, %v3136
      %v3330 = vpack.c.b16 %v3139, %v3138
      %v3331 = vpack.c.b16 %v3141, %v3140
      %v3332 = vpack.c.b16 %v3143, %v3142
      %v3333 = vpack.c.b16 %v3145, %v3144
      %v3334 = vpack.c.b16 %v3147, %v3146
      %v3335 = vpack.c.b16 %v3149, %v3148
      %v3336 = vpack.c.b16 %v3151, %v3150
      %v3337 = vpack.c.b16 %v3153, %v3152
      %v3338 = vpack.c.b16 %v3155, %v3154
      %v3339 = vpack.c.b16 %v3157, %v3156
      %v3340 = vpack.c.b16 %v3159, %v3158
      %v3341 = vpack.c.b16 %v3161, %v3160
      %v3342 = vpack.c.b16 %v3163, %v3162
      %v3343 = vpack.c.b16 %v3165, %v3164
      %v3344 = vpack.c.b16 %v3167, %v3166
      %v3345 = vpack.c.b16 %v3169, %v3168
      %v3346 = vpack.c.b16 %v3171, %v3170
      %v3347 = vpack.c.b16 %v3173, %v3172
      %v3348 = vpack.c.b16 %v3175, %v3174
      %v3349 = vpack.c.b16 %v3177, %v3176
      %v3350 = vpack.c.b16 %v3179, %v3178
      %v3351 = vpack.c.b16 %v3181, %v3180
      %v3352 = vpack.c.b16 %v3183, %v3182
      %v3353 = vpack.c.b16 %v3185, %v3184
      %v3354 = vpack.c.b16 %v3187, %v3186
      %v3355 = vpack.c.b16 %v3189, %v3188
      %v3356 = vpack.c.b16 %v3191, %v3190
      %v3357 = vpack.c.b16 %v3193, %v3192
      %v3358 = vpack.c.b16 %v3195, %v3194
      %v3359 = vpack.c.b16 %v3197, %v3196
      %v3360 = vpack.c.b16 %v3199, %v3198
      %v3361 = vpack.c.b16 %v3201, %v3200
      %v3362 = vpack.c.b16 %v3203, %v3202
      %v3363 = vpack.c.b16 %v3205, %v3204
      %v3364 = vpack.c.b16 %v3207, %v3206
      %v3365 = vpack.c.b16 %v3209, %v3208
      %v3366 = vpack.c.b16 %v3211, %v3210
      %v3367 = vpack.c.b16 %v3213, %v3212
      %v3368 = vpack.c.b16 %v3215, %v3214
      %v3369 = vpack.c.b16 %v3217, %v3216
      %v3370 = vpack.c.b16 %v3219, %v3218
      %v3371 = vpack.c.b16 %v3221, %v3220
      %v3372 = vpack.c.b16 %v3223, %v3222
      %v3373 = vpack.c.b16 %v3225, %v3224
      %v3374 = vpack.c.b16 %v3227, %v3226
      %v3375 = vpack.c.b16 %v3229, %v3228
      %v3376 = vpack.c.b16 %v3231, %v3230
      %v3377 = vpack.c.b16 %v3233, %v3232
      %v3378 = vpack.c.b16 %v3235, %v3234
      %v3379 = vpack.c.b16 %v3237, %v3236
      %v3380 = vpack.c.b16 %v3239, %v3238
      %v3381 = vpack.c.b16 %v3241, %v3240
      %v3382 = vpack.c.b16 %v3243, %v3242
      %v3383 = vpack.c.b16 %v3245, %v3244
      %v3384 = vpack.c.b16 %v3247, %v3246
      %v3385 = vpack.c.b16 %v3249, %v3248
      %v3386 = vpack.c.b16 %v3251, %v3250
      %v3387 = vpack.c.b16 %v3253, %v3252
      %v3388 = vpack.c.b16 %v3255, %v3254
      %v3389 = vpack.c.b16 %v3257, %v3256
      %v3390 = vpack.c.b16 %v3259, %v3258
      %v3391 = vpack.c.b16 %v3261, %v3260
      %v3392 = vpack.c.b16 %v3263, %v3262
      %v3393 = vpack.c.b16 %v3265, %v3264
      %3522 = vmatprep.subr.bf16.mxu0 0
      %3523 = vmatpush1.bf16.msra.mxu0 %v3266
      %3524 = vmatprep.subr.bf16.mxu0 0
      %3525 = vmatpush1.bf16.msra.mxu0 %v3267
      %3526 = vmatprep.subr.bf16.mxu0 0
      %3527 = vmatpush1.bf16.msra.mxu0 %v3268
      %3528 = vmatprep.subr.bf16.mxu0 0
      %3529 = vmatpush1.bf16.msra.mxu0 %v3269
      %3530 = vmatprep.subr.bf16.mxu0 0
      %3531 = vmatpush1.bf16.msra.mxu0 %v3270
      %3532 = vmatprep.subr.bf16.mxu0 0
      %3533 = vmatpush1.bf16.msra.mxu0 %v3271
      %3534 = vmatprep.subr.bf16.mxu0 0
      %3535 = vmatpush1.bf16.msra.mxu0 %v3272
      %3536 = vmatprep.subr.bf16.mxu0 0
      %3537 = vmatpush1.bf16.msra.mxu0 %v3273
      %3538 = vmatprep.subr.bf16.mxu0 0
      %3539 = vmatpush1.bf16.msra.mxu0 %v3274
      %3540 = vmatprep.subr.bf16.mxu0 0
      %3541 = vmatpush1.bf16.msra.mxu0 %v3275
      %3542 = vmatprep.subr.bf16.mxu0 0
      %3543 = vmatpush1.bf16.msra.mxu0 %v3276
      %3544 = vmatprep.subr.bf16.mxu0 0
      %3545 = vmatpush1.bf16.msra.mxu0 %v3277
      %3546 = vmatprep.subr.bf16.mxu0 0
      %3547 = vmatpush1.bf16.msra.mxu0 %v3278
      %3548 = vmatprep.subr.bf16.mxu0 0
      %3549 = vmatpush1.bf16.msra.mxu0 %v3279
      %3550 = vmatprep.subr.bf16.mxu0 0
      %3551 = vmatpush1.bf16.msra.mxu0 %v3280
      %3552 = vmatprep.subr.bf16.mxu0 0
      %3553 = vmatpush1.bf16.msra.mxu0 %v3281
      %3554 = vmatprep.mubr.bf16.mxu0 %v2429
      %3555 = vmatmul.mubr.bf16.gmra.mrb[0].mxu0 %v2428
      %v3556 = vpop.f32.mrb[0].mxu0
      %v3557 = vadd.f32 %v2752, %v3556
      %v3558 = vpop.f32.mrb[0].mxu0
      %v3559 = vpop.f32.mrb[0].mxu0
      %v3560 = vadd.f32 %v2752, %v3559
      %v3561 = vpop.f32.mrb[0].mxu0
      %3562 = vmatprep.mubr.bf16.mxu0 %v2445
      %3563 = vmatmul.mubr.bf16.gmra.mrb[0].mxu0 %v2444
      %v3564 = vpop.f32.mrb[0].mxu0
      %v3565 = vadd.f32 %v2752, %v3564
      %v3566 = vpop.f32.mrb[0].mxu0
      %v3567 = vpop.f32.mrb[0].mxu0
      %v3568 = vadd.f32 %v2752, %v3567
      %v3569 = vpop.f32.mrb[0].mxu0
      %3570 = vmatprep.mubr.bf16.mxu0 %v2461
      %3571 = vmatmul.mubr.bf16.gmra.mrb[0].mxu0 %v2460
      %v3572 = vpop.f32.mrb[0].mxu0
      %v3573 = vadd.f32 %v2752, %v3572
      %v3574 = vpop.f32.mrb[0].mxu0
      %v3575 = vpop.f32.mrb[0].mxu0
      %v3576 = vadd.f32 %v2752, %v3575
      %v3577 = vpop.f32.mrb[0].mxu0
      %3578 = vmatprep.mubr.bf16.mxu0 %v2477
      %3579 = vmatmul.mubr.bf16.gmra.mrb[0].mxu0 %v2476
      %v3580 = vpop.f32.mrb[0].mxu0
      %v3581 = vadd.f32 %v2752, %v3580
      %v3582 = vpop.f32.mrb[0].mxu0
      %v3583 = vpop.f32.mrb[0].mxu0
      %v3584 = vadd.f32 %v2752, %v3583
      %v3585 = vpop.f32.mrb[0].mxu0
      %3586 = vdwg.mxu0
      %3587 = vmatprep.subr.bf16.mxu0 0
      %3588 = vmatpush1.bf16.msra.mxu0 %v3282
      %3589 = vmatprep.subr.bf16.mxu0 0
      %3590 = vmatpush1.bf16.msra.mxu0 %v3283
      %3591 = vmatprep.subr.bf16.mxu0 0
      %3592 = vmatpush1.bf16.msra.mxu0 %v3284
      %3593 = vmatprep.subr.bf16.mxu0 0
      %3594 = vmatpush1.bf16.msra.mxu0 %v3285
      %3595 = vmatprep.subr.bf16.mxu0 0
      %3596 = vmatpush1.bf16.msra.mxu0 %v3286
      %3597 = vmatprep.subr.bf16.mxu0 0
      %3598 = vmatpush1.bf16.msra.mxu0 %v3287
      %3599 = vmatprep.subr.bf16.mxu0 0
      %3600 = vmatpush1.bf16.msra.mxu0 %v3288
      %3601 = vmatprep.subr.bf16.mxu0 0
      %3602 = vmatpush1.bf16.msra.mxu0 %v3289
      %3603 = vmatprep.subr.bf16.mxu0 0
      %3604 = vmatpush1.bf16.msra.mxu0 %v3290
      %3605 = vmatprep.subr.bf16.mxu0 0
      %3606 = vmatpush1.bf16.msra.mxu0 %v3291
      %3607 = vmatprep.subr.bf16.mxu0 0
      %3608 = vmatpush1.bf16.msra.mxu0 %v3292
      %3609 = vmatprep.subr.bf16.mxu0 0
      %3610 = vmatpush1.bf16.msra.mxu0 %v3293
      %3611 = vmatprep.subr.bf16.mxu0 0
      %3612 = vmatpush1.bf16.msra.mxu0 %v3294
      %3613 = vmatprep.subr.bf16.mxu0 0
      %3614 = vmatpush1.bf16.msra.mxu0 %v3295
      %3615 = vmatprep.subr.bf16.mxu0 0
      %3616 = vmatpush1.bf16.msra.mxu0 %v3296
      %3617 = vmatprep.subr.bf16.mxu0 0
      %3618 = vmatpush1.bf16.msra.mxu0 %v3297
      %3619 = vmatprep.mubr.bf16.mxu0 %v2431
      %3620 = vmatmul.mubr.bf16.gmra.mrb[0].mxu0 %v2430
      %v3621 = vpop.f32.mrb[0].mxu0
      %v3622 = vadd.f32 %v3557, %v3621
      %v3623 = vpop.f32.mrb[0].mxu0
      %v3624 = vpop.f32.mrb[0].mxu0
      %v3625 = vadd.f32 %v3560, %v3624
      %v3626 = vpop.f32.mrb[0].mxu0
      %3627 = vmatprep.mubr.bf16.mxu0 %v2447
      %3628 = vmatmul.mubr.bf16.gmra.mrb[0].mxu0 %v2446
      %v3629 = vpop.f32.mrb[0].mxu0
      %v3630 = vadd.f32 %v3565, %v3629
      %v3631 = vpop.f32.mrb[0].mxu0
      %v3632 = vpop.f32.mrb[0].mxu0
      %v3633 = vadd.f32 %v3568, %v3632
      %v3634 = vpop.f32.mrb[0].mxu0
      %3635 = vmatprep.mubr.bf16.mxu0 %v2463
      %3636 = vmatmul.mubr.bf16.gmra.mrb[0].mxu0 %v2462
      %v3637 = vpop.f32.mrb[0].mxu0
      %v3638 = vadd.f32 %v3573, %v3637
      %v3639 = vpop.f32.mrb[0].mxu0
      %v3640 = vpop.f32.mrb[0].mxu0
      %v3641 = vadd.f32 %v3576, %v3640
      %v3642 = vpop.f32.mrb[0].mxu0
      %3643 = vmatprep.mubr.bf16.mxu0 %v2479
      %3644 = vmatmul.mubr.bf16.gmra.mrb[0].mxu0 %v2478
      %v3645 = vpop.f32.mrb[0].mxu0
      %v3646 = vadd.f32 %v3581, %v3645
      %v3647 = vpop.f32.mrb[0].mxu0
      %v3648 = vpop.f32.mrb[0].mxu0
      %v3649 = vadd.f32 %v3584, %v3648
      %v3650 = vpop.f32.mrb[0].mxu0
      %3651 = vdwg.mxu0
      %3652 = vmatprep.subr.bf16.mxu0 0
      %3653 = vmatpush1.bf16.msra.mxu0 %v3298
      %3654 = vmatprep.subr.bf16.mxu0 0
      %3655 = vmatpush1.bf16.msra.mxu0 %v3299
      %3656 = vmatprep.subr.bf16.mxu0 0
      %3657 = vmatpush1.bf16.msra.mxu0 %v3300
      %3658 = vmatprep.subr.bf16.mxu0 0
      %3659 = vmatpush1.bf16.msra.mxu0 %v3301
      %3660 = vmatprep.subr.bf16.mxu0 0
      %3661 = vmatpush1.bf16.msra.mxu0 %v3302
      %3662 = vmatprep.subr.bf16.mxu0 0
      %3663 = vmatpush1.bf16.msra.mxu0 %v3303
      %3664 = vmatprep.subr.bf16.mxu0 0
      %3665 = vmatpush1.bf16.msra.mxu0 %v3304
      %3666 = vmatprep.subr.bf16.mxu0 0
      %3667 = vmatpush1.bf16.msra.mxu0 %v3305
      %3668 = vmatprep.subr.bf16.mxu0 0
      %3669 = vmatpush1.bf16.msra.mxu0 %v3306
      %3670 = vmatprep.subr.bf16.mxu0 0
      %3671 = vmatpush1.bf16.msra.mxu0 %v3307
      %3672 = vmatprep.subr.bf16.mxu0 0
      %3673 = vmatpush1.bf16.msra.mxu0 %v3308
      %3674 = vmatprep.subr.bf16.mxu0 0
      %3675 = vmatpush1.bf16.msra.mxu0 %v3309
      %3676 = vmatprep.subr.bf16.mxu0 0
      %3677 = vmatpush1.bf16.msra.mxu0 %v3310
      %3678 = vmatprep.subr.bf16.mxu0 0
      %3679 = vmatpush1.bf16.msra.mxu0 %v3311
      %3680 = vmatprep.subr.bf16.mxu0 0
      %3681 = vmatpush1.bf16.msra.mxu0 %v3312
      %3682 = vmatprep.subr.bf16.mxu0 0
      %3683 = vmatpush1.bf16.msra.mxu0 %v3313
      %3684 = vmatprep.mubr.bf16.mxu0 %v2433
      %3685 = vmatmul.mubr.bf16.gmra.mrb[0].mxu0 %v2432
      %v3686 = vpop.f32.mrb[0].mxu0
      %v3687 = vadd.f32 %v3622, %v3686
      %v3688 = vpop.f32.mrb[0].mxu0
      %v3689 = vpop.f32.mrb[0].mxu0
      %v3690 = vadd.f32 %v3625, %v3689
      %v3691 = vpop.f32.mrb[0].mxu0
      %3692 = vmatprep.mubr.bf16.mxu0 %v2449
      %3693 = vmatmul.mubr.bf16.gmra.mrb[0].mxu0 %v2448
      %v3694 = vpop.f32.mrb[0].mxu0
      %v3695 = vadd.f32 %v3630, %v3694
      %v3696 = vpop.f32.mrb[0].mxu0
      %v3697 = vpop.f32.mrb[0].mxu0
      %v3698 = vadd.f32 %v3633, %v3697
      %v3699 = vpop.f32.mrb[0].mxu0
      %3700 = vmatprep.mubr.bf16.mxu0 %v2465
      %3701 = vmatmul.mubr.bf16.gmra.mrb[0].mxu0 %v2464
      %v3702 = vpop.f32.mrb[0].mxu0
      %v3703 = vadd.f32 %v3638, %v3702
      %v3704 = vpop.f32.mrb[0].mxu0
      %v3705 = vpop.f32.mrb[0].mxu0
      %v3706 = vadd.f32 %v3641, %v3705
      %v3707 = vpop.f32.mrb[0].mxu0
      %3708 = vmatprep.mubr.bf16.mxu0 %v2481
      %3709 = vmatmul.mubr.bf16.gmra.mrb[0].mxu0 %v2480
      %v3710 = vpop.f32.mrb[0].mxu0
      %v3711 = vadd.f32 %v3646, %v3710
      %v3712 = vpop.f32.mrb[0].mxu0
      %v3713 = vpop.f32.mrb[0].mxu0
      %v3714 = vadd.f32 %v3649, %v3713
      %v3715 = vpop.f32.mrb[0].mxu0
      %3716 = vdwg.mxu0
      %3717 = vmatprep.subr.bf16.mxu0 0
      %3718 = vmatpush1.bf16.msra.mxu0 %v3314
      %3719 = vmatprep.subr.bf16.mxu0 0
      %3720 = vmatpush1.bf16.msra.mxu0 %v3315
      %3721 = vmatprep.subr.bf16.mxu0 0
      %3722 = vmatpush1.bf16.msra.mxu0 %v3316
      %3723 = vmatprep.subr.bf16.mxu0 0
      %3724 = vmatpush1.bf16.msra.mxu0 %v3317
      %3725 = vmatprep.subr.bf16.mxu0 0
      %3726 = vmatpush1.bf16.msra.mxu0 %v3318
      %3727 = vmatprep.subr.bf16.mxu0 0
      %3728 = vmatpush1.bf16.msra.mxu0 %v3319
      %3729 = vmatprep.subr.bf16.mxu0 0
      %3730 = vmatpush1.bf16.msra.mxu0 %v3320
      %3731 = vmatprep.subr.bf16.mxu0 0
      %3732 = vmatpush1.bf16.msra.mxu0 %v3321
      %3733 = vmatprep.subr.bf16.mxu0 0
      %3734 = vmatpush1.bf16.msra.mxu0 %v3322
      %3735 = vmatprep.subr.bf16.mxu0 0
      %3736 = vmatpush1.bf16.msra.mxu0 %v3323
      %3737 = vmatprep.subr.bf16.mxu0 0
      %3738 = vmatpush1.bf16.msra.mxu0 %v3324
      %3739 = vmatprep.subr.bf16.mxu0 0
      %3740 = vmatpush1.bf16.msra.mxu0 %v3325
      %3741 = vmatprep.subr.bf16.mxu0 0
      %3742 = vmatpush1.bf16.msra.mxu0 %v3326
      %3743 = vmatprep.subr.bf16.mxu0 0
      %3744 = vmatpush1.bf16.msra.mxu0 %v3327
      %3745 = vmatprep.subr.bf16.mxu0 0
      %3746 = vmatpush1.bf16.msra.mxu0 %v3328
      %3747 = vmatprep.subr.bf16.mxu0 0
      %3748 = vmatpush1.bf16.msra.mxu0 %v3329
      %3749 = vmatprep.mubr.bf16.mxu0 %v2435
      %3750 = vmatmul.mubr.bf16.gmra.mrb[0].mxu0 %v2434
      %v3751 = vpop.f32.mrb[0].mxu0
      %v3752 = vadd.f32 %v3687, %v3751
      %v3753 = vpop.f32.mrb[0].mxu0
      %v3754 = vpop.f32.mrb[0].mxu0
      %v3755 = vadd.f32 %v3690, %v3754
      %v3756 = vpop.f32.mrb[0].mxu0
      %3757 = vmatprep.mubr.bf16.mxu0 %v2451
      %3758 = vmatmul.mubr.bf16.gmra.mrb[0].mxu0 %v2450
      %v3759 = vpop.f32.mrb[0].mxu0
      %v3760 = vadd.f32 %v3695, %v3759
      %v3761 = vpop.f32.mrb[0].mxu0
      %v3762 = vpop.f32.mrb[0].mxu0
      %v3763 = vadd.f32 %v3698, %v3762
      %v3764 = vpop.f32.mrb[0].mxu0
      %3765 = vmatprep.mubr.bf16.mxu0 %v2467
      %3766 = vmatmul.mubr.bf16.gmra.mrb[0].mxu0 %v2466
      %v3767 = vpop.f32.mrb[0].mxu0
      %v3768 = vadd.f32 %v3703, %v3767
      %v3769 = vpop.f32.mrb[0].mxu0
      %v3770 = vpop.f32.mrb[0].mxu0
      %v3771 = vadd.f32 %v3706, %v3770
      %v3772 = vpop.f32.mrb[0].mxu0
      %3773 = vmatprep.mubr.bf16.mxu0 %v2483
      %3774 = vmatmul.mubr.bf16.gmra.mrb[0].mxu0 %v2482
      %v3775 = vpop.f32.mrb[0].mxu0
      %v3776 = vadd.f32 %v3711, %v3775
      %v3777 = vpop.f32.mrb[0].mxu0
      %v3778 = vpop.f32.mrb[0].mxu0
      %v3779 = vadd.f32 %v3714, %v3778
      %v3780 = vpop.f32.mrb[0].mxu0
      %3781 = vdwg.mxu0
      %3782 = vmatprep.subr.bf16.mxu0 0
      %3783 = vmatpush1.bf16.msra.mxu0 %v3330
      %3784 = vmatprep.subr.bf16.mxu0 0
      %3785 = vmatpush1.bf16.msra.mxu0 %v3331
      %3786 = vmatprep.subr.bf16.mxu0 0
      %3787 = vmatpush1.bf16.msra.mxu0 %v3332
      %3788 = vmatprep.subr.bf16.mxu0 0
      %3789 = vmatpush1.bf16.msra.mxu0 %v3333
      %3790 = vmatprep.subr.bf16.mxu0 0
      %3791 = vmatpush1.bf16.msra.mxu0 %v3334
      %3792 = vmatprep.subr.bf16.mxu0 0
      %3793 = vmatpush1.bf16.msra.mxu0 %v3335
      %3794 = vmatprep.subr.bf16.mxu0 0
      %3795 = vmatpush1.bf16.msra.mxu0 %v3336
      %3796 = vmatprep.subr.bf16.mxu0 0
      %3797 = vmatpush1.bf16.msra.mxu0 %v3337
      %3798 = vmatprep.subr.bf16.mxu0 0
      %3799 = vmatpush1.bf16.msra.mxu0 %v3338
      %3800 = vmatprep.subr.bf16.mxu0 0
      %3801 = vmatpush1.bf16.msra.mxu0 %v3339
      %3802 = vmatprep.subr.bf16.mxu0 0
      %3803 = vmatpush1.bf16.msra.mxu0 %v3340
      %3804 = vmatprep.subr.bf16.mxu0 0
      %3805 = vmatpush1.bf16.msra.mxu0 %v3341
      %3806 = vmatprep.subr.bf16.mxu0 0
      %3807 = vmatpush1.bf16.msra.mxu0 %v3342
      %3808 = vmatprep.subr.bf16.mxu0 0
      %3809 = vmatpush1.bf16.msra.mxu0 %v3343
      %3810 = vmatprep.subr.bf16.mxu0 0
      %3811 = vmatpush1.bf16.msra.mxu0 %v3344
      %3812 = vmatprep.subr.bf16.mxu0 0
      %3813 = vmatpush1.bf16.msra.mxu0 %v3345
      %3814 = vmatprep.mubr.bf16.mxu0 %v2437
      %3815 = vmatmul.mubr.bf16.gmra.mrb[0].mxu0 %v2436
      %v3816 = vpop.f32.mrb[0].mxu0
      %v3817 = vadd.f32 %v3752, %v3816
      %v3818 = vpop.f32.mrb[0].mxu0
      %v3819 = vpop.f32.mrb[0].mxu0
      %v3820 = vadd.f32 %v3755, %v3819
      %v3821 = vpop.f32.mrb[0].mxu0
      %3822 = vmatprep.mubr.bf16.mxu0 %v2453
      %3823 = vmatmul.mubr.bf16.gmra.mrb[0].mxu0 %v2452
      %v3824 = vpop.f32.mrb[0].mxu0
      %v3825 = vadd.f32 %v3760, %v3824
      %v3826 = vpop.f32.mrb[0].mxu0
      %v3827 = vpop.f32.mrb[0].mxu0
      %v3828 = vadd.f32 %v3763, %v3827
      %v3829 = vpop.f32.mrb[0].mxu0
      %3830 = vmatprep.mubr.bf16.mxu0 %v2469
      %3831 = vmatmul.mubr.bf16.gmra.mrb[0].mxu0 %v2468
      %v3832 = vpop.f32.mrb[0].mxu0
      %v3833 = vadd.f32 %v3768, %v3832
      %v3834 = vpop.f32.mrb[0].mxu0
      %v3835 = vpop.f32.mrb[0].mxu0
      %v3836 = vadd.f32 %v3771, %v3835
      %v3837 = vpop.f32.mrb[0].mxu0
      %3838 = vmatprep.mubr.bf16.mxu0 %v2485
      %3839 = vmatmul.mubr.bf16.gmra.mrb[0].mxu0 %v2484
      %v3840 = vpop.f32.mrb[0].mxu0
      %v3841 = vadd.f32 %v3776, %v3840
      %v3842 = vpop.f32.mrb[0].mxu0
      %v3843 = vpop.f32.mrb[0].mxu0
      %v3844 = vadd.f32 %v3779, %v3843
      %v3845 = vpop.f32.mrb[0].mxu0
      %3846 = vdwg.mxu0
      %3847 = vmatprep.subr.bf16.mxu0 0
      %3848 = vmatpush1.bf16.msra.mxu0 %v3346
      %3849 = vmatprep.subr.bf16.mxu0 0
      %3850 = vmatpush1.bf16.msra.mxu0 %v3347
      %3851 = vmatprep.subr.bf16.mxu0 0
      %3852 = vmatpush1.bf16.msra.mxu0 %v3348
      %3853 = vmatprep.subr.bf16.mxu0 0
      %3854 = vmatpush1.bf16.msra.mxu0 %v3349
      %3855 = vmatprep.subr.bf16.mxu0 0
      %3856 = vmatpush1.bf16.msra.mxu0 %v3350
      %3857 = vmatprep.subr.bf16.mxu0 0
      %3858 = vmatpush1.bf16.msra.mxu0 %v3351
      %3859 = vmatprep.subr.bf16.mxu0 0
      %3860 = vmatpush1.bf16.msra.mxu0 %v3352
      %3861 = vmatprep.subr.bf16.mxu0 0
      %3862 = vmatpush1.bf16.msra.mxu0 %v3353
      %3863 = vmatprep.subr.bf16.mxu0 0
      %3864 = vmatpush1.bf16.msra.mxu0 %v3354
      %3865 = vmatprep.subr.bf16.mxu0 0
      %3866 = vmatpush1.bf16.msra.mxu0 %v3355
      %3867 = vmatprep.subr.bf16.mxu0 0
      %3868 = vmatpush1.bf16.msra.mxu0 %v3356
      %3869 = vmatprep.subr.bf16.mxu0 0
      %3870 = vmatpush1.bf16.msra.mxu0 %v3357
      %3871 = vmatprep.subr.bf16.mxu0 0
      %3872 = vmatpush1.bf16.msra.mxu0 %v3358
      %3873 = vmatprep.subr.bf16.mxu0 0
      %3874 = vmatpush1.bf16.msra.mxu0 %v3359
      %3875 = vmatprep.subr.bf16.mxu0 0
      %3876 = vmatpush1.bf16.msra.mxu0 %v3360
      %3877 = vmatprep.subr.bf16.mxu0 0
      %3878 = vmatpush1.bf16.msra.mxu0 %v3361
      %3879 = vmatprep.mubr.bf16.mxu0 %v2439
      %3880 = vmatmul.mubr.bf16.gmra.mrb[0].mxu0 %v2438
      %v3881 = vpop.f32.mrb[0].mxu0
      %v3882 = vadd.f32 %v3817, %v3881
      %v3883 = vpop.f32.mrb[0].mxu0
      %v3884 = vpop.f32.mrb[0].mxu0
      %v3885 = vadd.f32 %v3820, %v3884
      %v3886 = vpop.f32.mrb[0].mxu0
      %3887 = vmatprep.mubr.bf16.mxu0 %v2455
      %3888 = vmatmul.mubr.bf16.gmra.mrb[0].mxu0 %v2454
      %v3889 = vpop.f32.mrb[0].mxu0
      %v3890 = vadd.f32 %v3825, %v3889
      %v3891 = vpop.f32.mrb[0].mxu0
      %v3892 = vpop.f32.mrb[0].mxu0
      %v3893 = vadd.f32 %v3828, %v3892
      %v3894 = vpop.f32.mrb[0].mxu0
      %3895 = vmatprep.mubr.bf16.mxu0 %v2471
      %3896 = vmatmul.mubr.bf16.gmra.mrb[0].mxu0 %v2470
      %v3897 = vpop.f32.mrb[0].mxu0
      %v3898 = vadd.f32 %v3833, %v3897
      %v3899 = vpop.f32.mrb[0].mxu0
      %v3900 = vpop.f32.mrb[0].mxu0
      %v3901 = vadd.f32 %v3836, %v3900
      %v3902 = vpop.f32.mrb[0].mxu0
      %3903 = vmatprep.mubr.bf16.mxu0 %v2487
      %3904 = vmatmul.mubr.bf16.gmra.mrb[0].mxu0 %v2486
      %v3905 = vpop.f32.mrb[0].mxu0
      %v3906 = vadd.f32 %v3841, %v3905
      %v3907 = vpop.f32.mrb[0].mxu0
      %v3908 = vpop.f32.mrb[0].mxu0
      %v3909 = vadd.f32 %v3844, %v3908
      %v3910 = vpop.f32.mrb[0].mxu0
      %3911 = vdwg.mxu0
      %3912 = vmatprep.subr.bf16.mxu0 0
      %3913 = vmatpush1.bf16.msra.mxu0 %v3362
      %3914 = vmatprep.subr.bf16.mxu0 0
      %3915 = vmatpush1.bf16.msra.mxu0 %v3363
      %3916 = vmatprep.subr.bf16.mxu0 0
      %3917 = vmatpush1.bf16.msra.mxu0 %v3364
      %3918 = vmatprep.subr.bf16.mxu0 0
      %3919 = vmatpush1.bf16.msra.mxu0 %v3365
      %3920 = vmatprep.subr.bf16.mxu0 0
      %3921 = vmatpush1.bf16.msra.mxu0 %v3366
      %3922 = vmatprep.subr.bf16.mxu0 0
      %3923 = vmatpush1.bf16.msra.mxu0 %v3367
      %3924 = vmatprep.subr.bf16.mxu0 0
      %3925 = vmatpush1.bf16.msra.mxu0 %v3368
      %3926 = vmatprep.subr.bf16.mxu0 0
      %3927 = vmatpush1.bf16.msra.mxu0 %v3369
      %3928 = vmatprep.subr.bf16.mxu0 0
      %3929 = vmatpush1.bf16.msra.mxu0 %v3370
      %3930 = vmatprep.subr.bf16.mxu0 0
      %3931 = vmatpush1.bf16.msra.mxu0 %v3371
      %3932 = vmatprep.subr.bf16.mxu0 0
      %3933 = vmatpush1.bf16.msra.mxu0 %v3372
      %3934 = vmatprep.subr.bf16.mxu0 0
      %3935 = vmatpush1.bf16.msra.mxu0 %v3373
      %3936 = vmatprep.subr.bf16.mxu0 0
      %3937 = vmatpush1.bf16.msra.mxu0 %v3374
      %3938 = vmatprep.subr.bf16.mxu0 0
      %3939 = vmatpush1.bf16.msra.mxu0 %v3375
      %3940 = vmatprep.subr.bf16.mxu0 0
      %3941 = vmatpush1.bf16.msra.mxu0 %v3376
      %3942 = vmatprep.subr.bf16.mxu0 0
      %3943 = vmatpush1.bf16.msra.mxu0 %v3377
      %3944 = vmatprep.mubr.bf16.mxu0 %v2441
      %3945 = vmatmul.mubr.bf16.gmra.mrb[0].mxu0 %v2440
      %v3946 = vpop.f32.mrb[0].mxu0
      %v3947 = vadd.f32 %v3882, %v3946
      %v3948 = vpop.f32.mrb[0].mxu0
      %v3949 = vpop.f32.mrb[0].mxu0
      %v3950 = vadd.f32 %v3885, %v3949
      %v3951 = vpop.f32.mrb[0].mxu0
      %3952 = vmatprep.mubr.bf16.mxu0 %v2457
      %3953 = vmatmul.mubr.bf16.gmra.mrb[0].mxu0 %v2456
      %v3954 = vpop.f32.mrb[0].mxu0
      %v3955 = vadd.f32 %v3890, %v3954
      %v3956 = vpop.f32.mrb[0].mxu0
      %v3957 = vpop.f32.mrb[0].mxu0
      %v3958 = vadd.f32 %v3893, %v3957
      %v3959 = vpop.f32.mrb[0].mxu0
      %3960 = vmatprep.mubr.bf16.mxu0 %v2473
      %3961 = vmatmul.mubr.bf16.gmra.mrb[0].mxu0 %v2472
      %v3962 = vpop.f32.mrb[0].mxu0
      %v3963 = vadd.f32 %v3898, %v3962
      %v3964 = vpop.f32.mrb[0].mxu0
      %v3965 = vpop.f32.mrb[0].mxu0
      %v3966 = vadd.f32 %v3901, %v3965
      %v3967 = vpop.f32.mrb[0].mxu0
      %3968 = vmatprep.mubr.bf16.mxu0 %v2489
      %3969 = vmatmul.mubr.bf16.gmra.mrb[0].mxu0 %v2488
      %v3970 = vpop.f32.mrb[0].mxu0
      %v3971 = vadd.f32 %v3906, %v3970
      %v3972 = vpop.f32.mrb[0].mxu0
      %v3973 = vpop.f32.mrb[0].mxu0
      %v3974 = vadd.f32 %v3909, %v3973
      %v3975 = vpop.f32.mrb[0].mxu0
      %3976 = vdwg.mxu0
      %3977 = vmatprep.subr.bf16.mxu0 0
      %3978 = vmatpush1.bf16.msra.mxu0 %v3378
      %3979 = vmatprep.subr.bf16.mxu0 0
      %3980 = vmatpush1.bf16.msra.mxu0 %v3379
      %3981 = vmatprep.subr.bf16.mxu0 0
      %3982 = vmatpush1.bf16.msra.mxu0 %v3380
      %3983 = vmatprep.subr.bf16.mxu0 0
      %3984 = vmatpush1.bf16.msra.mxu0 %v3381
      %3985 = vmatprep.subr.bf16.mxu0 0
      %3986 = vmatpush1.bf16.msra.mxu0 %v3382
      %3987 = vmatprep.subr.bf16.mxu0 0
      %3988 = vmatpush1.bf16.msra.mxu0 %v3383
      %3989 = vmatprep.subr.bf16.mxu0 0
      %3990 = vmatpush1.bf16.msra.mxu0 %v3384
      %3991 = vmatprep.subr.bf16.mxu0 0
      %3992 = vmatpush1.bf16.msra.mxu0 %v3385
      %3993 = vmatprep.subr.bf16.mxu0 0
      %3994 = vmatpush1.bf16.msra.mxu0 %v3386
      %3995 = vmatprep.subr.bf16.mxu0 0
      %3996 = vmatpush1.bf16.msra.mxu0 %v3387
      %3997 = vmatprep.subr.bf16.mxu0 0
      %3998 = vmatpush1.bf16.msra.mxu0 %v3388
      %3999 = vmatprep.subr.bf16.mxu0 0
      %4000 = vmatpush1.bf16.msra.mxu0 %v3389
      %4001 = vmatprep.subr.bf16.mxu0 0
      %4002 = vmatpush1.bf16.msra.mxu0 %v3390
      %4003 = vmatprep.subr.bf16.mxu0 0
      %4004 = vmatpush1.bf16.msra.mxu0 %v3391
      %4005 = vmatprep.subr.bf16.mxu0 0
      %4006 = vmatpush1.bf16.msra.mxu0 %v3392
      %4007 = vmatprep.subr.bf16.mxu0 0
      %4008 = vmatpush1.bf16.msra.mxu0 %v3393
      %4009 = vmatprep.mubr.bf16.mxu0 %v2443
      %4010 = vmatmul.mubr.bf16.gmra.mrb[0].mxu0 %v2442
      %v4011 = vpop.f32.mrb[0].mxu0
      %v4012 = vadd.f32 %v3947, %v4011
      %v4013 = vpop.f32.mrb[0].mxu0
      %v4014 = vpop.f32.mrb[0].mxu0
      %v4015 = vadd.f32 %v3950, %v4014
      %v4016 = vpop.f32.mrb[0].mxu0
      %4017 = vmatprep.mubr.bf16.mxu0 %v2459
      %4018 = vmatmul.mubr.bf16.gmra.mrb[0].mxu0 %v2458
      %v4019 = vpop.f32.mrb[0].mxu0
      %v4020 = vadd.f32 %v3955, %v4019
      %v4021 = vpop.f32.mrb[0].mxu0
      %v4022 = vpop.f32.mrb[0].mxu0
      %v4023 = vadd.f32 %v3958, %v4022
      %v4024 = vpop.f32.mrb[0].mxu0
      %4025 = vmatprep.mubr.bf16.mxu0 %v2475
      %4026 = vmatmul.mubr.bf16.gmra.mrb[0].mxu0 %v2474
      %v4027 = vpop.f32.mrb[0].mxu0
      %v4028 = vadd.f32 %v3963, %v4027
      %v4029 = vpop.f32.mrb[0].mxu0
      %v4030 = vpop.f32.mrb[0].mxu0
      %v4031 = vadd.f32 %v3966, %v4030
      %v4032 = vpop.f32.mrb[0].mxu0
      %4033 = vmatprep.mubr.bf16.mxu0 %v2491
      %4034 = vmatmul.mubr.bf16.gmra.mrb[0].mxu0 %v2490
      %v4035 = vpop.f32.mrb[0].mxu0
      %v4036 = vadd.f32 %v3971, %v4035
      %v4037 = vpop.f32.mrb[0].mxu0
      %v4038 = vpop.f32.mrb[0].mxu0
      %v4039 = vadd.f32 %v3974, %v4038
      %v4040 = vpop.f32.mrb[0].mxu0
      %4041 = vdwg.mxu0
      %v4042 = vadd.f32 %v1479, %v4012
      %v4043 = vadd.f32 %v1480, %v4015
      %v4044 = vadd.f32 %v1481, %v4020
      %v4045 = vadd.f32 %v1482, %v4023
      %v4046 = vadd.f32 %v1483, %v4028
      %v4047 = vadd.f32 %v1484, %v4031
      %v4048 = vadd.f32 %v1485, %v4036
      %v4049 = vadd.f32 %v1486, %v4039
      %v4050 = vsel %vm573, %v4042, 0.0
      %4051 = vadd.xlane.f32.xlu0 %v4050
      %v4052 = vpop.xlane.xlu0 %4051
      %v4053 = vsel %vm573, %v4043, 0.0
      %4054 = vadd.xlane.f32.xlu0 %v4053
      %v4055 = vpop.xlane.xlu0 %4054
      %v4056 = vsel %vm573, %v4044, 0.0
      %4057 = vadd.xlane.f32.xlu0 %v4056
      %v4058 = vpop.xlane.xlu0 %4057
      %v4059 = vsel %vm573, %v4045, 0.0
      %4060 = vadd.xlane.f32.xlu0 %v4059
      %v4061 = vpop.xlane.xlu0 %4060
      %v4062 = vsel %vm573, %v4046, 0.0
      %4063 = vadd.xlane.f32.xlu0 %v4062
      %v4064 = vpop.xlane.xlu0 %4063
      %v4065 = vsel %vm573, %v4047, 0.0
      %4066 = vadd.xlane.f32.xlu0 %v4065
      %v4067 = vpop.xlane.xlu0 %4066
      %v4068 = vsel %vm573, %v4048, 0.0
      %4069 = vadd.xlane.f32.xlu0 %v4068
      %v4070 = vpop.xlane.xlu0 %4069
      %v4071 = vsel %vm573, %v4049, 0.0
      %4072 = vadd.xlane.f32.xlu0 %v4071
      %v4073 = vpop.xlane.xlu0 %4072
      %v4074 = vmul.f32 %v4052, %v1378
      %v4075 = vmul.f32 %v4055, %v1378
      %v4076 = vmul.f32 %v4058, %v1378
      %v4077 = vmul.f32 %v4061, %v1378
      %v4078 = vmul.f32 %v4064, %v1378
      %v4079 = vmul.f32 %v4067, %v1378
      %v4080 = vmul.f32 %v4070, %v1378
      %v4081 = vmul.f32 %v4073, %v1378
      %v4082 = vsub.f32 %v4042, %v4074
      %v4083 = vsub.f32 %v4043, %v4075
      %v4084 = vsub.f32 %v4044, %v4076
      %v4085 = vsub.f32 %v4045, %v4077
      %v4086 = vsub.f32 %v4046, %v4078
      %v4087 = vsub.f32 %v4047, %v4079
      %v4088 = vsub.f32 %v4048, %v4080
      %v4089 = vsub.f32 %v4049, %v4081
      %v4090 = vmul.f32 %v4082, %v4082
      %v4091 = vmul.f32 %v4083, %v4083
      %v4092 = vmul.f32 %v4084, %v4084
      %v4093 = vmul.f32 %v4085, %v4085
      %v4094 = vmul.f32 %v4086, %v4086
      %v4095 = vmul.f32 %v4087, %v4087
      %v4096 = vmul.f32 %v4088, %v4088
      %v4097 = vmul.f32 %v4089, %v4089
      %v4098 = vsel %vm573, %v4090, 0.0
      %4099 = vadd.xlane.f32.xlu0 %v4098
      %v4100 = vpop.xlane.xlu0 %4099
      %v4101 = vsel %vm573, %v4091, 0.0
      %4102 = vadd.xlane.f32.xlu0 %v4101
      %v4103 = vpop.xlane.xlu0 %4102
      %v4104 = vsel %vm573, %v4092, 0.0
      %4105 = vadd.xlane.f32.xlu0 %v4104
      %v4106 = vpop.xlane.xlu0 %4105
      %v4107 = vsel %vm573, %v4093, 0.0
      %4108 = vadd.xlane.f32.xlu0 %v4107
      %v4109 = vpop.xlane.xlu0 %4108
      %v4110 = vsel %vm573, %v4094, 0.0
      %4111 = vadd.xlane.f32.xlu0 %v4110
      %v4112 = vpop.xlane.xlu0 %4111
      %v4113 = vsel %vm573, %v4095, 0.0
      %4114 = vadd.xlane.f32.xlu0 %v4113
      %v4115 = vpop.xlane.xlu0 %4114
      %v4116 = vsel %vm573, %v4096, 0.0
      %4117 = vadd.xlane.f32.xlu0 %v4116
      %v4118 = vpop.xlane.xlu0 %4117
      %v4119 = vsel %vm573, %v4097, 0.0
      %4120 = vadd.xlane.f32.xlu0 %v4119
      %v4121 = vpop.xlane.xlu0 %4120
      %v4122 = vmul.f32 %v4100, %v1378
      %v4123 = vmul.f32 %v4103, %v1378
      %v4124 = vmul.f32 %v4106, %v1378
      %v4125 = vmul.f32 %v4109, %v1378
      %v4126 = vmul.f32 %v4112, %v1378
      %v4127 = vmul.f32 %v4115, %v1378
      %v4128 = vmul.f32 %v4118, %v1378
      %v4129 = vmul.f32 %v4121, %v1378
      %v4130 = vadd.f32 %v4122, 1e-05
      %v4131 = vadd.f32 %v4123, 1e-05
      %v4132 = vadd.f32 %v4124, 1e-05
      %v4133 = vadd.f32 %v4125, 1e-05
      %v4134 = vadd.f32 %v4126, 1e-05
      %v4135 = vadd.f32 %v4127, 1e-05
      %v4136 = vadd.f32 %v4128, 1e-05
      %v4137 = vadd.f32 %v4129, 1e-05
      %v4138 = vrsqrt.pop %v4130
      %v4139 = vrsqrt.pop %v4131
      %v4140 = vrsqrt.pop %v4132
      %v4141 = vrsqrt.pop %v4133
      %v4142 = vrsqrt.pop %v4134
      %v4143 = vrsqrt.pop %v4135
      %v4144 = vrsqrt.pop %v4136
      %v4145 = vrsqrt.pop %v4137
      %v4146 = vmul.f32 %v4082, %v4138
      %v4147 = vmul.f32 %v4083, %v4139
      %v4148 = vmul.f32 %v4084, %v4140
      %v4149 = vmul.f32 %v4085, %v4141
      %v4150 = vmul.f32 %v4086, %v4142
      %v4151 = vmul.f32 %v4087, %v4143
      %v4152 = vmul.f32 %v4088, %v4144
      %v4153 = vmul.f32 %v4089, %v4145
      %v4155 = vlaneseq
      %v4156 = vshrl.u32 %v4155, 7
      %v4157 = vsub.s32 0, %v4156
      %v4158 = vrot.slane %v562, %v4157
      %v4160 = vmul.f32 %v4146, %v4158
      %v4161 = vmul.f32 %v4147, %v4158
      %v4162 = vmul.f32 %v4148, %v4158
      %v4163 = vmul.f32 %v4149, %v4158
      %v4164 = vmul.f32 %v4150, %v4158
      %v4165 = vmul.f32 %v4151, %v4158
      %v4166 = vmul.f32 %v4152, %v4158
      %v4167 = vmul.f32 %v4153, %v4158
      %v4169 = vlaneseq
      %v4170 = vshrl.u32 %v4169, 7
      %v4171 = vsub.s32 0, %v4170
      %v4172 = vrot.slane %v564, %v4171
      %v4174 = vadd.f32 %v4160, %v4172
      %v4175 = vadd.f32 %v4161, %v4172
      %v4176 = vadd.f32 %v4162, %v4172
      %v4177 = vadd.f32 %v4163, %v4172
      %v4178 = vadd.f32 %v4164, %v4172
      %v4179 = vadd.f32 %v4165, %v4172
      %v4180 = vadd.f32 %v4166, %v4172
      %v4181 = vadd.f32 %v4167, %v4172
      %4182 = vst.msk [vmem:[#allocation2] sm:$0xff] %vm573, %v4174
      %4183 = vst.msk [vmem:[#allocation2 + $0x8] sm:$0xff] %vm573, %v4175
      %4184 = vst.msk [vmem:[#allocation2 + $0x10] sm:$0xff] %vm573, %v4176
      %4185 = vst.msk [vmem:[#allocation2 + $0x18] sm:$0xff] %vm573, %v4177
      %4186 = vst.msk [vmem:[#allocation2 + $0x20] sm:$0xff] %vm573, %v4178
      %4187 = vst.msk [vmem:[#allocation2 + $0x28] sm:$0xff] %vm573, %v4179
      %4188 = vst.msk [vmem:[#allocation2 + $0x30] sm:$0xff] %vm573, %v4180
      %4189 = vst.msk [vmem:[#allocation2 + $0x38] sm:$0xff] %vm573, %v4181
      %p4190 = scmp.eq.s32.totalorder %s24, 5
      // Predicated region
      $region69: #{transformer_forward.1} parent=63 // pred_check
        %p4191 = pneg %p4190
      $region70: #{transformer_forward.1} parent=63 // pred_check_branch
        %4193 = sbr.rel (%p4191) target = $region72
      $region71: #{transformer_forward.1} parent=63 // pred_region
        %v4194 = vld [vmem:[%s8] sm:$0xff]
        %v4195 = vld [vmem:[%s8 + $0x8] sm:$0xff]
        %v4196 = vld [vmem:[%s8 + $0x10] sm:$0xff]
        %v4197 = vld [vmem:[%s8 + $0x18] sm:$0xff]
        %v4198 = vld [vmem:[%s8 + $0x20] sm:$0xff]
        %v4199 = vld [vmem:[%s8 + $0x28] sm:$0xff]
        %v4200 = vld [vmem:[%s8 + $0x30] sm:$0xff]
        %v4201 = vld [vmem:[%s8 + $0x38] sm:$0xff]
        %v4202 = vmul.f32 %v4174, %v4194
        %v4203 = vmul.f32 %v4175, %v4195
        %v4204 = vmul.f32 %v4176, %v4196
        %v4205 = vmul.f32 %v4177, %v4197
        %v4206 = vmul.f32 %v4178, %v4198
        %v4207 = vmul.f32 %v4179, %v4199
        %v4208 = vmul.f32 %v4180, %v4200
        %v4209 = vmul.f32 %v4181, %v4201
        %v4210 = vld [vmem:[%s9] sm:$0xf]
        %vm4211 = vcmask 523264
        %v4213 = vsel %vm4211, %v4210, 0
        %4215 = vmatprep.subr.mxu0 0.0
        %4216 = vmatpush1.msra.mxu0 %v4202
        %4217 = vmatprep.subr.mxu0 0.0
        %4218 = vmatpush1.msra.mxu0 %v4203
        %4219 = vmatprep.subr.mxu0 0.0
        %4220 = vmatpush1.msra.mxu0 %v4204
        %4221 = vmatprep.subr.mxu0 0.0
        %4222 = vmatpush1.msra.mxu0 %v4205
        %4223 = vmatprep.subr.mxu0 0.0
        %4224 = vmatpush1.msra.mxu0 %v4206
        %4225 = vmatprep.subr.mxu0 0.0
        %4226 = vmatpush1.msra.mxu0 %v4207
        %4227 = vmatprep.subr.mxu0 0.0
        %4228 = vmatpush1.msra.mxu0 %v4208
        %4229 = vmatprep.subr.mxu0 0.0
        %4230 = vmatpush1.msra.mxu0 %v4209
        %4231 = vmatprep.subr.mxu0 0.0
        %4232 = vmatpush1.msra.mxu0 0.0
        %4233 = vmatprep.subr.mxu0 0.0
        %4234 = vmatpush1.msra.mxu0 0.0
        %4235 = vmatprep.subr.mxu0 0.0
        %4236 = vmatpush1.msra.mxu0 0.0
        %4237 = vmatprep.subr.mxu0 0.0
        %4238 = vmatpush1.msra.mxu0 0.0
        %4239 = vmatprep.subr.mxu0 0.0
        %4240 = vmatpush1.msra.mxu0 0.0
        %4241 = vmatprep.subr.mxu0 0.0
        %4242 = vmatpush1.msra.mxu0 0.0
        %4243 = vmatprep.subr.mxu0 0.0
        %4244 = vmatpush1.msra.mxu0 0.0
        %4245 = vmatprep.subr.mxu0 0.0
        %4246 = vmatpush1.msra.mxu0 0.0
        %4247 = vmatprep.subr.mxu0 0.0
        %4248 = vmatpush1.msra.mxu0 0.0
        %4249 = vmatprep.subr.mxu0 0.0
        %4250 = vmatpush1.msra.mxu0 0.0
        %4251 = vmatprep.subr.mxu0 0.0
        %4252 = vmatpush1.msra.mxu0 0.0
        %4253 = vmatprep.subr.mxu0 0.0
        %4254 = vmatpush1.msra.mxu0 0.0
        %4255 = vmatprep.subr.mxu0 0.0
        %4256 = vmatpush1.msra.mxu0 0.0
        %4257 = vmatprep.subr.mxu0 0.0
        %4258 = vmatpush1.msra.mxu0 0.0
        %4259 = vmatprep.subr.mxu0 0.0
        %4260 = vmatpush1.msra.mxu0 0.0
        %4261 = vmatprep.subr.mxu0 0.0
        %4262 = vmatpush1.msra.mxu0 0.0
        %4263 = vmatprep.subr.mxu0 0.0
        %4264 = vmatpush1.msra.mxu0 0.0
        %4265 = vmatprep.subr.mxu0 0.0
        %4266 = vmatpush1.msra.mxu0 0.0
        %4267 = vmatprep.subr.mxu0 0.0
        %4268 = vmatpush1.msra.mxu0 0.0
        %4269 = vmatprep.subr.mxu0 0.0
        %4270 = vmatpush1.msra.mxu0 0.0
        %4271 = vmatprep.subr.mxu0 0.0
        %4272 = vmatpush1.msra.mxu0 0.0
        %4273 = vmatprep.subr.mxu0 0.0
        %4274 = vmatpush1.msra.mxu0 0.0
        %4275 = vmatprep.subr.mxu0 0.0
        %4276 = vmatpush1.msra.mxu0 0.0
        %4277 = vmatprep.subr.mxu0 0.0
        %4278 = vmatpush1.msra.mxu0 0.0
        %4279 = vmatprep.mubr.f32.mxu0 0.0
        %4280 = vmatmul.mubr.f32.gmra.mrb[0].mxu0 %v4213
        %v4281 = vpop.f32.mrb[0].mxu0
        %v4282 = vadd.f32 0.0, %v4281
        %v4283 = vpop.f32.mrb[0].mxu0
        %4284 = vdwg.mxu0
        %vm4285 = vcmask 76800
        %v4286 = vsel %vm4285, %v4282, 0.0
        %4287 = vadd.xlane.f32.xlu0 %v4286
        %v4288 = vpop.xlane.xlu0 %4287
        %v4289 = vld [vmem:[#allocation3] sm:$0x1]
        %v4291 = vlaneseq
        %v4292 = vshrl.u32 %v4291, 7
        %v4293 = vsub.s32 0, %v4292
        %v4294 = vrot.slane %v4289, %v4293
        %v4296 = vadd.f32 %v4288, %v4294
        %vm4297 = vcmask 3072
        %4298 = vst.msk [vmem:[%s11] sm:$0xf] %vm4297, %v4296
      $region72: #{transformer_forward.1} parent=63 // pred_fallthru
        _
      // Predicated region
      $region73: #{transformer_forward.1} parent=63 // pred_check
        %p4299 = pneg %p293
      $region74: #{transformer_forward.1} parent=63 // pred_check_branch
        %4301 = sbr.rel (%p4299) target = $region76
      $region75: #{transformer_forward.1} parent=63 // pred_region
        _
      $region76: #{transformer_forward.1} parent=63 // pred_fallthru
        _
      // Predicated region
      $region77: #{transformer_forward.1} parent=63 // pred_check
        %p4302 = pneg %p293
      $region78: #{transformer_forward.1} parent=63 // pred_check_branch
        %4304 = sbr.rel (%p4302) target = $region80
      $region79: #{transformer_forward.1} parent=63 // pred_region
        _
      $region80: #{transformer_forward.1} parent=63 // pred_fallthru
        _
    $region64: #{transformer_forward.1} parent=5 // pred_fallthru
      _
    %p4305 = scmp.le.s32.totalorder 2, %s19
    // Predicated region
    $region81: #{transformer_forward.1} parent=5 // pred_check
      %p4306 = pneg %p4305
    $region82: #{transformer_forward.1} parent=5 // pred_check_branch
      %4308 = sbr.rel (%p4306) target = $region84
    $region83: #{transformer_forward.1} parent=5 // pred_region
      %s4309 = ssub.s32 %s19, 2
    $region84: #{transformer_forward.1} parent=5 // pred_fallthru
      _
  $region6: #{transformer_forward.1} parent=0 // loop_footer
    %s23 = sadd.s32 1, %s19
  $region7: #{transformer_forward.1} parent=0 // loop_footer_branch
    %18 = sbr.rel target = $region3
  $region8: #{transformer_forward.1} parent=0 // loop_exit
    _

</llo_original>
